<compile_context>
chip_gen: v7x
topology: tpu7x:2x2x1
jax: 0.10.0
libtpu: 0.0.40
codegen_flags: <defaults>
</compile_context>

<pallas_src>
import jax
import jax.numpy as jnp
from jax import lax
from jax.experimental import pallas as pl
from jax.experimental.pallas import tpu as pltpu


def _choose_group(n, max_g=8):
    """Largest divisor of n (<= max_g) that still leaves >= 2 grid steps (v7x megacore)."""
    g = 1
    for cand in range(2, min(n, max_g) + 1):
        if n % cand == 0 and n // cand >= 2:
            g = cand
    return g


# ----------------------------------------------------------------------------
# Kernel 1: strided 3x3 conv + bias + ReLU (single K-concatenated bf16 MXU matmul)
# ----------------------------------------------------------------------------
def _conv3x3s2_kernel(x_ref, w_ref, b_ref, o_ref):
    # x_ref: (G, Ho, K)        bf16   K = 6*Wh*Cin (group slabs concatenated along K)
    # w_ref: (K, Wo*Cout)      bf16   (banded weights, same group order)
    # b_ref: (1, Wo*Cout)      f32
    # o_ref: (G, Ho, Wo*Cout)  bf16   (lane-dense: Wo*Cout is a multiple of 128)
    g, ho, k = x_ref.shape
    woc = o_ref.shape[-1]
    slab = x_ref[...].reshape(g * ho, k)                       # M = G*Ho
    acc = jnp.dot(slab, w_ref[...], preferred_element_type=jnp.float32)
    acc = jnp.maximum(acc + b_ref[...], 0.0)
    o_ref[...] = acc.reshape(g, ho, woc).astype(o_ref.dtype)


def conv3x3_s2_relu(x, w, b, *, out_dtype=jnp.bfloat16):
    """3x3 stride-2 pad-1 conv + bias + ReLU.  x:(N,H,W,Cin) NHWC, w:(3,3,Cin,Cout)."""
    N, H, W, Cin = x.shape
    Cout = w.shape[-1]
    assert H % 2 == 0 and W % 2 == 0, "even spatial dims expected"
    Ho, Wo = H // 2, W // 2
    Wh = Wo + 1
    K = 6 * Wh * Cin
    WoC = Wo * Cout

    # Layout plumbing in XLA (fused): pad + extract the 6 (kh, col-parity) group slabs
    # and concatenate them along the contraction axis.  All slabs start at row 0, so the
    # kernel needs no unaligned sublane slicing.
    xp = jnp.pad(x, ((0, 0), (1, 1), (1, 1), (0, 0)))
    slabs = [xp[:, kh:kh + 2 * Ho:2, cp::2, :] for kh in range(3) for cp in range(2)]
    x6 = jnp.stack(slabs, axis=2).reshape(N, Ho, K).astype(jnp.bfloat16)

    # Fold the 3x3 taps into one banded (6*Wh*Cin, Wo*Cout) matrix (same group order):
    #   A_g[(j + kw//2)*Cin + ci, j*Cout + co] = w[kh, kw, ci, co]   for kw % 2 == cp
    w32 = w.astype(jnp.float32)
    mats = []
    for kh in range(3):
        for cp in range(2):
            A = jnp.zeros((Wh * Cin, WoC), jnp.float32)
            for kw in range(cp, 3, 2):
                A = A + jnp.kron(
                    jnp.eye(Wh, Wo, k=-(kw // 2), dtype=jnp.float32), w32[kh, kw])
            mats.append(A)
    wb = jnp.concatenate(mats, axis=0).astype(jnp.bfloat16)     # (K, Wo*Cout)
    bias = jnp.tile(b.astype(jnp.float32), Wo).reshape(1, WoC)

    G = _choose_group(N)                                        # >=2 grid steps when possible
    out = pl.pallas_call(
        _conv3x3s2_kernel,
        out_shape=jax.ShapeDtypeStruct((N, Ho, WoC), out_dtype),
        grid=(N // G,),
        in_specs=[
            pl.BlockSpec((G, Ho, K), lambda i: (i, 0, 0)),
            pl.BlockSpec((K, WoC), lambda i: (0, 0)),           # constant block (weights)
            pl.BlockSpec((1, WoC), lambda i: (0, 0)),
        ],
        out_specs=pl.BlockSpec((G, Ho, WoC), lambda i: (i, 0, 0)),
        compiler_params=pltpu.CompilerParams(dimension_semantics=("parallel",)),
    )(x6, wb, bias)
    return out.reshape(N, Ho, Wo, Cout)


# ----------------------------------------------------------------------------
# Kernel 2: fused classifier — all B sequences in ONE grid step.
#   1x1 clf conv (+ReLU) on the concatenated train+test rows (one big matmul, shared
#   staged RHS), then label-weighted filter init + filter/test correlation per batch.
# ----------------------------------------------------------------------------
def _clf_kernel(lbl_ref, feats_ref, w_ref, b_ref, o_ref):
    # lbl_ref:   (B, 1, Ntr)            f32
    # feats_ref: (B*Ntr + B*Nte, C3)    bf16   (train rows first, batch-major)
    # w_ref:     (C3, CF) bf16     b_ref: (1, CF) f32
    # o_ref:     (B, Nte)               f32
    B, _, Ntr = lbl_ref.shape
    Nte = o_ref.shape[-1]
    clf = jnp.maximum(
        jnp.dot(feats_ref[...], w_ref[...], preferred_element_type=jnp.float32)
        + b_ref[...], 0.0)                                      # (B*(Ntr+Nte), CF)
    CF_ = clf.shape[-1]
    n_train = B * Ntr
    trf = clf[:n_train].reshape(B, Ntr, CF_)
    tef = clf[n_train:].reshape(B, Nte, CF_)
    lbl = lbl_ref[...]                                          # (B, 1, Ntr)
    filt = jnp.einsum('bqn,bnc->bqc', lbl, trf,
                      preferred_element_type=jnp.float32)       # (B, 1, CF)
    denom = jnp.sum(lbl, axis=-1, keepdims=True) + 1e-6         # (B, 1, 1)
    filt = filt / denom
    scores = jnp.einsum('bqc,bnc->bqn', filt, tef,
                        preferred_element_type=jnp.float32)     # (B, 1, Nte)
    o_ref[...] = scores[:, 0, :]


def classifier_scores(lbl, feats, w_clf, b_clf, *, B, Ntr, Nte):
    M, C3_ = feats.shape
    CF_ = w_clf.shape[-1]
    return pl.pallas_call(
        _clf_kernel,
        out_shape=jax.ShapeDtypeStruct((B, Nte), jnp.float32),
        grid=(1,),
        in_specs=[
            pl.BlockSpec((B, 1, Ntr), lambda i: (0, 0, 0)),
            pl.BlockSpec((M, C3_), lambda i: (0, 0)),
            pl.BlockSpec((C3_, CF_), lambda i: (0, 0)),
            pl.BlockSpec((1, CF_), lambda i: (0, 0)),
        ],
        out_specs=pl.BlockSpec((B, Nte), lambda i: (0, 0)),
        compiler_params=pltpu.CompilerParams(dimension_semantics=("arbitrary",)),
    )(lbl, feats, w_clf, b_clf)


# ----------------------------------------------------------------------------
# Kernel 3: fused bb_regressor head on PRE-POOLED feature vectors.
#   Pooling is hoisted out (XLA), so the kernel only DMAs (B, n, C) vectors.
# ----------------------------------------------------------------------------
def _bbreg_kernel(ptr2_ref, ptr3_ref, pte2_ref, pte3_ref, bb_ref, prop_ref,
                  fw2_ref, fw3_ref, bbw_ref, bias_ref, biou_ref, o_ref):
    # Per-sequence block.  Packed weights:
    #   fw2: (2, C2, CM)  [w_mod2_feat, w_test2]      fw3: (2, C3, CM)
    #   bbw: (4, 4,  CM)  [w_mod2_bb, w_mod3_bb, w_prop2, w_prop3]
    #   bias:(8, CM)      [b_mod2, b_mod3, b_test2, b_test3, b_prop2, b_prop3, w_iou2, w_iou3]
    #   biou: (1,) f32 in SMEM (scalar).
    f32 = jnp.float32
    n_te, P = o_ref.shape[1], o_ref.shape[2]

    bb = bb_ref[0]                                                      # (n_tr, 4)
    m2 = (jnp.dot(ptr2_ref[0], fw2_ref[0], preferred_element_type=f32)
          + jnp.dot(bb, bbw_ref[0], preferred_element_type=f32) + bias_ref[0:1, :])
    m3 = (jnp.dot(ptr3_ref[0], fw3_ref[0], preferred_element_type=f32)
          + jnp.dot(bb, bbw_ref[1], preferred_element_type=f32) + bias_ref[1:2, :])
    mod2 = jnp.mean(jnp.maximum(m2, 0.0), axis=0, keepdims=True)        # (1, CM)
    mod3 = jnp.mean(jnp.maximum(m3, 0.0), axis=0, keepdims=True)        # (1, CM)

    t2 = jnp.maximum(jnp.dot(pte2_ref[0], fw2_ref[1], preferred_element_type=f32)
                     + bias_ref[2:3, :], 0.0)                           # (n_te, CM)
    t3 = jnp.maximum(jnp.dot(pte3_ref[0], fw3_ref[1], preferred_element_type=f32)
                     + bias_ref[3:4, :], 0.0)
    fused2 = mod2 * t2 * bias_ref[6:7, :]                               # w_iou folded in
    fused3 = mod3 * t3 * bias_ref[7:8, :]

    # Proposal embedding: one batched matmul per branch (no per-proposal loop).
    props = prop_ref[0].reshape(n_te * P, 4)
    e2 = jnp.maximum(jnp.dot(props, bbw_ref[2], preferred_element_type=f32)
                     + bias_ref[4:5, :], 0.0).reshape(n_te, P, -1)      # (n_te, P, CM)
    e3 = jnp.maximum(jnp.dot(props, bbw_ref[3], preferred_element_type=f32)
                     + bias_ref[5:6, :], 0.0).reshape(n_te, P, -1)
    iou = (jnp.sum(e2 * fused2[:, None, :], axis=-1)
           + jnp.sum(e3 * fused3[:, None, :], axis=-1)
           + biou_ref[0])                                               # (n_te, P)
    o_ref[0] = iou


def bb_regressor_iou(ptr2, ptr3, pte2, pte3, bb, props,
                     fw2, fw3, bbw, bias_pack, b_iou):
    B, n_tr, C2_ = ptr2.shape
    C3_ = ptr3.shape[-1]
    n_te, P = props.shape[1], props.shape[2]
    CM_ = fw2.shape[-1]
    return pl.pallas_call(
        _bbreg_kernel,
        out_shape=jax.ShapeDtypeStruct((B, n_te, P), jnp.float32),
        grid=(B,),
        in_specs=[
            pl.BlockSpec((1, n_tr, C2_), lambda b: (b, 0, 0)),
            pl.BlockSpec((1, n_tr, C3_), lambda b: (b, 0, 0)),
            pl.BlockSpec((1, n_te, C2_), lambda b: (b, 0, 0)),
            pl.BlockSpec((1, n_te, C3_), lambda b: (b, 0, 0)),
            pl.BlockSpec((1, n_tr, 4), lambda b: (b, 0, 0)),
            pl.BlockSpec((1, n_te, P, 4), lambda b: (b, 0, 0, 0)),
            pl.BlockSpec((2, C2_, CM_), lambda b: (0, 0, 0)),
            pl.BlockSpec((2, C3_, CM_), lambda b: (0, 0, 0)),
            pl.BlockSpec((4, 4, CM_), lambda b: (0, 0, 0)),
            pl.BlockSpec((8, CM_), lambda b: (0, 0)),
            pl.BlockSpec(memory_space=pltpu.MemorySpace.SMEM),          # scalar b_iou
        ],
        out_specs=pl.BlockSpec((1, n_te, P), lambda b: (b, 0, 0)),
        compiler_params=pltpu.CompilerParams(dimension_semantics=("parallel",)),
    )(ptr2, ptr3, pte2, pte3, bb, props, fw2, fw3, bbw, bias_pack, b_iou)


# ----------------------------------------------------------------------------
# DiMPnet (JAX / Pallas)
# ----------------------------------------------------------------------------
C2, C3 = 16, 32        # backbone channels for layer2 / layer3
CF = 32                # classification feature channels
CM = 32                # IoU-net modulation channels
NUM_PROP = 8


class DiMPnetMViTPallas:
    def __init__(self, key):
        ks = jax.random.split(key, 12)

        def init(k, shape, scale=0.1):
            return (scale * jax.random.normal(k, shape)).astype(jnp.float32)

        # backbone (feature_extractor): 3->C2 (stride 2), C2->C3 (stride 2)
        self.w_conv1 = init(ks[0], (3, 3, 3, C2))
        self.b_conv1 = jnp.zeros((C2,), jnp.float32)
        self.w_conv2 = init(ks[1], (3, 3, C2, C3))
        self.b_conv2 = jnp.zeros((C3,), jnp.float32)
        # classifier feature extractor: 1x1 conv C3 -> CF (bf16 MXU operand)
        self.w_clf = init(ks[2], (C3, CF)).astype(jnp.bfloat16)
        self.b_clf = jnp.zeros((1, CF), jnp.float32)
        # bb_regressor (IoU-net style), packed for a single fused kernel.
        w_mod2_feat = init(ks[3], (C2, CM))
        w_mod3_feat = init(ks[4], (C3, CM))
        w_test2 = init(ks[5], (C2, CM))
        w_test3 = init(ks[6], (C3, CM))
        w_mod2_bb = init(ks[7], (4, CM))
        w_mod3_bb = init(ks[8], (4, CM))
        w_prop2 = init(ks[9], (4, CM))
        w_prop3 = init(ks[10], (4, CM))
        w_iou2 = init(ks[11], (CM,))
        w_iou3 = init(jax.random.fold_in(ks[11], 1), (CM,))
        zeros_cm = jnp.zeros((CM,), jnp.float32)
        self.fw2 = jnp.stack([w_mod2_feat, w_test2], axis=0)            # (2, C2, CM)
        self.fw3 = jnp.stack([w_mod3_feat, w_test3], axis=0)            # (2, C3, CM)
        self.bbw = jnp.stack([w_mod2_bb, w_mod3_bb, w_prop2, w_prop3], axis=0)
        self.bias_pack = jnp.stack(
            [zeros_cm, zeros_cm, zeros_cm, zeros_cm, zeros_cm, zeros_cm,
             w_iou2, w_iou3], axis=0)                                   # (8, CM)
        self.b_iou = jnp.zeros((1,), jnp.float32)                       # SMEM scalar

        self.classification_layer = ['layer3']
        self.bb_regressor_layer = ['layer2', 'layer3']
        self.output_layers = sorted(list(set(self.classification_layer +
                                             self.bb_regressor_layer)))

    # --- backbone -----------------------------------------------------------
    def extract_backbone_features(self, im_nhwc):
        l2 = conv3x3_s2_relu(im_nhwc, self.w_conv1, self.b_conv1)   # (N, H/2, W/2, C2) bf16
        l3 = conv3x3_s2_relu(l2, self.w_conv2, self.b_conv2)        # (N, H/4, W/4, C3) bf16
        return {'layer2': l2, 'layer3': l3}

    def get_backbone_clf_feat(self, backbone_feat):
        return backbone_feat[self.classification_layer[0]]

    def get_backbone_bbreg_feat(self, backbone_feat):
        return [backbone_feat[l] for l in self.bb_regressor_layer]

    # --- classifier (simplified DiMP) ---------------------------------------
    def classifier(self, train_feat_clf, test_feat_clf, train_label):
        n_tr, B, Hf, Wf, c3 = train_feat_clf.shape
        n_te = test_feat_clf.shape[0]
        Ntr = n_tr * Hf * Wf
        Nte = n_te * Hf * Wf
        trf = train_feat_clf.transpose(1, 0, 2, 3, 4).reshape(B * Ntr, c3)
        tef = test_feat_clf.transpose(1, 0, 2, 3, 4).reshape(B * Nte, c3)
        feats = jnp.concatenate([trf, tef], axis=0).astype(jnp.bfloat16)
        lbl = train_label.transpose(1, 0, 2, 3).reshape(B, 1, Ntr).astype(jnp.float32)
        scores = classifier_scores(lbl, feats, self.w_clf, self.b_clf,
                                   B=B, Ntr=Ntr, Nte=Nte)            # (B, Nte)
        return scores.reshape(B, n_te, Hf, Wf).transpose(1, 0, 2, 3)

    # --- bb_regressor (simplified IoU-net) ----------------------------------
    def bb_regressor(self, train_feat_iou, test_feat_iou, train_bb, test_proposals):
        tr_l2, tr_l3 = train_feat_iou
        te_l2, te_l3 = test_feat_iou
        n_tr, B = train_bb.shape[:2]
        n_te = test_proposals.shape[0]

        # TODO(synk): global-average pooling stands in for PrRoIPooling; it is hoisted
        # out of the kernel so kernel 3 only reads (B, n, C) pooled vectors.
        def pool(f, n):
            Nn, h, w, c = f.shape
            v = jnp.mean(f.astype(jnp.float32).reshape(Nn, h * w, c), axis=1)  # (Nn, C)
            return v.reshape(n, B, c).transpose(1, 0, 2)                        # (B, n, C)

        ptr2 = pool(tr_l2, n_tr)
        ptr3 = pool(tr_l3, n_tr)
        pte2 = pool(te_l2, n_te)
        pte3 = pool(te_l3, n_te)
        bb = train_bb.transpose(1, 0, 2).astype(jnp.float32)          # (B, n_tr, 4)
        props = test_proposals.transpose(1, 0, 2, 3).astype(jnp.float32)  # (B, n_te, P, 4)
        iou = bb_regressor_iou(ptr2, ptr3, pte2, pte3, bb, props,
                               self.fw2, self.fw3, self.bbw,
                               self.bias_pack, self.b_iou)            # (B, n_te, P)
        return iou.transpose(1, 0, 2)

    # --- forward (mirrors PyTorch DiMPnet.forward) ---------------------------
    def forward(self, train_imgs, test_imgs, train_bb, train_label, test_proposals):
        assert train_imgs.ndim == 5 and test_imgs.ndim == 5, 'Expect 5 dimensional inputs'
        n_tr = train_imgs.shape[0]
        n_te = test_imgs.shape[0]

        # NCHW -> NHWC at the boundary; run train+test through the backbone as ONE batch
        # (identical math, bigger conv M, half the pallas_call launches).
        tr = train_imgs.reshape(-1, *train_imgs.shape[-3:]).transpose(0, 2, 3, 1)
        te = test_imgs.reshape(-1, *test_imgs.shape[-3:]).transpose(0, 2, 3, 1)
        n_tr_imgs = tr.shape[0]
        all_feat = self.extract_backbone_features(jnp.concatenate([tr, te], axis=0))
        train_feat = {k: v[:n_tr_imgs] for k, v in all_feat.items()}
        test_feat = {k: v[n_tr_imgs:] for k, v in all_feat.items()}

        train_feat_clf = self.get_backbone_clf_feat(train_feat)
        test_feat_clf = self.get_backbone_clf_feat(test_feat)
        train_feat_clf = train_feat_clf.reshape(n_tr, -1, *train_feat_clf.shape[-3:])
        test_feat_clf = test_feat_clf.reshape(n_te, -1, *test_feat_clf.shape[-3:])

        target_scores = self.classifier(train_feat_clf, test_feat_clf, train_label)

        train_feat_iou = self.get_backbone_bbreg_feat(train_feat)
        test_feat_iou = self.get_backbone_bbreg_feat(test_feat)
        iou_pred = self.bb_regressor(train_feat_iou, test_feat_iou,
                                     train_bb, test_proposals)
        return target_scores, iou_pred


# ----------------------------------------------------------------------------
if __name__ == "__main__":
    key = jax.random.PRNGKey(0)
    k_model, k1, k2, k3, k4, k5 = jax.random.split(key, 6)

    net = DiMPnetMViTPallas(k_model)

    n_tr, n_te, B, H, W = 2, 1, 2, 32, 32
    Hf, Wf = H // 4, W // 4   # classification feature resolution (layer3)

    train_imgs = jax.random.normal(k1, (n_tr, B, 3, H, W), jnp.float32)
    test_imgs = jax.random.normal(k2, (n_te, B, 3, H, W), jnp.float32)
    train_bb = jax.random.uniform(k3, (n_tr, B, 4), jnp.float32) * float(H)
    train_label = jax.nn.softmax(
        jax.random.normal(k4, (n_tr, B, Hf * Wf), jnp.float32), axis=-1
    ).reshape(n_tr, B, Hf, Wf)
    test_proposals = jax.random.uniform(k5, (n_te, B, NUM_PROP, 4), jnp.float32) * float(H)

    fwd = jax.jit(net.forward)
    target_scores, iou_pred = fwd(train_imgs, test_imgs, train_bb,
                                  train_label, test_proposals)
    (target_scores, iou_pred) = jax.block_until_ready((target_scores, iou_pred))

    assert target_scores.shape == (n_te, B, Hf, Wf), target_scores.shape
    assert iou_pred.shape == (n_te, B, NUM_PROP), iou_pred.shape
    assert jnp.all(jnp.isfinite(target_scores)) and jnp.all(jnp.isfinite(iou_pred))
    print("KERNEL_OK")
</pallas_src>

<mosaic_0001>
module attributes {stable_mosaic.version = 11 : i64} {
  func.func @_conv3x3s2_kernel(%arg0: i32, %arg1: memref<3x16x306xbf16, #tpu.memory_space<vmem>>, %arg2: memref<306x256xbf16, #tpu.memory_space<vmem>>, %arg3: memref<1x256xf32, #tpu.memory_space<vmem>>, %arg4: memref<3x16x256xbf16, #tpu.memory_space<vmem>>) attributes {dimension_semantics = [#tpu.dimension_semantics<parallel>], iteration_bounds = array<i64: 2>, scalar_prefetch = 0 : i64, scratch_operands = 0 : i64, tpu.core_type = #tpu.core_type<tc>, window_params = [{transform_indices = @transform_0, window_bounds = array<i64: 3, 16, 306>}, {pipeline_mode = #tpu.pipeline_mode<synchronous>, transform_indices = @transform_1, window_bounds = array<i64: 306, 256>}, {pipeline_mode = #tpu.pipeline_mode<synchronous>, transform_indices = @transform_2, window_bounds = array<i64: 1, 256>}, {transform_indices = @transform_3, window_bounds = array<i64: 3, 16, 256>}]} {
    %c0 = arith.constant 0 : index
    %c0_0 = arith.constant 0 : index
    %c0_1 = arith.constant 0 : index
    %0 = vector.load %arg1[%c0, %c0_0, %c0_1] : memref<3x16x306xbf16, #tpu.memory_space<vmem>>, vector<3x16x306xbf16>
    %1 = vector.shape_cast %0 : vector<3x16x306xbf16> to vector<48x306xbf16>
    %c0_2 = arith.constant 0 : index
    %c0_3 = arith.constant 0 : index
    %2 = vector.load %arg2[%c0_2, %c0_3] : memref<306x256xbf16, #tpu.memory_space<vmem>>, vector<306x256xbf16>
    %cst = arith.constant dense<0.000000e+00> : vector<48x256xf32>
    %3 = tpu.matmul %1, %2, %cst {dimension_numbers = #tpu.dot_dimension_numbers<[1], [0], [0], [1], [0, 0, 1, 1], [], []>} : vector<48x306xbf16>, vector<306x256xbf16>, vector<48x256xf32> -> vector<48x256xf32>
    %c0_4 = arith.constant 0 : index
    %c0_5 = arith.constant 0 : index
    %4 = vector.load %arg3[%c0_4, %c0_5] : memref<1x256xf32, #tpu.memory_space<vmem>>, vector<1x256xf32>
    %5 = vector.broadcast %4 : vector<1x256xf32> to vector<48x256xf32>
    %6 = arith.addf %3, %5 : vector<48x256xf32>
    %cst_6 = arith.constant 0.000000e+00 : f32
    %7 = vector.broadcast %cst_6 : f32 to vector<48x256xf32>
    %8 = arith.maximumf %6, %7 : vector<48x256xf32>
    %9 = vector.shape_cast %8 : vector<48x256xf32> to vector<3x16x256xf32>
    %10 = arith.truncf %9 : vector<3x16x256xf32> to vector<3x16x256xbf16>
    %c0_7 = arith.constant 0 : index
    %c0_8 = arith.constant 0 : index
    %c0_9 = arith.constant 0 : index
    %11 = vector.load %arg4[%c0_7, %c0_8, %c0_9] : memref<3x16x256xbf16, #tpu.memory_space<vmem>>, vector<3x16x256xbf16>
    tpu.vector_store %arg4[%c0_7, %c0_8, %c0_9], %10 {strides = array<i32>} : memref<3x16x256xbf16, #tpu.memory_space<vmem>>, vector<3x16x256xbf16>,
    return
  }
  func.func @transform_0(%arg0: i32) -> (i32, i32, i32) {
    %c0_i32 = arith.constant 0 : i32
    %c0_i32_0 = arith.constant 0 : i32
    %c0_i32_1 = arith.constant 0 : i32
    return %arg0, %c0_i32, %c0_i32_0 : i32, i32, i32
  }
  func.func @transform_1(%arg0: i32) -> (i32, i32) {
    %c0_i32 = arith.constant 0 : i32
    %c0_i32_0 = arith.constant 0 : i32
    %c0_i32_1 = arith.constant 0 : i32
    return %c0_i32, %c0_i32_0 : i32, i32
  }
  func.func @transform_2(%arg0: i32) -> (i32, i32) {
    %c0_i32 = arith.constant 0 : i32
    %c0_i32_0 = arith.constant 0 : i32
    %c0_i32_1 = arith.constant 0 : i32
    return %c0_i32, %c0_i32_0 : i32, i32
  }
  func.func @transform_3(%arg0: i32) -> (i32, i32, i32) {
    %c0_i32 = arith.constant 0 : i32
    %c0_i32_0 = arith.constant 0 : i32
    %c0_i32_1 = arith.constant 0 : i32
    return %arg0, %c0_i32, %c0_i32_0 : i32, i32, i32
  }
}

module attributes {stable_mosaic.version = 11 : i64} {
  func.func @_conv3x3s2_kernel(%arg0: i32, %arg1: memref<3x8x864xbf16, #tpu.memory_space<vmem>>, %arg2: memref<864x256xbf16, #tpu.memory_space<vmem>>, %arg3: memref<1x256xf32, #tpu.memory_space<vmem>>, %arg4: memref<3x8x256xbf16, #tpu.memory_space<vmem>>) attributes {dimension_semantics = [#tpu.dimension_semantics<parallel>], iteration_bounds = array<i64: 2>, scalar_prefetch = 0 : i64, scratch_operands = 0 : i64, tpu.core_type = #tpu.core_type<tc>, window_params = [{transform_indices = @transform_0, window_bounds = array<i64: 3, 8, 864>}, {pipeline_mode = #tpu.pipeline_mode<synchronous>, transform_indices = @transform_1, window_bounds = array<i64: 864, 256>}, {pipeline_mode = #tpu.pipeline_mode<synchronous>, transform_indices = @transform_2, window_bounds = array<i64: 1, 256>}, {transform_indices = @transform_3, window_bounds = array<i64: 3, 8, 256>}]} {
    %c0 = arith.constant 0 : index
    %c0_0 = arith.constant 0 : index
    %c0_1 = arith.constant 0 : index
    %0 = vector.load %arg1[%c0, %c0_0, %c0_1] : memref<3x8x864xbf16, #tpu.memory_space<vmem>>, vector<3x8x864xbf16>
    %1 = vector.shape_cast %0 : vector<3x8x864xbf16> to vector<24x864xbf16>
    %c0_2 = arith.constant 0 : index
    %c0_3 = arith.constant 0 : index
    %2 = vector.load %arg2[%c0_2, %c0_3] : memref<864x256xbf16, #tpu.memory_space<vmem>>, vector<864x256xbf16>
    %cst = arith.constant dense<0.000000e+00> : vector<24x256xf32>
    %3 = tpu.matmul %1, %2, %cst {dimension_numbers = #tpu.dot_dimension_numbers<[1], [0], [0], [1], [0, 0, 1, 1], [], []>} : vector<24x864xbf16>, vector<864x256xbf16>, vector<24x256xf32> -> vector<24x256xf32>
    %c0_4 = arith.constant 0 : index
    %c0_5 = arith.constant 0 : index
    %4 = vector.load %arg3[%c0_4, %c0_5] : memref<1x256xf32, #tpu.memory_space<vmem>>, vector<1x256xf32>
    %5 = vector.broadcast %4 : vector<1x256xf32> to vector<24x256xf32>
    %6 = arith.addf %3, %5 : vector<24x256xf32>
    %cst_6 = arith.constant 0.000000e+00 : f32
    %7 = vector.broadcast %cst_6 : f32 to vector<24x256xf32>
    %8 = arith.maximumf %6, %7 : vector<24x256xf32>
    %9 = vector.shape_cast %8 : vector<24x256xf32> to vector<3x8x256xf32>
    %10 = arith.truncf %9 : vector<3x8x256xf32> to vector<3x8x256xbf16>
    %c0_7 = arith.constant 0 : index
    %c0_8 = arith.constant 0 : index
    %c0_9 = arith.constant 0 : index
    %11 = vector.load %arg4[%c0_7, %c0_8, %c0_9] : memref<3x8x256xbf16, #tpu.memory_space<vmem>>, vector<3x8x256xbf16>
    tpu.vector_store %arg4[%c0_7, %c0_8, %c0_9], %10 {strides = array<i32>} : memref<3x8x256xbf16, #tpu.memory_space<vmem>>, vector<3x8x256xbf16>,
    return
  }
  func.func @transform_0(%arg0: i32) -> (i32, i32, i32) {
    %c0_i32 = arith.constant 0 : i32
    %c0_i32_0 = arith.constant 0 : i32
    %c0_i32_1 = arith.constant 0 : i32
    return %arg0, %c0_i32, %c0_i32_0 : i32, i32, i32
  }
  func.func @transform_1(%arg0: i32) -> (i32, i32) {
    %c0_i32 = arith.constant 0 : i32
    %c0_i32_0 = arith.constant 0 : i32
    %c0_i32_1 = arith.constant 0 : i32
    return %c0_i32, %c0_i32_0 : i32, i32
  }
  func.func @transform_2(%arg0: i32) -> (i32, i32) {
    %c0_i32 = arith.constant 0 : i32
    %c0_i32_0 = arith.constant 0 : i32
    %c0_i32_1 = arith.constant 0 : i32
    return %c0_i32, %c0_i32_0 : i32, i32
  }
  func.func @transform_3(%arg0: i32) -> (i32, i32, i32) {
    %c0_i32 = arith.constant 0 : i32
    %c0_i32_0 = arith.constant 0 : i32
    %c0_i32_1 = arith.constant 0 : i32
    return %arg0, %c0_i32, %c0_i32_0 : i32, i32, i32
  }
}

module attributes {stable_mosaic.version = 11 : i64} {
  func.func @_clf_kernel(%arg0: i32, %arg1: memref<2x1x128xf32, #tpu.memory_space<vmem>>, %arg2: memref<384x32xbf16, #tpu.memory_space<vmem>>, %arg3: memref<32x32xbf16, #tpu.memory_space<vmem>>, %arg4: memref<1x32xf32, #tpu.memory_space<vmem>>, %arg5: memref<2x64xf32, #tpu.memory_space<vmem>>) attributes {dimension_semantics = [#tpu.dimension_semantics<arbitrary>], iteration_bounds = array<i64: 1>, scalar_prefetch = 0 : i64, scratch_operands = 0 : i64, tpu.core_type = #tpu.core_type<tc>, window_params = [{pipeline_mode = #tpu.pipeline_mode<synchronous>, transform_indices = @transform_0, window_bounds = array<i64: 2, 1, 128>}, {pipeline_mode = #tpu.pipeline_mode<synchronous>, transform_indices = @transform_1, window_bounds = array<i64: 384, 32>}, {pipeline_mode = #tpu.pipeline_mode<synchronous>, transform_indices = @transform_2, window_bounds = array<i64: 32, 32>}, {pipeline_mode = #tpu.pipeline_mode<synchronous>, transform_indices = @transform_3, window_bounds = array<i64: 1, 32>}, {pipeline_mode = #tpu.pipeline_mode<synchronous>, transform_indices = @transform_4, window_bounds = array<i64: 2, 64>}]} {
    %c0 = arith.constant 0 : index
    %c0_0 = arith.constant 0 : index
    %0 = vector.load %arg2[%c0, %c0_0] : memref<384x32xbf16, #tpu.memory_space<vmem>>, vector<384x32xbf16>
    %c0_1 = arith.constant 0 : index
    %c0_2 = arith.constant 0 : index
    %1 = vector.load %arg3[%c0_1, %c0_2] : memref<32x32xbf16, #tpu.memory_space<vmem>>, vector<32x32xbf16>
    %cst = arith.constant dense<0.000000e+00> : vector<384x32xf32>
    %2 = tpu.matmul %0, %1, %cst {dimension_numbers = #tpu.dot_dimension_numbers<[1], [0], [0], [1], [0, 0, 1, 1], [], []>} : vector<384x32xbf16>, vector<32x32xbf16>, vector<384x32xf32> -> vector<384x32xf32>
    %c0_3 = arith.constant 0 : index
    %c0_4 = arith.constant 0 : index
    %3 = vector.load %arg4[%c0_3, %c0_4] : memref<1x32xf32, #tpu.memory_space<vmem>>, vector<1x32xf32>
    %4 = vector.broadcast %3 : vector<1x32xf32> to vector<384x32xf32>
    %5 = arith.addf %2, %4 : vector<384x32xf32>
    %cst_5 = arith.constant 0.000000e+00 : f32
    %6 = vector.broadcast %cst_5 : f32 to vector<384x32xf32>
    %7 = arith.maximumf %5, %6 : vector<384x32xf32>
    %8 = vector.extract_strided_slice %7 {offsets = [0, 0], sizes = [256, 32], strides = [1, 1]} : vector<384x32xf32> to vector<256x32xf32>
    %9 = vector.shape_cast %8 : vector<256x32xf32> to vector<2x128x32xf32>
    %10 = vector.extract_strided_slice %7 {offsets = [256, 0], sizes = [128, 32], strides = [1, 1]} : vector<384x32xf32> to vector<128x32xf32>
    %11 = vector.shape_cast %10 : vector<128x32xf32> to vector<2x64x32xf32>
    %c0_6 = arith.constant 0 : index
    %c0_7 = arith.constant 0 : index
    %c0_8 = arith.constant 0 : index
    %12 = vector.load %arg1[%c0_6, %c0_7, %c0_8] : memref<2x1x128xf32, #tpu.memory_space<vmem>>, vector<2x1x128xf32>
    "tpu.trace_start"() <{level = 10 : i32, message = "bqn,bnc->bqc"}> : () -> ()
    %cst_9 = arith.constant dense<0.000000e+00> : vector<2x1x32xf32>
    %13 = tpu.matmul %12, %9, %cst_9 {dimension_numbers = #tpu.dot_dimension_numbers<[2], [1], [1], [2], [0, 0, 0, 1, 1, 2], [0], [0]>} : vector<2x1x128xf32>, vector<2x128x32xf32>, vector<2x1x32xf32> -> vector<2x1x32xf32>
    "tpu.trace_stop"() : () -> ()
    %cst_10 = arith.constant dense<0.000000e+00> : vector<2x1xf32>
    %14 = vector.multi_reduction <add>, %12, %cst_10 [2] : vector<2x1x128xf32> to vector<2x1xf32>
    %15 = vector.shape_cast %14 : vector<2x1xf32> to vector<2x1x1xf32>
    %cst_11 = arith.constant 9.99999997E-7 : f32
    %16 = vector.broadcast %cst_11 : f32 to vector<2x1x1xf32>
    %17 = arith.addf %15, %16 : vector<2x1x1xf32>
    %18 = vector.broadcast %17 : vector<2x1x1xf32> to vector<2x1x32xf32>
    %19 = arith.divf %13, %18 : vector<2x1x32xf32>
    "tpu.trace_start"() <{level = 10 : i32, message = "bqc,bnc->bqn"}> : () -> ()
    %cst_12 = arith.constant dense<0.000000e+00> : vector<2x1x64xf32>
    %20 = tpu.matmul %19, %11, %cst_12 {dimension_numbers = #tpu.dot_dimension_numbers<[2], [2], [1], [1], [0, 0, 0, 1, 1, 1], [0], [0]>} : vector<2x1x32xf32>, vector<2x64x32xf32>, vector<2x1x64xf32> -> vector<2x1x64xf32>
    "tpu.trace_stop"() : () -> ()
    %21 = vector.shape_cast %20 : vector<2x1x64xf32> to vector<2x64xf32>
    %c0_13 = arith.constant 0 : index
    %c0_14 = arith.constant 0 : index
    %22 = vector.load %arg5[%c0_13, %c0_14] : memref<2x64xf32, #tpu.memory_space<vmem>>, vector<2x64xf32>
    tpu.vector_store %arg5[%c0_13, %c0_14], %21 {strides = array<i32>} : memref<2x64xf32, #tpu.memory_space<vmem>>, vector<2x64xf32>,
    return
  }
  func.func @transform_0(%arg0: i32) -> (i32, i32, i32) {
    %c0_i32 = arith.constant 0 : i32
    %c0_i32_0 = arith.constant 0 : i32
    %c0_i32_1 = arith.constant 0 : i32
    %c0_i32_2 = arith.constant 0 : i32
    return %c0_i32, %c0_i32_0, %c0_i32_1 : i32, i32, i32
  }
  func.func @transform_1(%arg0: i32) -> (i32, i32) {
    %c0_i32 = arith.constant 0 : i32
    %c0_i32_0 = arith.constant 0 : i32
    %c0_i32_1 = arith.constant 0 : i32
    return %c0_i32, %c0_i32_0 : i32, i32
  }
  func.func @transform_2(%arg0: i32) -> (i32, i32) {
    %c0_i32 = arith.constant 0 : i32
    %c0_i32_0 = arith.constant 0 : i32
    %c0_i32_1 = arith.constant 0 : i32
    return %c0_i32, %c0_i32_0 : i32, i32
  }
  func.func @transform_3(%arg0: i32) -> (i32, i32) {
    %c0_i32 = arith.constant 0 : i32
    %c0_i32_0 = arith.constant 0 : i32
    %c0_i32_1 = arith.constant 0 : i32
    return %c0_i32, %c0_i32_0 : i32, i32
  }
  func.func @transform_4(%arg0: i32) -> (i32, i32) {
    %c0_i32 = arith.constant 0 : i32
    %c0_i32_0 = arith.constant 0 : i32
    %c0_i32_1 = arith.constant 0 : i32
    return %c0_i32, %c0_i32_0 : i32, i32
  }
}

module attributes {stable_mosaic.version = 11 : i64} {
  func.func @_bbreg_kernel(%arg0: i32, %arg1: memref<1x2x16xf32, #tpu.memory_space<vmem>>, %arg2: memref<1x2x32xf32, #tpu.memory_space<vmem>>, %arg3: memref<1x1x16xf32, #tpu.memory_space<vmem>>, %arg4: memref<1x1x32xf32, #tpu.memory_space<vmem>>, %arg5: memref<1x2x4xf32, #tpu.memory_space<vmem>>, %arg6: memref<1x1x8x4xf32, #tpu.memory_space<vmem>>, %arg7: memref<2x16x32xf32, #tpu.memory_space<vmem>>, %arg8: memref<2x32x32xf32, #tpu.memory_space<vmem>>, %arg9: memref<4x4x32xf32, #tpu.memory_space<vmem>>, %arg10: memref<8x32xf32, #tpu.memory_space<vmem>>, %arg11: memref<1xf32, #tpu.memory_space<smem>>, %arg12: memref<1x1x8xf32, #tpu.memory_space<vmem>>) attributes {dimension_semantics = [#tpu.dimension_semantics<parallel>], iteration_bounds = array<i64: 2>, scalar_prefetch = 0 : i64, scratch_operands = 0 : i64, tpu.core_type = #tpu.core_type<tc>, window_params = [{transform_indices = @transform_0, window_bounds = array<i64: 1, 2, 16>}, {transform_indices = @transform_1, window_bounds = array<i64: 1, 2, 32>}, {transform_indices = @transform_2, window_bounds = array<i64: 1, 1, 16>}, {transform_indices = @transform_3, window_bounds = array<i64: 1, 1, 32>}, {transform_indices = @transform_4, window_bounds = array<i64: 1, 2, 4>}, {transform_indices = @transform_5, window_bounds = array<i64: 1, 1, 8, 4>}, {pipeline_mode = #tpu.pipeline_mode<synchronous>, transform_indices = @transform_6, window_bounds = array<i64: 2, 16, 32>}, {pipeline_mode = #tpu.pipeline_mode<synchronous>, transform_indices = @transform_7, window_bounds = array<i64: 2, 32, 32>}, {pipeline_mode = #tpu.pipeline_mode<synchronous>, transform_indices = @transform_8, window_bounds = array<i64: 4, 4, 32>}, {pipeline_mode = #tpu.pipeline_mode<synchronous>, transform_indices = @transform_9, window_bounds = array<i64: 8, 32>}, {transform_indices = @transform_10, window_bounds = array<i64: 1>}, {transform_indices = @transform_11, window_bounds = array<i64: 1, 1, 8>}]} {
    %c0 = arith.constant 0 : index
    %c0_0 = arith.constant 0 : index
    %c0_1 = arith.constant 0 : index
    %0 = vector.load %arg5[%c0, %c0_0, %c0_1] : memref<1x2x4xf32, #tpu.memory_space<vmem>>, vector<1x2x4xf32>
    %1 = vector.shape_cast %0 : vector<1x2x4xf32> to vector<2x4xf32>
    %c0_2 = arith.constant 0 : index
    %c0_3 = arith.constant 0 : index
    %c0_4 = arith.constant 0 : index
    %2 = vector.load %arg1[%c0_2, %c0_3, %c0_4] : memref<1x2x16xf32, #tpu.memory_space<vmem>>, vector<1x2x16xf32>
    %3 = vector.shape_cast %2 : vector<1x2x16xf32> to vector<2x16xf32>
    %c0_5 = arith.constant 0 : index
    %c0_6 = arith.constant 0 : index
    %c0_7 = arith.constant 0 : index
    %4 = vector.load %arg7[%c0_5, %c0_6, %c0_7] : memref<2x16x32xf32, #tpu.memory_space<vmem>>, vector<1x16x32xf32>
    %5 = vector.shape_cast %4 : vector<1x16x32xf32> to vector<16x32xf32>
    %cst = arith.constant dense<0.000000e+00> : vector<2x32xf32>
    %6 = tpu.matmul %3, %5, %cst {dimension_numbers = #tpu.dot_dimension_numbers<[1], [0], [0], [1], [0, 0, 1, 1], [], []>} : vector<2x16xf32>, vector<16x32xf32>, vector<2x32xf32> -> vector<2x32xf32>
    %c0_8 = arith.constant 0 : index
    %c0_9 = arith.constant 0 : index
    %c0_10 = arith.constant 0 : index
    %7 = vector.load %arg9[%c0_8, %c0_9, %c0_10] : memref<4x4x32xf32, #tpu.memory_space<vmem>>, vector<1x4x32xf32>
    %8 = vector.shape_cast %7 : vector<1x4x32xf32> to vector<4x32xf32>
    %cst_11 = arith.constant dense<0.000000e+00> : vector<2x32xf32>
    %9 = tpu.matmul %1, %8, %cst_11 {dimension_numbers = #tpu.dot_dimension_numbers<[1], [0], [0], [1], [0, 0, 1, 1], [], []>} : vector<2x4xf32>, vector<4x32xf32>, vector<2x32xf32> -> vector<2x32xf32>
    %10 = arith.addf %6, %9 : vector<2x32xf32>
    %c0_12 = arith.constant 0 : index
    %c0_13 = arith.constant 0 : index
    %11 = vector.load %arg10[%c0_12, %c0_13] : memref<8x32xf32, #tpu.memory_space<vmem>>, vector<1x32xf32>
    %12 = vector.broadcast %11 : vector<1x32xf32> to vector<2x32xf32>
    %13 = arith.addf %10, %12 : vector<2x32xf32>
    %c0_14 = arith.constant 0 : index
    %c0_15 = arith.constant 0 : index
    %c0_16 = arith.constant 0 : index
    %14 = vector.load %arg2[%c0_14, %c0_15, %c0_16] : memref<1x2x32xf32, #tpu.memory_space<vmem>>, vector<1x2x32xf32>
    %15 = vector.shape_cast %14 : vector<1x2x32xf32> to vector<2x32xf32>
    %c0_17 = arith.constant 0 : index
    %c0_18 = arith.constant 0 : index
    %c0_19 = arith.constant 0 : index
    %16 = vector.load %arg8[%c0_17, %c0_18, %c0_19] : memref<2x32x32xf32, #tpu.memory_space<vmem>>, vector<1x32x32xf32>
    %17 = vector.shape_cast %16 : vector<1x32x32xf32> to vector<32x32xf32>
    %cst_20 = arith.constant dense<0.000000e+00> : vector<2x32xf32>
    %18 = tpu.matmul %15, %17, %cst_20 {dimension_numbers = #tpu.dot_dimension_numbers<[1], [0], [0], [1], [0, 0, 1, 1], [], []>} : vector<2x32xf32>, vector<32x32xf32>, vector<2x32xf32> -> vector<2x32xf32>
    %c1 = arith.constant 1 : index
    %c0_21 = arith.constant 0 : index
    %c0_22 = arith.constant 0 : index
    %19 = vector.load %arg9[%c1, %c0_21, %c0_22] : memref<4x4x32xf32, #tpu.memory_space<vmem>>, vector<1x4x32xf32>
    %20 = vector.shape_cast %19 : vector<1x4x32xf32> to vector<4x32xf32>
    %cst_23 = arith.constant dense<0.000000e+00> : vector<2x32xf32>
    %21 = tpu.matmul %1, %20, %cst_23 {dimension_numbers = #tpu.dot_dimension_numbers<[1], [0], [0], [1], [0, 0, 1, 1], [], []>} : vector<2x4xf32>, vector<4x32xf32>, vector<2x32xf32> -> vector<2x32xf32>
    %22 = arith.addf %18, %21 : vector<2x32xf32>
    %c1_24 = arith.constant 1 : index
    %c0_25 = arith.constant 0 : index
    %23 = vector.load %arg10[%c1_24, %c0_25] : memref<8x32xf32, #tpu.memory_space<vmem>>, vector<1x32xf32>
    %24 = vector.broadcast %23 : vector<1x32xf32> to vector<2x32xf32>
    %25 = arith.addf %22, %24 : vector<2x32xf32>
    %cst_26 = arith.constant 0.000000e+00 : f32
    %26 = vector.broadcast %cst_26 : f32 to vector<2x32xf32>
    %27 = arith.maximumf %13, %26 : vector<2x32xf32>
    %cst_27 = arith.constant dense<0.000000e+00> : vector<32xf32>
    %28 = vector.multi_reduction <add>, %27, %cst_27 [0] : vector<2x32xf32> to vector<32xf32>
    %29 = vector.shape_cast %28 : vector<32xf32> to vector<1x32xf32>
    %cst_28 = arith.constant 2.000000e+00 : f32
    %30 = vector.broadcast %cst_28 : f32 to vector<1x32xf32>
    %31 = arith.divf %29, %30 : vector<1x32xf32>
    %cst_29 = arith.constant 0.000000e+00 : f32
    %32 = vector.broadcast %cst_29 : f32 to vector<2x32xf32>
    %33 = arith.maximumf %25, %32 : vector<2x32xf32>
    %cst_30 = arith.constant dense<0.000000e+00> : vector<32xf32>
    %34 = vector.multi_reduction <add>, %33, %cst_30 [0] : vector<2x32xf32> to vector<32xf32>
    %35 = vector.shape_cast %34 : vector<32xf32> to vector<1x32xf32>
    %cst_31 = arith.constant 2.000000e+00 : f32
    %36 = vector.broadcast %cst_31 : f32 to vector<1x32xf32>
    %37 = arith.divf %35, %36 : vector<1x32xf32>
    %c0_32 = arith.constant 0 : index
    %c0_33 = arith.constant 0 : index
    %c0_34 = arith.constant 0 : index
    %38 = vector.load %arg3[%c0_32, %c0_33, %c0_34] : memref<1x1x16xf32, #tpu.memory_space<vmem>>, vector<1x1x16xf32>
    %39 = vector.shape_cast %38 : vector<1x1x16xf32> to vector<1x16xf32>
    %c1_35 = arith.constant 1 : index
    %c0_36 = arith.constant 0 : index
    %c0_37 = arith.constant 0 : index
    %40 = vector.load %arg7[%c1_35, %c0_36, %c0_37] : memref<2x16x32xf32, #tpu.memory_space<vmem>>, vector<1x16x32xf32>
    %41 = vector.shape_cast %40 : vector<1x16x32xf32> to vector<16x32xf32>
    %cst_38 = arith.constant dense<0.000000e+00> : vector<1x32xf32>
    %42 = tpu.matmul %39, %41, %cst_38 {dimension_numbers = #tpu.dot_dimension_numbers<[1], [0], [0], [1], [0, 0, 1, 1], [], []>} : vector<1x16xf32>, vector<16x32xf32>, vector<1x32xf32> -> vector<1x32xf32>
    %c2 = arith.constant 2 : index
    %c0_39 = arith.constant 0 : index
    %43 = vector.load %arg10[%c2, %c0_39] : memref<8x32xf32, #tpu.memory_space<vmem>>, vector<1x32xf32>
    %44 = arith.addf %42, %43 : vector<1x32xf32>
    %cst_40 = arith.constant 0.000000e+00 : f32
    %45 = vector.broadcast %cst_40 : f32 to vector<1x32xf32>
    %46 = arith.maximumf %44, %45 : vector<1x32xf32>
    %c0_41 = arith.constant 0 : index
    %c0_42 = arith.constant 0 : index
    %c0_43 = arith.constant 0 : index
    %47 = vector.load %arg4[%c0_41, %c0_42, %c0_43] : memref<1x1x32xf32, #tpu.memory_space<vmem>>, vector<1x1x32xf32>
    %48 = vector.shape_cast %47 : vector<1x1x32xf32> to vector<1x32xf32>
    %c1_44 = arith.constant 1 : index
    %c0_45 = arith.constant 0 : index
    %c0_46 = arith.constant 0 : index
    %49 = vector.load %arg8[%c1_44, %c0_45, %c0_46] : memref<2x32x32xf32, #tpu.memory_space<vmem>>, vector<1x32x32xf32>
    %50 = vector.shape_cast %49 : vector<1x32x32xf32> to vector<32x32xf32>
    %cst_47 = arith.constant dense<0.000000e+00> : vector<1x32xf32>
    %51 = tpu.matmul %48, %50, %cst_47 {dimension_numbers = #tpu.dot_dimension_numbers<[1], [0], [0], [1], [0, 0, 1, 1], [], []>} : vector<1x32xf32>, vector<32x32xf32>, vector<1x32xf32> -> vector<1x32xf32>
    %c3 = arith.constant 3 : index
    %c0_48 = arith.constant 0 : index
    %52 = vector.load %arg10[%c3, %c0_48] : memref<8x32xf32, #tpu.memory_space<vmem>>, vector<1x32xf32>
    %53 = arith.addf %51, %52 : vector<1x32xf32>
    %cst_49 = arith.constant 0.000000e+00 : f32
    %54 = vector.broadcast %cst_49 : f32 to vector<1x32xf32>
    %55 = arith.maximumf %53, %54 : vector<1x32xf32>
    %56 = arith.mulf %31, %46 : vector<1x32xf32>
    %c6 = arith.constant 6 : index
    %c0_50 = arith.constant 0 : index
    %57 = vector.load %arg10[%c6, %c0_50] : memref<8x32xf32, #tpu.memory_space<vmem>>, vector<1x32xf32>
    %58 = arith.mulf %56, %57 : vector<1x32xf32>
    %59 = arith.mulf %37, %55 : vector<1x32xf32>
    %c7 = arith.constant 7 : index
    %c0_51 = arith.constant 0 : index
    %60 = vector.load %arg10[%c7, %c0_51] : memref<8x32xf32, #tpu.memory_space<vmem>>, vector<1x32xf32>
    %61 = arith.mulf %59, %60 : vector<1x32xf32>
    %c0_52 = arith.constant 0 : index
    %c0_53 = arith.constant 0 : index
    %c0_54 = arith.constant 0 : index
    %c0_55 = arith.constant 0 : index
    %62 = vector.load %arg6[%c0_52, %c0_53, %c0_54, %c0_55] : memref<1x1x8x4xf32, #tpu.memory_space<vmem>>, vector<1x1x8x4xf32>
    %63 = vector.shape_cast %62 : vector<1x1x8x4xf32> to vector<1x8x4xf32>
    %64 = vector.shape_cast %63 : vector<1x8x4xf32> to vector<8x4xf32>
    %c2_56 = arith.constant 2 : index
    %c0_57 = arith.constant 0 : index
    %c0_58 = arith.constant 0 : index
    %65 = vector.load %arg9[%c2_56, %c0_57, %c0_58] : memref<4x4x32xf32, #tpu.memory_space<vmem>>, vector<1x4x32xf32>
    %66 = vector.shape_cast %65 : vector<1x4x32xf32> to vector<4x32xf32>
    %cst_59 = arith.constant dense<0.000000e+00> : vector<8x32xf32>
    %67 = tpu.matmul %64, %66, %cst_59 {dimension_numbers = #tpu.dot_dimension_numbers<[1], [0], [0], [1], [0, 0, 1, 1], [], []>} : vector<8x4xf32>, vector<4x32xf32>, vector<8x32xf32> -> vector<8x32xf32>
    %c4 = arith.constant 4 : index
    %c0_60 = arith.constant 0 : index
    %68 = vector.load %arg10[%c4, %c0_60] : memref<8x32xf32, #tpu.memory_space<vmem>>, vector<1x32xf32>
    %69 = vector.broadcast %68 : vector<1x32xf32> to vector<8x32xf32>
    %70 = arith.addf %67, %69 : vector<8x32xf32>
    %cst_61 = arith.constant 0.000000e+00 : f32
    %71 = vector.broadcast %cst_61 : f32 to vector<8x32xf32>
    %72 = arith.maximumf %70, %71 : vector<8x32xf32>
    %73 = vector.shape_cast %72 : vector<8x32xf32> to vector<1x8x32xf32>
    %c3_62 = arith.constant 3 : index
    %c0_63 = arith.constant 0 : index
    %c0_64 = arith.constant 0 : index
    %74 = vector.load %arg9[%c3_62, %c0_63, %c0_64] : memref<4x4x32xf32, #tpu.memory_space<vmem>>, vector<1x4x32xf32>
    %75 = vector.shape_cast %74 : vector<1x4x32xf32> to vector<4x32xf32>
    %cst_65 = arith.constant dense<0.000000e+00> : vector<8x32xf32>
    %76 = tpu.matmul %64, %75, %cst_65 {dimension_numbers = #tpu.dot_dimension_numbers<[1], [0], [0], [1], [0, 0, 1, 1], [], []>} : vector<8x4xf32>, vector<4x32xf32>, vector<8x32xf32> -> vector<8x32xf32>
    %c5 = arith.constant 5 : index
    %c0_66 = arith.constant 0 : index
    %77 = vector.load %arg10[%c5, %c0_66] : memref<8x32xf32, #tpu.memory_space<vmem>>, vector<1x32xf32>
    %78 = vector.broadcast %77 : vector<1x32xf32> to vector<8x32xf32>
    %79 = arith.addf %76, %78 : vector<8x32xf32>
    %cst_67 = arith.constant 0.000000e+00 : f32
    %80 = vector.broadcast %cst_67 : f32 to vector<8x32xf32>
    %81 = arith.maximumf %79, %80 : vector<8x32xf32>
    %82 = vector.shape_cast %81 : vector<8x32xf32> to vector<1x8x32xf32>
    %83 = vector.shape_cast %58 : vector<1x32xf32> to vector<1x1x32xf32>
    %84 = vector.broadcast %83 : vector<1x1x32xf32> to vector<1x8x32xf32>
    %85 = arith.mulf %73, %84 : vector<1x8x32xf32>
    %cst_68 = arith.constant dense<0.000000e+00> : vector<1x8xf32>
    %86 = vector.multi_reduction <add>, %85, %cst_68 [2] : vector<1x8x32xf32> to vector<1x8xf32>
    %87 = vector.shape_cast %61 : vector<1x32xf32> to vector<1x1x32xf32>
    %88 = vector.broadcast %87 : vector<1x1x32xf32> to vector<1x8x32xf32>
    %89 = arith.mulf %82, %88 : vector<1x8x32xf32>
    %cst_69 = arith.constant dense<0.000000e+00> : vector<1x8xf32>
    %90 = vector.multi_reduction <add>, %89, %cst_69 [2] : vector<1x8x32xf32> to vector<1x8xf32>
    %91 = arith.addf %86, %90 : vector<1x8xf32>
    %c0_70 = arith.constant 0 : index
    %92 = memref.load %arg11[%c0_70] : memref<1xf32, #tpu.memory_space<smem>>
    %93 = vector.broadcast %92 : f32 to vector<1x8xf32>
    %94 = arith.addf %91, %93 : vector<1x8xf32>
    %c0_71 = arith.constant 0 : index
    %c0_72 = arith.constant 0 : index
    %c0_73 = arith.constant 0 : index
    %95 = vector.load %arg12[%c0_71, %c0_72, %c0_73] : memref<1x1x8xf32, #tpu.memory_space<vmem>>, vector<1x1x8xf32>
    %96 = vector.shape_cast %95 : vector<1x1x8xf32> to vector<1x8xf32>
    %97 = vector.shape_cast %94 : vector<1x8xf32> to vector<1x1x8xf32>
    tpu.vector_store %arg12[%c0_71, %c0_72, %c0_73], %97 {strides = array<i32>} : memref<1x1x8xf32, #tpu.memory_space<vmem>>, vector<1x1x8xf32>,
    return
  }
  func.func @transform_0(%arg0: i32) -> (i32, i32, i32) {
    %c0_i32 = arith.constant 0 : i32
    %c0_i32_0 = arith.constant 0 : i32
    %c0_i32_1 = arith.constant 0 : i32
    return %arg0, %c0_i32, %c0_i32_0 : i32, i32, i32
  }
  func.func @transform_1(%arg0: i32) -> (i32, i32, i32) {
    %c0_i32 = arith.constant 0 : i32
    %c0_i32_0 = arith.constant 0 : i32
    %c0_i32_1 = arith.constant 0 : i32
    return %arg0, %c0_i32, %c0_i32_0 : i32, i32, i32
  }
  func.func @transform_2(%arg0: i32) -> (i32, i32, i32) {
    %c0_i32 = arith.constant 0 : i32
    %c0_i32_0 = arith.constant 0 : i32
    %c0_i32_1 = arith.constant 0 : i32
    return %arg0, %c0_i32, %c0_i32_0 : i32, i32, i32
  }
  func.func @transform_3(%arg0: i32) -> (i32, i32, i32) {
    %c0_i32 = arith.constant 0 : i32
    %c0_i32_0 = arith.constant 0 : i32
    %c0_i32_1 = arith.constant 0 : i32
    return %arg0, %c0_i32, %c0_i32_0 : i32, i32, i32
  }
  func.func @transform_4(%arg0: i32) -> (i32, i32, i32) {
    %c0_i32 = arith.constant 0 : i32
    %c0_i32_0 = arith.constant 0 : i32
    %c0_i32_1 = arith.constant 0 : i32
    return %arg0, %c0_i32, %c0_i32_0 : i32, i32, i32
  }
  func.func @transform_5(%arg0: i32) -> (i32, i32, i32, i32) {
    %c0_i32 = arith.constant 0 : i32
    %c0_i32_0 = arith.constant 0 : i32
    %c0_i32_1 = arith.constant 0 : i32
    %c0_i32_2 = arith.constant 0 : i32
    return %arg0, %c0_i32, %c0_i32_0, %c0_i32_1 : i32, i32, i32, i32
  }
  func.func @transform_6(%arg0: i32) -> (i32, i32, i32) {
    %c0_i32 = arith.constant 0 : i32
    %c0_i32_0 = arith.constant 0 : i32
    %c0_i32_1 = arith.constant 0 : i32
    %c0_i32_2 = arith.constant 0 : i32
    return %c0_i32, %c0_i32_0, %c0_i32_1 : i32, i32, i32
  }
  func.func @transform_7(%arg0: i32) -> (i32, i32, i32) {
    %c0_i32 = arith.constant 0 : i32
    %c0_i32_0 = arith.constant 0 : i32
    %c0_i32_1 = arith.constant 0 : i32
    %c0_i32_2 = arith.constant 0 : i32
    return %c0_i32, %c0_i32_0, %c0_i32_1 : i32, i32, i32
  }
  func.func @transform_8(%arg0: i32) -> (i32, i32, i32) {
    %c0_i32 = arith.constant 0 : i32
    %c0_i32_0 = arith.constant 0 : i32
    %c0_i32_1 = arith.constant 0 : i32
    %c0_i32_2 = arith.constant 0 : i32
    return %c0_i32, %c0_i32_0, %c0_i32_1 : i32, i32, i32
  }
  func.func @transform_9(%arg0: i32) -> (i32, i32) {
    %c0_i32 = arith.constant 0 : i32
    %c0_i32_0 = arith.constant 0 : i32
    %c0_i32_1 = arith.constant 0 : i32
    return %c0_i32, %c0_i32_0 : i32, i32
  }
  func.func @transform_10(%arg0: i32) -> i32 {
    %c0_i32 = arith.constant 0 : i32
    %c0_i32_0 = arith.constant 0 : i32
    return %c0_i32 : i32
  }
  func.func @transform_11(%arg0: i32) -> (i32, i32, i32) {
    %c0_i32 = arith.constant 0 : i32
    %c0_i32_0 = arith.constant 0 : i32
    %c0_i32_1 = arith.constant 0 : i32
    return %arg0, %c0_i32, %c0_i32_0 : i32, i32, i32
  }
}

</mosaic_0001>

<llo_original>
// kernel: forward.4
$region0: #{forward.4}
  #allocation0 [shape = 'u32[]', space=smem, size = 0x4, offset = 0x4, fixed_abs, tag = 'smem constant byte address 0x4 - core index']
  #allocation1 [shape = 'u32[144,128]{1,0:T(1,128)}', space=vmem, size = 0x12000, scoped, tag = 'internal scratch']
  %s0 = inlined_call_operand.vmem [shape: bf16[6,16,306], index: 0, kind: input, shape index: {}]
  %s1 = inlined_call_operand.vmem [shape: bf16[306,256], index: 1, kind: input, shape index: {}]
  %s2 = inlined_call_operand.vmem [shape: f32[1,256], index: 2, kind: input, shape index: {}]
  %s3 = inlined_call_operand.vmem [shape: bf16[6,16,256], index: 3, kind: output, shape index: {}]
  %s4 = sld [smem:[#allocation0]]
  $region45: #{forward.4} parent=0
    _
  %s6 = ssub.s32 1, %s4
  %s7 = scalar_select 0, %s6, %s4
  loop: start=0, step=1, limit=4
  $region2: #{forward.4} parent=0 // loop_pre_header
    _
  $region3: #{forward.4} parent=0 // loop_header
    %s9 = sphi 0, %s13
    %p10 = scmp.ge.s32.totalorder %s9, 4
    %s19 = sphi 0, %s21
    %s22 = sphi 0, %s19
    %s23 = sphi 0, %s22
    %s39 = sphi 0, %s23
    %s43 = sphi 0, %s43
    %s45 = sphi 0, %s43
    %s46 = sphi 0, %s45
    %s60 = sphi 0, %s46
    %s64 = sphi 0, %s64
    %s66 = sphi 0, %s64
    %s67 = sphi 0, %s66
    %s81 = sphi 0, %s67
    %s87 = sphi 0, %s89
    %s90 = sphi 0, %s87
    %s91 = sphi 0, %s90
    %s107 = sphi 0, %s91
  $region4: #{forward.4} parent=0 // loop_header_branch
    %12 = sbr.rel (%p10) target = $region8
  $region5: #{forward.4} parent=0 // loop_body
    %s14 = ssub.s32 %s9, 1
    %s15 = ssub.s32 %s9, 2
    %s16 = sadd.s32 %s9, 1
    %s17 = ssub.s32 %s9, %s16
    %p18 = scmp.eq.s32.totalorder %s17, 0
    %s20 = sadd.s32 %s19, 1
    %s21 = scalar_select %p18, %s19, %s20
    %p24 = pneg %p18
    %p25 = scmp.eq.s32.totalorder %s9, 1
    %p26 = por %p24, %p25
    %p27 = scmp.ne.s32.totalorder %s19, %s22
    %p28 = scmp.eq.s32.totalorder %s9, 0
    %p29 = por %p27, %p28
    %p30 = scmp.ne.s32.totalorder %s19, %s22
    %p31 = scmp.eq.s32.totalorder %s14, 1
    %p32 = por %p30, %p31
    %p33 = scmp.ne.s32.totalorder %s22, %s23
    %p34 = scmp.eq.s32.totalorder %s14, 0
    %p35 = por %p33, %p34
    %p36 = scmp.ne.s32.totalorder %s22, %s23
    %p37 = scmp.eq.s32.totalorder %s15, 1
    %p38 = por %p36, %p37
    %p40 = scmp.ne.s32.totalorder %s23, %s39
    %p41 = scmp.eq.s32.totalorder %s15, 0
    %p42 = por %p40, %p41
    %s44 = sadd.s32 %s43, 1
    %p47 = scmp.eq.s32.totalorder %s9, 1
    %p48 = scmp.ne.s32.totalorder %s43, %s45
    %p49 = scmp.eq.s32.totalorder %s9, 0
    %p50 = por %p48, %p49
    %p51 = scmp.ne.s32.totalorder %s43, %s45
    %p52 = scmp.eq.s32.totalorder %s14, 1
    %p53 = por %p51, %p52
    %p54 = scmp.ne.s32.totalorder %s45, %s46
    %p55 = scmp.eq.s32.totalorder %s14, 0
    %p56 = por %p54, %p55
    %p57 = scmp.ne.s32.totalorder %s45, %s46
    %p58 = scmp.eq.s32.totalorder %s15, 1
    %p59 = por %p57, %p58
    %p61 = scmp.ne.s32.totalorder %s46, %s60
    %p62 = scmp.eq.s32.totalorder %s15, 0
    %p63 = por %p61, %p62
    %s65 = sadd.s32 %s64, 1
    %p68 = scmp.eq.s32.totalorder %s9, 1
    %p69 = scmp.ne.s32.totalorder %s64, %s66
    %p70 = scmp.eq.s32.totalorder %s9, 0
    %p71 = por %p69, %p70
    %p72 = scmp.ne.s32.totalorder %s64, %s66
    %p73 = scmp.eq.s32.totalorder %s14, 1
    %p74 = por %p72, %p73
    %p75 = scmp.ne.s32.totalorder %s66, %s67
    %p76 = scmp.eq.s32.totalorder %s14, 0
    %p77 = por %p75, %p76
    %p78 = scmp.ne.s32.totalorder %s66, %s67
    %p79 = scmp.eq.s32.totalorder %s15, 1
    %p80 = por %p78, %p79
    %p82 = scmp.ne.s32.totalorder %s67, %s81
    %p83 = scmp.eq.s32.totalorder %s15, 0
    %p84 = por %p82, %p83
    %s85 = ssub.s32 %s9, %s16
    %p86 = scmp.eq.s32.totalorder %s85, 0
    %s88 = sadd.s32 %s87, 1
    %s89 = scalar_select %p86, %s87, %s88
    %p92 = pneg %p86
    %p93 = scmp.eq.s32.totalorder %s9, 1
    %p94 = por %p92, %p93
    %p95 = scmp.ne.s32.totalorder %s87, %s90
    %p96 = scmp.eq.s32.totalorder %s9, 0
    %p97 = por %p95, %p96
    %p98 = scmp.ne.s32.totalorder %s87, %s90
    %p99 = scmp.eq.s32.totalorder %s14, 1
    %p100 = por %p98, %p99
    %p101 = scmp.ne.s32.totalorder %s90, %s91
    %p102 = scmp.eq.s32.totalorder %s14, 0
    %p103 = por %p101, %p102
    %p104 = scmp.ne.s32.totalorder %s90, %s91
    %p105 = scmp.eq.s32.totalorder %s15, 1
    %p106 = por %p104, %p105
    %p108 = scmp.ne.s32.totalorder %s91, %s107
    %p109 = scmp.eq.s32.totalorder %s15, 0
    %p110 = por %p108, %p109
    %p111 = scmp.le.s32.totalorder 1, %s9
    %p112 = scmp.lt.s32.totalorder %s9, 3
    %p113 = pnand %p111, %p112
    %p114 = pneg %p113
    // Predicated region
    $region9: #{forward.4} parent=5 // pred_check
      _
    $region10: #{forward.4} parent=5 // pred_check_branch
      %116 = sbr.rel (%p113) target = $region12
    $region11: #{forward.4} parent=5 // pred_region
      %s117 = ssub.s32 %s9, 1
      // Predicated region
      $region13: #{forward.4} parent=11 // pred_check
        %p118 = pneg %p56
      $region14: #{forward.4} parent=11 // pred_check_branch
        %120 = sbr.rel (%p118) target = $region16
      $region15: #{forward.4} parent=11 // pred_region
        _
      $region16: #{forward.4} parent=11 // pred_fallthru
        _
      // Predicated region
      $region17: #{forward.4} parent=11 // pred_check
        %p121 = pneg %p77
      $region18: #{forward.4} parent=11 // pred_check_branch
        %123 = sbr.rel (%p121) target = $region20
      $region19: #{forward.4} parent=11 // pred_region
        _
      $region20: #{forward.4} parent=11 // pred_fallthru
        _
    $region12: #{forward.4} parent=5 // pred_fallthru
      _
    %p124 = scmp.lt.s32.totalorder %s9, 2
    // Predicated region
    $region21: #{forward.4} parent=5 // pred_check
      %p125 = pneg %p124
    $region22: #{forward.4} parent=5 // pred_check_branch
      %127 = sbr.rel (%p125) target = $region24
    $region23: #{forward.4} parent=5 // pred_region
      // Predicated region
      $region25: #{forward.4} parent=23 // pred_check
        %p128 = pneg %p29
      $region26: #{forward.4} parent=23 // pred_check_branch
        %130 = sbr.rel (%p128) target = $region28
      $region27: #{forward.4} parent=23 // pred_region
        %s131 = smul.u32 3, %s9
        %p132 = scmp.lt.s32.totalorder %s131, 5
        %s133 = scalar_select %p132, %s131, 5
        %s134 = smul.addr %s133, 6
        %s135 = smul.addr %s134, 4
        %s136 = scalar_lea.vmem %s0, %s135
        %s137 = smul.u32 3, %s9
      $region28: #{forward.4} parent=23 // pred_fallthru
        _
    $region24: #{forward.4} parent=5 // pred_fallthru
      _
    %p138 = scmp.le.s32.totalorder 1, %s9
    %p139 = scmp.lt.s32.totalorder %s9, 3
    %p140 = pnand %p138, %p139
    %p141 = pneg %p140
    // Predicated region
    $region29: #{forward.4} parent=5 // pred_check
      _
    $region30: #{forward.4} parent=5 // pred_check_branch
      %143 = sbr.rel (%p140) target = $region32
    $region31: #{forward.4} parent=5 // pred_region
      %s144 = ssub.s32 %s9, 1
      %s145 = smul.u32 3, %s14
      %p146 = scmp.lt.s32.totalorder %s145, 5
      %s147 = scalar_select %p146, %s145, 5
      %s148 = smul.addr %s147, 6
      %s149 = smul.addr %s148, 4
      %s150 = scalar_lea.vmem %s0, %s149
      %p151 = pneg %p35
      %p152 = pneg %p32
      %p153 = pneg %p56
      %p154 = pneg %p53
      %p155 = pneg %p77
      %p156 = pneg %p74
      %p157 = pneg %p103
      %p158 = pneg %p100
      %s159 = smul.u32 3, %s14
      %p160 = scmp.lt.s32.totalorder %s159, 5
      %s161 = scalar_select %p160, %s159, 5
      %s162 = smul.addr %s161, 4
      %s163 = smul.addr %s162, 4
      %s164 = scalar_lea.vmem %s3, %s163
      %s165 = smul.u32 3, %s14
      %p166 = scmp.lt.s32.totalorder %s165, 5
      %s167 = scalar_select %p166, %s165, 5
      %s168 = smul.addr %s167, 6
      %s169 = smul.addr %s168, 4
      %s170 = scalar_lea.vmem %s0, %s169
      %s171 = smul.u32 3, %s14
      %s172 = smul.u32 3, %s14
      %p173 = scmp.lt.s32.totalorder %s172, 5
      %s174 = scalar_select %p173, %s172, 5
      %s175 = smul.addr %s174, 4
      %s176 = smul.addr %s175, 4
      %s177 = scalar_lea.vmem %s3, %s176
      %s178 = smul.u32 3, %s14
      %v180 = vld [vmem:[%s170] sm:$0xff]
      %v181 = vld [vmem:[%s170 + $0x8] sm:$0xf]
      %v182 = vld [vmem:[%s170 + $0xc] sm:$0xff]
      %v183 = vld [vmem:[%s170 + $0x14] sm:$0xf]
      %v184 = vld [vmem:[%s170 + $0x18] sm:$0xff]
      %v185 = vld [vmem:[%s170 + $0x20] sm:$0xf]
      %v186 = vld [vmem:[%s170 + $0x24] sm:$0xff]
      %v187 = vld [vmem:[%s170 + $0x2c] sm:$0xf]
      %v188 = vld [vmem:[%s170 + $0x30] sm:$0xff]
      %v189 = vld [vmem:[%s170 + $0x38] sm:$0xf]
      %v190 = vld [vmem:[%s170 + $0x3c] sm:$0xff]
      %v191 = vld [vmem:[%s170 + $0x44] sm:$0xf]
      %v192 = vld [vmem:[%s1] sm:$0xff]
      %v193 = vld [vmem:[%s1 + $0x8] sm:$0xff]
      %v194 = vld [vmem:[%s1 + $0x10] sm:$0xff]
      %v195 = vld [vmem:[%s1 + $0x18] sm:$0xff]
      %v196 = vld [vmem:[%s1 + $0x20] sm:$0xff]
      %v197 = vld [vmem:[%s1 + $0x28] sm:$0xff]
      %v198 = vld [vmem:[%s1 + $0x30] sm:$0xff]
      %v199 = vld [vmem:[%s1 + $0x38] sm:$0xff]
      %v200 = vld [vmem:[%s1 + $0x40] sm:$0xff]
      %v201 = vld [vmem:[%s1 + $0x48] sm:$0xff]
      %v202 = vld [vmem:[%s1 + $0x50] sm:$0xff]
      %v203 = vld [vmem:[%s1 + $0x58] sm:$0xff]
      %v204 = vld [vmem:[%s1 + $0x60] sm:$0xff]
      %v205 = vld [vmem:[%s1 + $0x68] sm:$0xff]
      %v206 = vld [vmem:[%s1 + $0x70] sm:$0xff]
      %v207 = vld [vmem:[%s1 + $0x78] sm:$0xff]
      %v208 = vld [vmem:[%s1 + $0x80] sm:$0xff]
      %v209 = vld [vmem:[%s1 + $0x88] sm:$0xff]
      %v210 = vld [vmem:[%s1 + $0x90] sm:$0xff]
      %v211 = vld [vmem:[%s1 + $0x98] sm:$0xff]
      %v212 = vld [vmem:[%s1 + $0xa0] sm:$0xff]
      %v213 = vld [vmem:[%s1 + $0xa8] sm:$0xff]
      %v214 = vld [vmem:[%s1 + $0xb0] sm:$0xff]
      %v215 = vld [vmem:[%s1 + $0xb8] sm:$0xff]
      %v216 = vld [vmem:[%s1 + $0xc0] sm:$0xff]
      %v217 = vld [vmem:[%s1 + $0xc8] sm:$0xff]
      %v218 = vld [vmem:[%s1 + $0xd0] sm:$0xff]
      %v219 = vld [vmem:[%s1 + $0xd8] sm:$0xff]
      %v220 = vld [vmem:[%s1 + $0xe0] sm:$0xff]
      %v221 = vld [vmem:[%s1 + $0xe8] sm:$0xff]
      %v222 = vld [vmem:[%s1 + $0xf0] sm:$0xff]
      %v223 = vld [vmem:[%s1 + $0xf8] sm:$0xff]
      %v224 = vld [vmem:[%s1 + $0x100] sm:$0xff]
      %v225 = vld [vmem:[%s1 + $0x108] sm:$0xff]
      %v226 = vld [vmem:[%s1 + $0x110] sm:$0xff]
      %v227 = vld [vmem:[%s1 + $0x118] sm:$0xff]
      %v228 = vld [vmem:[%s1 + $0x120] sm:$0xff]
      %v229 = vld [vmem:[%s1 + $0x128] sm:$0xff]
      %v230 = vld [vmem:[%s1 + $0x130] sm:$0x11]
      %v231 = vld [vmem:[%s2] sm:$0x3]
      %v233 = vlaneseq
      %v234 = vshrl.u32 %v233, 7
      %v235 = vsub.s32 0, %v234
      %v236 = vrot.slane %v231, %v235
      %v237 = vlaneseq
      %v238 = vshrl.u32 %v237, 7
      %v239 = vsub.s32 1, %v238
      %v240 = vrot.slane %v231, %v239
      %v255 = vunpack.c.l.b16 %v180
      %v256 = vunpack.c.h.b16 %v180
      %v257 = vunpack.c.l.b16 %v181
      %v258 = vunpack.c.l.b16 %v182
      %v259 = vunpack.c.h.b16 %v182
      %v260 = vunpack.c.l.b16 %v183
      %v261 = vunpack.c.l.b16 %v184
      %v262 = vunpack.c.h.b16 %v184
      %v263 = vunpack.c.l.b16 %v185
      %v264 = vunpack.c.l.b16 %v186
      %v265 = vunpack.c.h.b16 %v186
      %v266 = vunpack.c.l.b16 %v187
      %v267 = vunpack.c.l.b16 %v188
      %v268 = vunpack.c.h.b16 %v188
      %v269 = vunpack.c.l.b16 %v189
      %v270 = vunpack.c.l.b16 %v190
      %v271 = vunpack.c.h.b16 %v190
      %v272 = vunpack.c.l.b16 %v191
      %v273 = vpack.c.b16 %v258, %v255
      %v274 = vpack.c.b16 %v259, %v256
      %v275 = vpack.c.b16 %v260, %v257
      %v276 = vpack.c.b16 %v264, %v261
      %v277 = vpack.c.b16 %v265, %v262
      %v278 = vpack.c.b16 %v266, %v263
      %v279 = vpack.c.b16 %v270, %v267
      %v280 = vpack.c.b16 %v271, %v268
      %v281 = vpack.c.b16 %v272, %v269
      %v327 = vunpack.c.l.b16 %v192
      %v328 = vunpack.c.h.b16 %v192
      %v329 = vunpack.c.l.b16 %v193
      %v330 = vunpack.c.h.b16 %v193
      %v331 = vunpack.c.l.b16 %v194
      %v332 = vunpack.c.h.b16 %v194
      %v333 = vunpack.c.l.b16 %v195
      %v334 = vunpack.c.h.b16 %v195
      %v335 = vunpack.c.l.b16 %v196
      %v336 = vunpack.c.h.b16 %v196
      %v337 = vunpack.c.l.b16 %v197
      %v338 = vunpack.c.h.b16 %v197
      %v339 = vunpack.c.l.b16 %v198
      %v340 = vunpack.c.h.b16 %v198
      %v341 = vunpack.c.l.b16 %v199
      %v342 = vunpack.c.h.b16 %v199
      %v343 = vunpack.c.l.b16 %v200
      %v344 = vunpack.c.h.b16 %v200
      %v345 = vunpack.c.l.b16 %v201
      %v346 = vunpack.c.h.b16 %v201
      %v347 = vunpack.c.l.b16 %v202
      %v348 = vunpack.c.h.b16 %v202
      %v349 = vunpack.c.l.b16 %v203
      %v350 = vunpack.c.h.b16 %v203
      %v351 = vunpack.c.l.b16 %v204
      %v352 = vunpack.c.h.b16 %v204
      %v353 = vunpack.c.l.b16 %v205
      %v354 = vunpack.c.h.b16 %v205
      %v355 = vunpack.c.l.b16 %v206
      %v356 = vunpack.c.h.b16 %v206
      %v357 = vunpack.c.l.b16 %v207
      %v358 = vunpack.c.h.b16 %v207
      %v359 = vunpack.c.l.b16 %v208
      %v360 = vunpack.c.h.b16 %v208
      %v361 = vunpack.c.l.b16 %v209
      %v362 = vunpack.c.h.b16 %v209
      %v363 = vunpack.c.l.b16 %v210
      %v364 = vunpack.c.h.b16 %v210
      %v365 = vunpack.c.l.b16 %v211
      %v366 = vunpack.c.h.b16 %v211
      %v367 = vunpack.c.l.b16 %v212
      %v368 = vunpack.c.h.b16 %v212
      %v369 = vunpack.c.l.b16 %v213
      %v370 = vunpack.c.h.b16 %v213
      %v371 = vunpack.c.l.b16 %v214
      %v372 = vunpack.c.h.b16 %v214
      %v373 = vunpack.c.l.b16 %v215
      %v374 = vunpack.c.h.b16 %v215
      %v375 = vunpack.c.l.b16 %v216
      %v376 = vunpack.c.h.b16 %v216
      %v377 = vunpack.c.l.b16 %v217
      %v378 = vunpack.c.h.b16 %v217
      %v379 = vunpack.c.l.b16 %v218
      %v380 = vunpack.c.h.b16 %v218
      %v381 = vunpack.c.l.b16 %v219
      %v382 = vunpack.c.h.b16 %v219
      %v383 = vunpack.c.l.b16 %v220
      %v384 = vunpack.c.h.b16 %v220
      %v385 = vunpack.c.l.b16 %v221
      %v386 = vunpack.c.h.b16 %v221
      %v387 = vunpack.c.l.b16 %v222
      %v388 = vunpack.c.h.b16 %v222
      %v389 = vunpack.c.l.b16 %v223
      %v390 = vunpack.c.h.b16 %v223
      %v391 = vunpack.c.l.b16 %v224
      %v392 = vunpack.c.h.b16 %v224
      %v393 = vunpack.c.l.b16 %v225
      %v394 = vunpack.c.h.b16 %v225
      %v395 = vunpack.c.l.b16 %v226
      %v396 = vunpack.c.h.b16 %v226
      %v397 = vunpack.c.l.b16 %v227
      %v398 = vunpack.c.h.b16 %v227
      %v399 = vunpack.c.l.b16 %v228
      %v400 = vunpack.c.h.b16 %v228
      %v401 = vunpack.c.l.b16 %v229
      %v402 = vunpack.c.h.b16 %v229
      %v403 = vunpack.c.l.b16 %v230
      %v404 = vunpack.c.h.b16 %v230
      %v405 = vpack.c.b16 %v329, %v327
      %v406 = vpack.c.b16 %v330, %v328
      %v407 = vpack.c.b16 %v333, %v331
      %v408 = vpack.c.b16 %v334, %v332
      %v409 = vpack.c.b16 %v337, %v335
      %v410 = vpack.c.b16 %v338, %v336
      %v411 = vpack.c.b16 %v341, %v339
      %v412 = vpack.c.b16 %v342, %v340
      %v413 = vpack.c.b16 %v345, %v343
      %v414 = vpack.c.b16 %v346, %v344
      %v415 = vpack.c.b16 %v349, %v347
      %v416 = vpack.c.b16 %v350, %v348
      %v417 = vpack.c.b16 %v353, %v351
      %v418 = vpack.c.b16 %v354, %v352
      %v419 = vpack.c.b16 %v357, %v355
      %v420 = vpack.c.b16 %v358, %v356
      %v421 = vpack.c.b16 %v361, %v359
      %v422 = vpack.c.b16 %v362, %v360
      %v423 = vpack.c.b16 %v365, %v363
      %v424 = vpack.c.b16 %v366, %v364
      %v425 = vpack.c.b16 %v369, %v367
      %v426 = vpack.c.b16 %v370, %v368
      %v427 = vpack.c.b16 %v373, %v371
      %v428 = vpack.c.b16 %v374, %v372
      %v429 = vpack.c.b16 %v377, %v375
      %v430 = vpack.c.b16 %v378, %v376
      %v431 = vpack.c.b16 %v381, %v379
      %v432 = vpack.c.b16 %v382, %v380
      %v433 = vpack.c.b16 %v385, %v383
      %v434 = vpack.c.b16 %v386, %v384
      %v435 = vpack.c.b16 %v389, %v387
      %v436 = vpack.c.b16 %v390, %v388
      %v437 = vpack.c.b16 %v393, %v391
      %v438 = vpack.c.b16 %v394, %v392
      %v439 = vpack.c.b16 %v397, %v395
      %v440 = vpack.c.b16 %v398, %v396
      %v441 = vpack.c.b16 %v401, %v399
      %v442 = vpack.c.b16 %v402, %v400
      %v443 = vpack.c.b16 %v403, %v403
      %v444 = vpack.c.b16 %v404, %v404
      %vm483 = vcmask 408576
      %v485 = vsel %vm483, %v275, 0
      %v488 = vsel %vm483, %v278, 0
      %v491 = vsel %vm483, %v281, 0
      %vm493 = vcmask 1040384
      %v495 = vsel %vm493, %v443, 0
      %v498 = vsel %vm493, %v444, 0
      %500 = vmatprep.subr.bf16.mxu0 %v406
      %501 = vmatpush1.bf16.msra.mxu0 %v405
      %502 = vmatprep.subr.bf16.mxu0 %v408
      %503 = vmatpush1.bf16.msra.mxu0 %v407
      %504 = vmatprep.subr.bf16.mxu0 %v410
      %505 = vmatpush1.bf16.msra.mxu0 %v409
      %506 = vmatprep.subr.bf16.mxu0 %v412
      %507 = vmatpush1.bf16.msra.mxu0 %v411
      %508 = vmatprep.subr.bf16.mxu0 %v414
      %509 = vmatpush1.bf16.msra.mxu0 %v413
      %510 = vmatprep.subr.bf16.mxu0 %v416
      %511 = vmatpush1.bf16.msra.mxu0 %v415
      %512 = vmatprep.subr.bf16.mxu0 %v418
      %513 = vmatpush1.bf16.msra.mxu0 %v417
      %514 = vmatprep.subr.bf16.mxu0 %v420
      %515 = vmatpush1.bf16.msra.mxu0 %v419
      %516 = vmatprep.subr.bf16.mxu0 %v422
      %517 = vmatpush1.bf16.msra.mxu0 %v421
      %518 = vmatprep.subr.bf16.mxu0 %v424
      %519 = vmatpush1.bf16.msra.mxu0 %v423
      %520 = vmatprep.subr.bf16.mxu0 %v426
      %521 = vmatpush1.bf16.msra.mxu0 %v425
      %522 = vmatprep.subr.bf16.mxu0 %v428
      %523 = vmatpush1.bf16.msra.mxu0 %v427
      %524 = vmatprep.subr.bf16.mxu0 %v430
      %525 = vmatpush1.bf16.msra.mxu0 %v429
      %526 = vmatprep.subr.bf16.mxu0 %v432
      %527 = vmatpush1.bf16.msra.mxu0 %v431
      %528 = vmatprep.subr.bf16.mxu0 %v434
      %529 = vmatpush1.bf16.msra.mxu0 %v433
      %530 = vmatprep.subr.bf16.mxu0 %v436
      %531 = vmatpush1.bf16.msra.mxu0 %v435
      %532 = vmatprep.mubr.bf16.mxu0 %v274
      %533 = vmatmul.mubr.bf16.gmra.mrb[0].mxu0 %v273
      %v534 = vpop.f32.mrb[0].mxu0
      %v535 = vadd.f32 %v236, %v534
      %v536 = vpop.f32.mrb[0].mxu0
      %v537 = vadd.f32 %v240, %v536
      %v538 = vpop.f32.mrb[0].mxu0
      %v539 = vadd.f32 %v236, %v538
      %v540 = vpop.f32.mrb[0].mxu0
      %v541 = vadd.f32 %v240, %v540
      %542 = vmatprep.mubr.bf16.mxu0 %v277
      %543 = vmatmul.mubr.bf16.gmra.mrb[0].mxu0 %v276
      %v544 = vpop.f32.mrb[0].mxu0
      %v545 = vadd.f32 %v236, %v544
      %v546 = vpop.f32.mrb[0].mxu0
      %v547 = vadd.f32 %v240, %v546
      %v548 = vpop.f32.mrb[0].mxu0
      %v549 = vadd.f32 %v236, %v548
      %v550 = vpop.f32.mrb[0].mxu0
      %v551 = vadd.f32 %v240, %v550
      %552 = vmatprep.mubr.bf16.mxu0 %v280
      %553 = vmatmul.mubr.bf16.gmra.mrb[0].mxu0 %v279
      %v554 = vpop.f32.mrb[0].mxu0
      %v555 = vadd.f32 %v236, %v554
      %v556 = vpop.f32.mrb[0].mxu0
      %v557 = vadd.f32 %v240, %v556
      %v558 = vpop.f32.mrb[0].mxu0
      %v559 = vadd.f32 %v236, %v558
      %v560 = vpop.f32.mrb[0].mxu0
      %v561 = vadd.f32 %v240, %v560
      %562 = vdwg.mxu0
      %563 = vmatprep.subr.bf16.mxu0 %v438
      %564 = vmatpush1.bf16.msra.mxu0 %v437
      %565 = vmatprep.subr.bf16.mxu0 %v440
      %566 = vmatpush1.bf16.msra.mxu0 %v439
      %567 = vmatprep.subr.bf16.mxu0 %v442
      %568 = vmatpush1.bf16.msra.mxu0 %v441
      %569 = vmatprep.subr.bf16.mxu0 %v498
      %570 = vmatpush1.bf16.msra.mxu0 %v495
      %571 = vmatprep.subr.bf16.mxu0 0
      %572 = vmatpush1.bf16.msra.mxu0 0
      %573 = vmatprep.subr.bf16.mxu0 0
      %574 = vmatpush1.bf16.msra.mxu0 0
      %575 = vmatprep.subr.bf16.mxu0 0
      %576 = vmatpush1.bf16.msra.mxu0 0
      %577 = vmatprep.subr.bf16.mxu0 0
      %578 = vmatpush1.bf16.msra.mxu0 0
      %579 = vmatprep.subr.bf16.mxu0 0
      %580 = vmatpush1.bf16.msra.mxu0 0
      %581 = vmatprep.subr.bf16.mxu0 0
      %582 = vmatpush1.bf16.msra.mxu0 0
      %583 = vmatprep.subr.bf16.mxu0 0
      %584 = vmatpush1.bf16.msra.mxu0 0
      %585 = vmatprep.subr.bf16.mxu0 0
      %586 = vmatpush1.bf16.msra.mxu0 0
      %587 = vmatprep.subr.bf16.mxu0 0
      %588 = vmatpush1.bf16.msra.mxu0 0
      %589 = vmatprep.subr.bf16.mxu0 0
      %590 = vmatpush1.bf16.msra.mxu0 0
      %591 = vmatprep.subr.bf16.mxu0 0
      %592 = vmatpush1.bf16.msra.mxu0 0
      %593 = vmatprep.subr.bf16.mxu0 0
      %594 = vmatpush1.bf16.msra.mxu0 0
      %595 = vmatprep.mubr.bf16.mxu0 0
      %596 = vmatmul.mubr.bf16.gmra.mrb[0].mxu0 %v485
      %v597 = vpop.f32.mrb[0].mxu0
      %v598 = vadd.f32 %v535, %v597
      %v599 = vpop.f32.mrb[0].mxu0
      %v600 = vadd.f32 %v537, %v599
      %v601 = vpop.f32.mrb[0].mxu0
      %v602 = vadd.f32 %v539, %v601
      %v603 = vpop.f32.mrb[0].mxu0
      %v604 = vadd.f32 %v541, %v603
      %605 = vmatprep.mubr.bf16.mxu0 0
      %606 = vmatmul.mubr.bf16.gmra.mrb[0].mxu0 %v488
      %v607 = vpop.f32.mrb[0].mxu0
      %v608 = vadd.f32 %v545, %v607
      %v609 = vpop.f32.mrb[0].mxu0
      %v610 = vadd.f32 %v547, %v609
      %v611 = vpop.f32.mrb[0].mxu0
      %v612 = vadd.f32 %v549, %v611
      %v613 = vpop.f32.mrb[0].mxu0
      %v614 = vadd.f32 %v551, %v613
      %615 = vmatprep.mubr.bf16.mxu0 0
      %616 = vmatmul.mubr.bf16.gmra.mrb[0].mxu0 %v491
      %v617 = vpop.f32.mrb[0].mxu0
      %v618 = vadd.f32 %v555, %v617
      %v619 = vpop.f32.mrb[0].mxu0
      %v620 = vadd.f32 %v557, %v619
      %v621 = vpop.f32.mrb[0].mxu0
      %v622 = vadd.f32 %v559, %v621
      %v623 = vpop.f32.mrb[0].mxu0
      %v624 = vadd.f32 %v561, %v623
      %625 = vdwg.mxu0
      %v626 = vmax.f32 %v598, 0.0
      %v627 = vmax.f32 %v600, 0.0
      %v628 = vmax.f32 %v602, 0.0
      %v629 = vmax.f32 %v604, 0.0
      %v630 = vmax.f32 %v608, 0.0
      %v631 = vmax.f32 %v610, 0.0
      %v632 = vmax.f32 %v612, 0.0
      %v633 = vmax.f32 %v614, 0.0
      %v634 = vmax.f32 %v618, 0.0
      %v635 = vmax.f32 %v620, 0.0
      %v636 = vmax.f32 %v622, 0.0
      %v637 = vmax.f32 %v624, 0.0
      %v638 = vpack.c.bf16 %v628, %v626
      %v639 = vpack.c.bf16 %v629, %v627
      %v640 = vpack.c.bf16 %v632, %v630
      %v641 = vpack.c.bf16 %v633, %v631
      %v642 = vpack.c.bf16 %v636, %v634
      %v643 = vpack.c.bf16 %v637, %v635
      %v650 = vunpack.c.l.b16 %v638
      %v651 = vunpack.c.l.b16 %v639
      %v652 = vunpack.c.h.b16 %v638
      %v653 = vunpack.c.h.b16 %v639
      %v654 = vunpack.c.l.b16 %v640
      %v655 = vunpack.c.l.b16 %v641
      %v656 = vunpack.c.h.b16 %v640
      %v657 = vunpack.c.h.b16 %v641
      %v658 = vunpack.c.l.b16 %v642
      %v659 = vunpack.c.l.b16 %v643
      %v660 = vunpack.c.h.b16 %v642
      %v661 = vunpack.c.h.b16 %v643
      %v662 = vpack.c.b16 %v651, %v650
      %v663 = vpack.c.b16 %v653, %v652
      %v664 = vpack.c.b16 %v655, %v654
      %v665 = vpack.c.b16 %v657, %v656
      %v666 = vpack.c.b16 %v659, %v658
      %v667 = vpack.c.b16 %v661, %v660
      %674 = vst [vmem:[%s177] sm:$0xff] %v662
      %675 = vst [vmem:[%s177 + $0x8] sm:$0xff] %v663
      %676 = vst [vmem:[%s177 + $0x10] sm:$0xff] %v664
      %677 = vst [vmem:[%s177 + $0x18] sm:$0xff] %v665
      %678 = vst [vmem:[%s177 + $0x20] sm:$0xff] %v666
      %679 = vst [vmem:[%s177 + $0x28] sm:$0xff] %v667
      %s680 = smul.u32 3, %s14
      %p681 = scmp.lt.s32.totalorder %s680, 5
      %s682 = scalar_select %p681, %s680, 5
      %s683 = smul.addr %s682, 4
      %s684 = smul.addr %s683, 4
      %s685 = scalar_lea.vmem %s3, %s684
      // Predicated region
      $region33: #{forward.4} parent=31 // pred_check
        %p686 = pneg %p100
      $region34: #{forward.4} parent=31 // pred_check_branch
        %688 = sbr.rel (%p686) target = $region36
      $region35: #{forward.4} parent=31 // pred_region
        %s689 = smul.u32 3, %s14
      $region36: #{forward.4} parent=31 // pred_fallthru
        _
    $region32: #{forward.4} parent=5 // pred_fallthru
      _
    %p690 = scmp.le.s32.totalorder 2, %s9
    // Predicated region
    $region37: #{forward.4} parent=5 // pred_check
      %p691 = pneg %p690
    $region38: #{forward.4} parent=5 // pred_check_branch
      %693 = sbr.rel (%p691) target = $region40
    $region39: #{forward.4} parent=5 // pred_region
      %s694 = ssub.s32 %s9, 2
      // Predicated region
      $region41: #{forward.4} parent=39 // pred_check
        %p695 = pneg %p106
      $region42: #{forward.4} parent=39 // pred_check_branch
        %697 = sbr.rel (%p695) target = $region44
      $region43: #{forward.4} parent=39 // pred_region
        %s698 = smul.u32 3, %s15
        %p699 = scmp.lt.s32.totalorder %s698, 5
        %s700 = scalar_select %p699, %s698, 5
        %s701 = smul.addr %s700, 4
        %s702 = smul.addr %s701, 4
        %s703 = scalar_lea.vmem %s3, %s702
      $region44: #{forward.4} parent=39 // pred_fallthru
        _
    $region40: #{forward.4} parent=5 // pred_fallthru
      _
  $region6: #{forward.4} parent=0 // loop_footer
    %s13 = sadd.s32 1, %s9
  $region7: #{forward.4} parent=0 // loop_footer_branch
    %8 = sbr.rel target = $region3
  $region8: #{forward.4} parent=0 // loop_exit
    _

// kernel: forward.5
$region0: #{forward.5}
  #allocation0 [shape = 'u32[]', space=smem, size = 0x4, offset = 0x4, fixed_abs, tag = 'smem constant byte address 0x4 - core index']
  #allocation1 [shape = 'u32[144,128]{1,0:T(1,128)}', space=vmem, size = 0x12000, scoped, tag = 'internal scratch']
  %s0 = inlined_call_operand.vmem [shape: bf16[6,8,864], index: 0, kind: input, shape index: {}]
  %s1 = inlined_call_operand.vmem [shape: bf16[864,256], index: 1, kind: input, shape index: {}]
  %s2 = inlined_call_operand.vmem [shape: f32[1,256], index: 2, kind: input, shape index: {}]
  %s3 = inlined_call_operand.vmem [shape: bf16[6,8,256], index: 3, kind: output, shape index: {}]
  %s4 = sld [smem:[#allocation0]]
  $region45: #{forward.5} parent=0
    _
  %s6 = ssub.s32 1, %s4
  %s7 = scalar_select 0, %s6, %s4
  loop: start=0, step=1, limit=4
  $region2: #{forward.5} parent=0 // loop_pre_header
    _
  $region3: #{forward.5} parent=0 // loop_header
    %s9 = sphi 0, %s13
    %p10 = scmp.ge.s32.totalorder %s9, 4
    %s19 = sphi 0, %s21
    %s22 = sphi 0, %s19
    %s23 = sphi 0, %s22
    %s39 = sphi 0, %s23
    %s43 = sphi 0, %s43
    %s45 = sphi 0, %s43
    %s46 = sphi 0, %s45
    %s60 = sphi 0, %s46
    %s64 = sphi 0, %s64
    %s66 = sphi 0, %s64
    %s67 = sphi 0, %s66
    %s81 = sphi 0, %s67
    %s87 = sphi 0, %s89
    %s90 = sphi 0, %s87
    %s91 = sphi 0, %s90
    %s107 = sphi 0, %s91
  $region4: #{forward.5} parent=0 // loop_header_branch
    %12 = sbr.rel (%p10) target = $region8
  $region5: #{forward.5} parent=0 // loop_body
    %s14 = ssub.s32 %s9, 1
    %s15 = ssub.s32 %s9, 2
    %s16 = sadd.s32 %s9, 1
    %s17 = ssub.s32 %s9, %s16
    %p18 = scmp.eq.s32.totalorder %s17, 0
    %s20 = sadd.s32 %s19, 1
    %s21 = scalar_select %p18, %s19, %s20
    %p24 = pneg %p18
    %p25 = scmp.eq.s32.totalorder %s9, 1
    %p26 = por %p24, %p25
    %p27 = scmp.ne.s32.totalorder %s19, %s22
    %p28 = scmp.eq.s32.totalorder %s9, 0
    %p29 = por %p27, %p28
    %p30 = scmp.ne.s32.totalorder %s19, %s22
    %p31 = scmp.eq.s32.totalorder %s14, 1
    %p32 = por %p30, %p31
    %p33 = scmp.ne.s32.totalorder %s22, %s23
    %p34 = scmp.eq.s32.totalorder %s14, 0
    %p35 = por %p33, %p34
    %p36 = scmp.ne.s32.totalorder %s22, %s23
    %p37 = scmp.eq.s32.totalorder %s15, 1
    %p38 = por %p36, %p37
    %p40 = scmp.ne.s32.totalorder %s23, %s39
    %p41 = scmp.eq.s32.totalorder %s15, 0
    %p42 = por %p40, %p41
    %s44 = sadd.s32 %s43, 1
    %p47 = scmp.eq.s32.totalorder %s9, 1
    %p48 = scmp.ne.s32.totalorder %s43, %s45
    %p49 = scmp.eq.s32.totalorder %s9, 0
    %p50 = por %p48, %p49
    %p51 = scmp.ne.s32.totalorder %s43, %s45
    %p52 = scmp.eq.s32.totalorder %s14, 1
    %p53 = por %p51, %p52
    %p54 = scmp.ne.s32.totalorder %s45, %s46
    %p55 = scmp.eq.s32.totalorder %s14, 0
    %p56 = por %p54, %p55
    %p57 = scmp.ne.s32.totalorder %s45, %s46
    %p58 = scmp.eq.s32.totalorder %s15, 1
    %p59 = por %p57, %p58
    %p61 = scmp.ne.s32.totalorder %s46, %s60
    %p62 = scmp.eq.s32.totalorder %s15, 0
    %p63 = por %p61, %p62
    %s65 = sadd.s32 %s64, 1
    %p68 = scmp.eq.s32.totalorder %s9, 1
    %p69 = scmp.ne.s32.totalorder %s64, %s66
    %p70 = scmp.eq.s32.totalorder %s9, 0
    %p71 = por %p69, %p70
    %p72 = scmp.ne.s32.totalorder %s64, %s66
    %p73 = scmp.eq.s32.totalorder %s14, 1
    %p74 = por %p72, %p73
    %p75 = scmp.ne.s32.totalorder %s66, %s67
    %p76 = scmp.eq.s32.totalorder %s14, 0
    %p77 = por %p75, %p76
    %p78 = scmp.ne.s32.totalorder %s66, %s67
    %p79 = scmp.eq.s32.totalorder %s15, 1
    %p80 = por %p78, %p79
    %p82 = scmp.ne.s32.totalorder %s67, %s81
    %p83 = scmp.eq.s32.totalorder %s15, 0
    %p84 = por %p82, %p83
    %s85 = ssub.s32 %s9, %s16
    %p86 = scmp.eq.s32.totalorder %s85, 0
    %s88 = sadd.s32 %s87, 1
    %s89 = scalar_select %p86, %s87, %s88
    %p92 = pneg %p86
    %p93 = scmp.eq.s32.totalorder %s9, 1
    %p94 = por %p92, %p93
    %p95 = scmp.ne.s32.totalorder %s87, %s90
    %p96 = scmp.eq.s32.totalorder %s9, 0
    %p97 = por %p95, %p96
    %p98 = scmp.ne.s32.totalorder %s87, %s90
    %p99 = scmp.eq.s32.totalorder %s14, 1
    %p100 = por %p98, %p99
    %p101 = scmp.ne.s32.totalorder %s90, %s91
    %p102 = scmp.eq.s32.totalorder %s14, 0
    %p103 = por %p101, %p102
    %p104 = scmp.ne.s32.totalorder %s90, %s91
    %p105 = scmp.eq.s32.totalorder %s15, 1
    %p106 = por %p104, %p105
    %p108 = scmp.ne.s32.totalorder %s91, %s107
    %p109 = scmp.eq.s32.totalorder %s15, 0
    %p110 = por %p108, %p109
    %p111 = scmp.le.s32.totalorder 1, %s9
    %p112 = scmp.lt.s32.totalorder %s9, 3
    %p113 = pnand %p111, %p112
    %p114 = pneg %p113
    // Predicated region
    $region9: #{forward.5} parent=5 // pred_check
      _
    $region10: #{forward.5} parent=5 // pred_check_branch
      %116 = sbr.rel (%p113) target = $region12
    $region11: #{forward.5} parent=5 // pred_region
      %s117 = ssub.s32 %s9, 1
      // Predicated region
      $region13: #{forward.5} parent=11 // pred_check
        %p118 = pneg %p56
      $region14: #{forward.5} parent=11 // pred_check_branch
        %120 = sbr.rel (%p118) target = $region16
      $region15: #{forward.5} parent=11 // pred_region
        _
      $region16: #{forward.5} parent=11 // pred_fallthru
        _
      // Predicated region
      $region17: #{forward.5} parent=11 // pred_check
        %p121 = pneg %p77
      $region18: #{forward.5} parent=11 // pred_check_branch
        %123 = sbr.rel (%p121) target = $region20
      $region19: #{forward.5} parent=11 // pred_region
        _
      $region20: #{forward.5} parent=11 // pred_fallthru
        _
    $region12: #{forward.5} parent=5 // pred_fallthru
      _
    %p124 = scmp.lt.s32.totalorder %s9, 2
    // Predicated region
    $region21: #{forward.5} parent=5 // pred_check
      %p125 = pneg %p124
    $region22: #{forward.5} parent=5 // pred_check_branch
      %127 = sbr.rel (%p125) target = $region24
    $region23: #{forward.5} parent=5 // pred_region
      // Predicated region
      $region25: #{forward.5} parent=23 // pred_check
        %p128 = pneg %p29
      $region26: #{forward.5} parent=23 // pred_check_branch
        %130 = sbr.rel (%p128) target = $region28
      $region27: #{forward.5} parent=23 // pred_region
        %s131 = smul.u32 3, %s9
        %p132 = scmp.lt.s32.totalorder %s131, 5
        %s133 = scalar_select %p132, %s131, 5
        %s134 = smul.addr %s133, 7
        %s135 = smul.addr %s134, 4
        %s136 = scalar_lea.vmem %s0, %s135
        %s137 = smul.u32 3, %s9
      $region28: #{forward.5} parent=23 // pred_fallthru
        _
    $region24: #{forward.5} parent=5 // pred_fallthru
      _
    %p138 = scmp.le.s32.totalorder 1, %s9
    %p139 = scmp.lt.s32.totalorder %s9, 3
    %p140 = pnand %p138, %p139
    %p141 = pneg %p140
    // Predicated region
    $region29: #{forward.5} parent=5 // pred_check
      _
    $region30: #{forward.5} parent=5 // pred_check_branch
      %143 = sbr.rel (%p140) target = $region32
    $region31: #{forward.5} parent=5 // pred_region
      %s144 = ssub.s32 %s9, 1
      %s145 = smul.u32 3, %s14
      %p146 = scmp.lt.s32.totalorder %s145, 5
      %s147 = scalar_select %p146, %s145, 5
      %s148 = smul.addr %s147, 7
      %s149 = smul.addr %s148, 4
      %s150 = scalar_lea.vmem %s0, %s149
      %p151 = pneg %p35
      %p152 = pneg %p32
      %p153 = pneg %p56
      %p154 = pneg %p53
      %p155 = pneg %p77
      %p156 = pneg %p74
      %p157 = pneg %p103
      %p158 = pneg %p100
      %s159 = smul.u32 3, %s14
      %p160 = scmp.lt.s32.totalorder %s159, 5
      %s161 = scalar_select %p160, %s159, 5
      %s162 = smul.addr %s161, 2
      %s163 = smul.addr %s162, 4
      %s164 = scalar_lea.vmem %s3, %s163
      %s165 = smul.u32 3, %s14
      %p166 = scmp.lt.s32.totalorder %s165, 5
      %s167 = scalar_select %p166, %s165, 5
      %s168 = smul.addr %s167, 7
      %s169 = smul.addr %s168, 4
      %s170 = scalar_lea.vmem %s0, %s169
      %s171 = smul.u32 3, %s14
      %s172 = smul.u32 3, %s14
      %p173 = scmp.lt.s32.totalorder %s172, 5
      %s174 = scalar_select %p173, %s172, 5
      %s175 = smul.addr %s174, 2
      %s176 = smul.addr %s175, 4
      %s177 = scalar_lea.vmem %s3, %s176
      %s178 = smul.u32 3, %s14
      %v180 = vld [vmem:[%s170] sm:$0xff]
      %v181 = vld [vmem:[%s170 + $0x8] sm:$0xff]
      %v182 = vld [vmem:[%s170 + $0x10] sm:$0xff]
      %v183 = vld [vmem:[%s170 + $0x18] sm:$0xf]
      %v184 = vld [vmem:[%s170 + $0x1c] sm:$0xff]
      %v185 = vld [vmem:[%s170 + $0x24] sm:$0xff]
      %v186 = vld [vmem:[%s170 + $0x2c] sm:$0xff]
      %v187 = vld [vmem:[%s170 + $0x34] sm:$0xf]
      %v188 = vld [vmem:[%s170 + $0x38] sm:$0xff]
      %v189 = vld [vmem:[%s170 + $0x40] sm:$0xff]
      %v190 = vld [vmem:[%s170 + $0x48] sm:$0xff]
      %v191 = vld [vmem:[%s170 + $0x50] sm:$0xf]
      %v192 = vld [vmem:[%s1] sm:$0xff]
      %v193 = vld [vmem:[%s1 + $0x8] sm:$0xff]
      %v194 = vld [vmem:[%s1 + $0x10] sm:$0xff]
      %v195 = vld [vmem:[%s1 + $0x18] sm:$0xff]
      %v196 = vld [vmem:[%s1 + $0x20] sm:$0xff]
      %v197 = vld [vmem:[%s1 + $0x28] sm:$0xff]
      %v198 = vld [vmem:[%s1 + $0x30] sm:$0xff]
      %v199 = vld [vmem:[%s1 + $0x38] sm:$0xff]
      %v200 = vld [vmem:[%s1 + $0x40] sm:$0xff]
      %v201 = vld [vmem:[%s1 + $0x48] sm:$0xff]
      %v202 = vld [vmem:[%s1 + $0x50] sm:$0xff]
      %v203 = vld [vmem:[%s1 + $0x58] sm:$0xff]
      %v204 = vld [vmem:[%s1 + $0x60] sm:$0xff]
      %v205 = vld [vmem:[%s1 + $0x68] sm:$0xff]
      %v206 = vld [vmem:[%s1 + $0x70] sm:$0xff]
      %v207 = vld [vmem:[%s1 + $0x78] sm:$0xff]
      %v208 = vld [vmem:[%s1 + $0x80] sm:$0xff]
      %v209 = vld [vmem:[%s1 + $0x88] sm:$0xff]
      %v210 = vld [vmem:[%s1 + $0x90] sm:$0xff]
      %v211 = vld [vmem:[%s1 + $0x98] sm:$0xff]
      %v212 = vld [vmem:[%s1 + $0xa0] sm:$0xff]
      %v213 = vld [vmem:[%s1 + $0xa8] sm:$0xff]
      %v214 = vld [vmem:[%s1 + $0xb0] sm:$0xff]
      %v215 = vld [vmem:[%s1 + $0xb8] sm:$0xff]
      %v216 = vld [vmem:[%s1 + $0xc0] sm:$0xff]
      %v217 = vld [vmem:[%s1 + $0xc8] sm:$0xff]
      %v218 = vld [vmem:[%s1 + $0xd0] sm:$0xff]
      %v219 = vld [vmem:[%s1 + $0xd8] sm:$0xff]
      %v220 = vld [vmem:[%s1 + $0xe0] sm:$0xff]
      %v221 = vld [vmem:[%s1 + $0xe8] sm:$0xff]
      %v222 = vld [vmem:[%s1 + $0xf0] sm:$0xff]
      %v223 = vld [vmem:[%s1 + $0xf8] sm:$0xff]
      %v224 = vld [vmem:[%s1 + $0x100] sm:$0xff]
      %v225 = vld [vmem:[%s1 + $0x108] sm:$0xff]
      %v226 = vld [vmem:[%s1 + $0x110] sm:$0xff]
      %v227 = vld [vmem:[%s1 + $0x118] sm:$0xff]
      %v228 = vld [vmem:[%s1 + $0x120] sm:$0xff]
      %v229 = vld [vmem:[%s1 + $0x128] sm:$0xff]
      %v230 = vld [vmem:[%s1 + $0x130] sm:$0xff]
      %v231 = vld [vmem:[%s1 + $0x138] sm:$0xff]
      %v232 = vld [vmem:[%s1 + $0x140] sm:$0xff]
      %v233 = vld [vmem:[%s1 + $0x148] sm:$0xff]
      %v234 = vld [vmem:[%s1 + $0x150] sm:$0xff]
      %v235 = vld [vmem:[%s1 + $0x158] sm:$0xff]
      %v236 = vld [vmem:[%s1 + $0x160] sm:$0xff]
      %v237 = vld [vmem:[%s1 + $0x168] sm:$0xff]
      %v238 = vld [vmem:[%s1 + $0x170] sm:$0xff]
      %v239 = vld [vmem:[%s1 + $0x178] sm:$0xff]
      %v240 = vld [vmem:[%s1 + $0x180] sm:$0xff]
      %v241 = vld [vmem:[%s1 + $0x188] sm:$0xff]
      %v242 = vld [vmem:[%s1 + $0x190] sm:$0xff]
      %v243 = vld [vmem:[%s1 + $0x198] sm:$0xff]
      %v244 = vld [vmem:[%s1 + $0x1a0] sm:$0xff]
      %v245 = vld [vmem:[%s1 + $0x1a8] sm:$0xff]
      %v246 = vld [vmem:[%s1 + $0x1b0] sm:$0xff]
      %v247 = vld [vmem:[%s1 + $0x1b8] sm:$0xff]
      %v248 = vld [vmem:[%s1 + $0x1c0] sm:$0xff]
      %v249 = vld [vmem:[%s1 + $0x1c8] sm:$0xff]
      %v250 = vld [vmem:[%s1 + $0x1d0] sm:$0xff]
      %v251 = vld [vmem:[%s1 + $0x1d8] sm:$0xff]
      %v252 = vld [vmem:[%s1 + $0x1e0] sm:$0xff]
      %v253 = vld [vmem:[%s1 + $0x1e8] sm:$0xff]
      %v254 = vld [vmem:[%s1 + $0x1f0] sm:$0xff]
      %v255 = vld [vmem:[%s1 + $0x1f8] sm:$0xff]
      %v256 = vld [vmem:[%s1 + $0x200] sm:$0xff]
      %v257 = vld [vmem:[%s1 + $0x208] sm:$0xff]
      %v258 = vld [vmem:[%s1 + $0x210] sm:$0xff]
      %v259 = vld [vmem:[%s1 + $0x218] sm:$0xff]
      %v260 = vld [vmem:[%s1 + $0x220] sm:$0xff]
      %v261 = vld [vmem:[%s1 + $0x228] sm:$0xff]
      %v262 = vld [vmem:[%s1 + $0x230] sm:$0xff]
      %v263 = vld [vmem:[%s1 + $0x238] sm:$0xff]
      %v264 = vld [vmem:[%s1 + $0x240] sm:$0xff]
      %v265 = vld [vmem:[%s1 + $0x248] sm:$0xff]
      %v266 = vld [vmem:[%s1 + $0x250] sm:$0xff]
      %v267 = vld [vmem:[%s1 + $0x258] sm:$0xff]
      %v268 = vld [vmem:[%s1 + $0x260] sm:$0xff]
      %v269 = vld [vmem:[%s1 + $0x268] sm:$0xff]
      %v270 = vld [vmem:[%s1 + $0x270] sm:$0xff]
      %v271 = vld [vmem:[%s1 + $0x278] sm:$0xff]
      %v272 = vld [vmem:[%s1 + $0x280] sm:$0xff]
      %v273 = vld [vmem:[%s1 + $0x288] sm:$0xff]
      %v274 = vld [vmem:[%s1 + $0x290] sm:$0xff]
      %v275 = vld [vmem:[%s1 + $0x298] sm:$0xff]
      %v276 = vld [vmem:[%s1 + $0x2a0] sm:$0xff]
      %v277 = vld [vmem:[%s1 + $0x2a8] sm:$0xff]
      %v278 = vld [vmem:[%s1 + $0x2b0] sm:$0xff]
      %v279 = vld [vmem:[%s1 + $0x2b8] sm:$0xff]
      %v280 = vld [vmem:[%s1 + $0x2c0] sm:$0xff]
      %v281 = vld [vmem:[%s1 + $0x2c8] sm:$0xff]
      %v282 = vld [vmem:[%s1 + $0x2d0] sm:$0xff]
      %v283 = vld [vmem:[%s1 + $0x2d8] sm:$0xff]
      %v284 = vld [vmem:[%s1 + $0x2e0] sm:$0xff]
      %v285 = vld [vmem:[%s1 + $0x2e8] sm:$0xff]
      %v286 = vld [vmem:[%s1 + $0x2f0] sm:$0xff]
      %v287 = vld [vmem:[%s1 + $0x2f8] sm:$0xff]
      %v288 = vld [vmem:[%s1 + $0x300] sm:$0xff]
      %v289 = vld [vmem:[%s1 + $0x308] sm:$0xff]
      %v290 = vld [vmem:[%s1 + $0x310] sm:$0xff]
      %v291 = vld [vmem:[%s1 + $0x318] sm:$0xff]
      %v292 = vld [vmem:[%s1 + $0x320] sm:$0xff]
      %v293 = vld [vmem:[%s1 + $0x328] sm:$0xff]
      %v294 = vld [vmem:[%s1 + $0x330] sm:$0xff]
      %v295 = vld [vmem:[%s1 + $0x338] sm:$0xff]
      %v296 = vld [vmem:[%s1 + $0x340] sm:$0xff]
      %v297 = vld [vmem:[%s1 + $0x348] sm:$0xff]
      %v298 = vld [vmem:[%s1 + $0x350] sm:$0xff]
      %v299 = vld [vmem:[%s1 + $0x358] sm:$0xff]
      %v300 = vld [vmem:[%s2] sm:$0x3]
      %v302 = vlaneseq
      %v303 = vshrl.u32 %v302, 7
      %v304 = vsub.s32 0, %v303
      %v305 = vrot.slane %v300, %v304
      %v306 = vlaneseq
      %v307 = vshrl.u32 %v306, 7
      %v308 = vsub.s32 1, %v307
      %v309 = vrot.slane %v300, %v308
      %v324 = vunpack.c.l.b16 %v180
      %v325 = vunpack.c.h.b16 %v180
      %v326 = vunpack.c.l.b16 %v181
      %v327 = vunpack.c.h.b16 %v181
      %v328 = vunpack.c.l.b16 %v182
      %v329 = vunpack.c.h.b16 %v182
      %v330 = vunpack.c.l.b16 %v183
      %v331 = vunpack.c.l.b16 %v184
      %v332 = vunpack.c.h.b16 %v184
      %v333 = vunpack.c.l.b16 %v185
      %v334 = vunpack.c.h.b16 %v185
      %v335 = vunpack.c.l.b16 %v186
      %v336 = vunpack.c.h.b16 %v186
      %v337 = vunpack.c.l.b16 %v187
      %v338 = vunpack.c.l.b16 %v188
      %v339 = vunpack.c.h.b16 %v188
      %v340 = vunpack.c.l.b16 %v189
      %v341 = vunpack.c.h.b16 %v189
      %v342 = vunpack.c.l.b16 %v190
      %v343 = vunpack.c.h.b16 %v190
      %v344 = vunpack.c.l.b16 %v191
      %v345 = vpack.c.b16 %v331, %v324
      %v346 = vpack.c.b16 %v332, %v325
      %v347 = vpack.c.b16 %v333, %v326
      %v348 = vpack.c.b16 %v334, %v327
      %v349 = vpack.c.b16 %v335, %v328
      %v350 = vpack.c.b16 %v336, %v329
      %v351 = vpack.c.b16 %v337, %v330
      %v352 = vpack.c.b16 %v338, %v338
      %v353 = vpack.c.b16 %v339, %v339
      %v354 = vpack.c.b16 %v340, %v340
      %v355 = vpack.c.b16 %v341, %v341
      %v356 = vpack.c.b16 %v342, %v342
      %v357 = vpack.c.b16 %v343, %v343
      %v358 = vpack.c.b16 %v344, %v344
      %v479 = vunpack.c.l.b16 %v192
      %v480 = vunpack.c.h.b16 %v192
      %v481 = vunpack.c.l.b16 %v193
      %v482 = vunpack.c.h.b16 %v193
      %v483 = vunpack.c.l.b16 %v194
      %v484 = vunpack.c.h.b16 %v194
      %v485 = vunpack.c.l.b16 %v195
      %v486 = vunpack.c.h.b16 %v195
      %v487 = vunpack.c.l.b16 %v196
      %v488 = vunpack.c.h.b16 %v196
      %v489 = vunpack.c.l.b16 %v197
      %v490 = vunpack.c.h.b16 %v197
      %v491 = vunpack.c.l.b16 %v198
      %v492 = vunpack.c.h.b16 %v198
      %v493 = vunpack.c.l.b16 %v199
      %v494 = vunpack.c.h.b16 %v199
      %v495 = vunpack.c.l.b16 %v200
      %v496 = vunpack.c.h.b16 %v200
      %v497 = vunpack.c.l.b16 %v201
      %v498 = vunpack.c.h.b16 %v201
      %v499 = vunpack.c.l.b16 %v202
      %v500 = vunpack.c.h.b16 %v202
      %v501 = vunpack.c.l.b16 %v203
      %v502 = vunpack.c.h.b16 %v203
      %v503 = vunpack.c.l.b16 %v204
      %v504 = vunpack.c.h.b16 %v204
      %v505 = vunpack.c.l.b16 %v205
      %v506 = vunpack.c.h.b16 %v205
      %v507 = vunpack.c.l.b16 %v206
      %v508 = vunpack.c.h.b16 %v206
      %v509 = vunpack.c.l.b16 %v207
      %v510 = vunpack.c.h.b16 %v207
      %v511 = vunpack.c.l.b16 %v208
      %v512 = vunpack.c.h.b16 %v208
      %v513 = vunpack.c.l.b16 %v209
      %v514 = vunpack.c.h.b16 %v209
      %v515 = vunpack.c.l.b16 %v210
      %v516 = vunpack.c.h.b16 %v210
      %v517 = vunpack.c.l.b16 %v211
      %v518 = vunpack.c.h.b16 %v211
      %v519 = vunpack.c.l.b16 %v212
      %v520 = vunpack.c.h.b16 %v212
      %v521 = vunpack.c.l.b16 %v213
      %v522 = vunpack.c.h.b16 %v213
      %v523 = vunpack.c.l.b16 %v214
      %v524 = vunpack.c.h.b16 %v214
      %v525 = vunpack.c.l.b16 %v215
      %v526 = vunpack.c.h.b16 %v215
      %v527 = vunpack.c.l.b16 %v216
      %v528 = vunpack.c.h.b16 %v216
      %v529 = vunpack.c.l.b16 %v217
      %v530 = vunpack.c.h.b16 %v217
      %v531 = vunpack.c.l.b16 %v218
      %v532 = vunpack.c.h.b16 %v218
      %v533 = vunpack.c.l.b16 %v219
      %v534 = vunpack.c.h.b16 %v219
      %v535 = vunpack.c.l.b16 %v220
      %v536 = vunpack.c.h.b16 %v220
      %v537 = vunpack.c.l.b16 %v221
      %v538 = vunpack.c.h.b16 %v221
      %v539 = vunpack.c.l.b16 %v222
      %v540 = vunpack.c.h.b16 %v222
      %v541 = vunpack.c.l.b16 %v223
      %v542 = vunpack.c.h.b16 %v223
      %v543 = vunpack.c.l.b16 %v224
      %v544 = vunpack.c.h.b16 %v224
      %v545 = vunpack.c.l.b16 %v225
      %v546 = vunpack.c.h.b16 %v225
      %v547 = vunpack.c.l.b16 %v226
      %v548 = vunpack.c.h.b16 %v226
      %v549 = vunpack.c.l.b16 %v227
      %v550 = vunpack.c.h.b16 %v227
      %v551 = vunpack.c.l.b16 %v228
      %v552 = vunpack.c.h.b16 %v228
      %v553 = vunpack.c.l.b16 %v229
      %v554 = vunpack.c.h.b16 %v229
      %v555 = vunpack.c.l.b16 %v230
      %v556 = vunpack.c.h.b16 %v230
      %v557 = vunpack.c.l.b16 %v231
      %v558 = vunpack.c.h.b16 %v231
      %v559 = vunpack.c.l.b16 %v232
      %v560 = vunpack.c.h.b16 %v232
      %v561 = vunpack.c.l.b16 %v233
      %v562 = vunpack.c.h.b16 %v233
      %v563 = vunpack.c.l.b16 %v234
      %v564 = vunpack.c.h.b16 %v234
      %v565 = vunpack.c.l.b16 %v235
      %v566 = vunpack.c.h.b16 %v235
      %v567 = vunpack.c.l.b16 %v236
      %v568 = vunpack.c.h.b16 %v236
      %v569 = vunpack.c.l.b16 %v237
      %v570 = vunpack.c.h.b16 %v237
      %v571 = vunpack.c.l.b16 %v238
      %v572 = vunpack.c.h.b16 %v238
      %v573 = vunpack.c.l.b16 %v239
      %v574 = vunpack.c.h.b16 %v239
      %v575 = vunpack.c.l.b16 %v240
      %v576 = vunpack.c.h.b16 %v240
      %v577 = vunpack.c.l.b16 %v241
      %v578 = vunpack.c.h.b16 %v241
      %v579 = vunpack.c.l.b16 %v242
      %v580 = vunpack.c.h.b16 %v242
      %v581 = vunpack.c.l.b16 %v243
      %v582 = vunpack.c.h.b16 %v243
      %v583 = vunpack.c.l.b16 %v244
      %v584 = vunpack.c.h.b16 %v244
      %v585 = vunpack.c.l.b16 %v245
      %v586 = vunpack.c.h.b16 %v245
      %v587 = vunpack.c.l.b16 %v246
      %v588 = vunpack.c.h.b16 %v246
      %v589 = vunpack.c.l.b16 %v247
      %v590 = vunpack.c.h.b16 %v247
      %v591 = vunpack.c.l.b16 %v248
      %v592 = vunpack.c.h.b16 %v248
      %v593 = vunpack.c.l.b16 %v249
      %v594 = vunpack.c.h.b16 %v249
      %v595 = vunpack.c.l.b16 %v250
      %v596 = vunpack.c.h.b16 %v250
      %v597 = vunpack.c.l.b16 %v251
      %v598 = vunpack.c.h.b16 %v251
      %v599 = vunpack.c.l.b16 %v252
      %v600 = vunpack.c.h.b16 %v252
      %v601 = vunpack.c.l.b16 %v253
      %v602 = vunpack.c.h.b16 %v253
      %v603 = vunpack.c.l.b16 %v254
      %v604 = vunpack.c.h.b16 %v254
      %v605 = vunpack.c.l.b16 %v255
      %v606 = vunpack.c.h.b16 %v255
      %v607 = vunpack.c.l.b16 %v256
      %v608 = vunpack.c.h.b16 %v256
      %v609 = vunpack.c.l.b16 %v257
      %v610 = vunpack.c.h.b16 %v257
      %v611 = vunpack.c.l.b16 %v258
      %v612 = vunpack.c.h.b16 %v258
      %v613 = vunpack.c.l.b16 %v259
      %v614 = vunpack.c.h.b16 %v259
      %v615 = vunpack.c.l.b16 %v260
      %v616 = vunpack.c.h.b16 %v260
      %v617 = vunpack.c.l.b16 %v261
      %v618 = vunpack.c.h.b16 %v261
      %v619 = vunpack.c.l.b16 %v262
      %v620 = vunpack.c.h.b16 %v262
      %v621 = vunpack.c.l.b16 %v263
      %v622 = vunpack.c.h.b16 %v263
      %v623 = vunpack.c.l.b16 %v264
      %v624 = vunpack.c.h.b16 %v264
      %v625 = vunpack.c.l.b16 %v265
      %v626 = vunpack.c.h.b16 %v265
      %v627 = vunpack.c.l.b16 %v266
      %v628 = vunpack.c.h.b16 %v266
      %v629 = vunpack.c.l.b16 %v267
      %v630 = vunpack.c.h.b16 %v267
      %v631 = vunpack.c.l.b16 %v268
      %v632 = vunpack.c.h.b16 %v268
      %v633 = vunpack.c.l.b16 %v269
      %v634 = vunpack.c.h.b16 %v269
      %v635 = vunpack.c.l.b16 %v270
      %v636 = vunpack.c.h.b16 %v270
      %v637 = vunpack.c.l.b16 %v271
      %v638 = vunpack.c.h.b16 %v271
      %v639 = vunpack.c.l.b16 %v272
      %v640 = vunpack.c.h.b16 %v272
      %v641 = vunpack.c.l.b16 %v273
      %v642 = vunpack.c.h.b16 %v273
      %v643 = vunpack.c.l.b16 %v274
      %v644 = vunpack.c.h.b16 %v274
      %v645 = vunpack.c.l.b16 %v275
      %v646 = vunpack.c.h.b16 %v275
      %v647 = vunpack.c.l.b16 %v276
      %v648 = vunpack.c.h.b16 %v276
      %v649 = vunpack.c.l.b16 %v277
      %v650 = vunpack.c.h.b16 %v277
      %v651 = vunpack.c.l.b16 %v278
      %v652 = vunpack.c.h.b16 %v278
      %v653 = vunpack.c.l.b16 %v279
      %v654 = vunpack.c.h.b16 %v279
      %v655 = vunpack.c.l.b16 %v280
      %v656 = vunpack.c.h.b16 %v280
      %v657 = vunpack.c.l.b16 %v281
      %v658 = vunpack.c.h.b16 %v281
      %v659 = vunpack.c.l.b16 %v282
      %v660 = vunpack.c.h.b16 %v282
      %v661 = vunpack.c.l.b16 %v283
      %v662 = vunpack.c.h.b16 %v283
      %v663 = vunpack.c.l.b16 %v284
      %v664 = vunpack.c.h.b16 %v284
      %v665 = vunpack.c.l.b16 %v285
      %v666 = vunpack.c.h.b16 %v285
      %v667 = vunpack.c.l.b16 %v286
      %v668 = vunpack.c.h.b16 %v286
      %v669 = vunpack.c.l.b16 %v287
      %v670 = vunpack.c.h.b16 %v287
      %v671 = vunpack.c.l.b16 %v288
      %v672 = vunpack.c.h.b16 %v288
      %v673 = vunpack.c.l.b16 %v289
      %v674 = vunpack.c.h.b16 %v289
      %v675 = vunpack.c.l.b16 %v290
      %v676 = vunpack.c.h.b16 %v290
      %v677 = vunpack.c.l.b16 %v291
      %v678 = vunpack.c.h.b16 %v291
      %v679 = vunpack.c.l.b16 %v292
      %v680 = vunpack.c.h.b16 %v292
      %v681 = vunpack.c.l.b16 %v293
      %v682 = vunpack.c.h.b16 %v293
      %v683 = vunpack.c.l.b16 %v294
      %v684 = vunpack.c.h.b16 %v294
      %v685 = vunpack.c.l.b16 %v295
      %v686 = vunpack.c.h.b16 %v295
      %v687 = vunpack.c.l.b16 %v296
      %v688 = vunpack.c.h.b16 %v296
      %v689 = vunpack.c.l.b16 %v297
      %v690 = vunpack.c.h.b16 %v297
      %v691 = vunpack.c.l.b16 %v298
      %v692 = vunpack.c.h.b16 %v298
      %v693 = vunpack.c.l.b16 %v299
      %v694 = vunpack.c.h.b16 %v299
      %v695 = vpack.c.b16 %v481, %v479
      %v696 = vpack.c.b16 %v482, %v480
      %v697 = vpack.c.b16 %v485, %v483
      %v698 = vpack.c.b16 %v486, %v484
      %v699 = vpack.c.b16 %v489, %v487
      %v700 = vpack.c.b16 %v490, %v488
      %v701 = vpack.c.b16 %v493, %v491
      %v702 = vpack.c.b16 %v494, %v492
      %v703 = vpack.c.b16 %v497, %v495
      %v704 = vpack.c.b16 %v498, %v496
      %v705 = vpack.c.b16 %v501, %v499
      %v706 = vpack.c.b16 %v502, %v500
      %v707 = vpack.c.b16 %v505, %v503
      %v708 = vpack.c.b16 %v506, %v504
      %v709 = vpack.c.b16 %v509, %v507
      %v710 = vpack.c.b16 %v510, %v508
      %v711 = vpack.c.b16 %v513, %v511
      %v712 = vpack.c.b16 %v514, %v512
      %v713 = vpack.c.b16 %v517, %v515
      %v714 = vpack.c.b16 %v518, %v516
      %v715 = vpack.c.b16 %v521, %v519
      %v716 = vpack.c.b16 %v522, %v520
      %v717 = vpack.c.b16 %v525, %v523
      %v718 = vpack.c.b16 %v526, %v524
      %v719 = vpack.c.b16 %v529, %v527
      %v720 = vpack.c.b16 %v530, %v528
      %v721 = vpack.c.b16 %v533, %v531
      %v722 = vpack.c.b16 %v534, %v532
      %v723 = vpack.c.b16 %v537, %v535
      %v724 = vpack.c.b16 %v538, %v536
      %v725 = vpack.c.b16 %v541, %v539
      %v726 = vpack.c.b16 %v542, %v540
      %v727 = vpack.c.b16 %v545, %v543
      %v728 = vpack.c.b16 %v546, %v544
      %v729 = vpack.c.b16 %v549, %v547
      %v730 = vpack.c.b16 %v550, %v548
      %v731 = vpack.c.b16 %v553, %v551
      %v732 = vpack.c.b16 %v554, %v552
      %v733 = vpack.c.b16 %v557, %v555
      %v734 = vpack.c.b16 %v558, %v556
      %v735 = vpack.c.b16 %v561, %v559
      %v736 = vpack.c.b16 %v562, %v560
      %v737 = vpack.c.b16 %v565, %v563
      %v738 = vpack.c.b16 %v566, %v564
      %v739 = vpack.c.b16 %v569, %v567
      %v740 = vpack.c.b16 %v570, %v568
      %v741 = vpack.c.b16 %v573, %v571
      %v742 = vpack.c.b16 %v574, %v572
      %v743 = vpack.c.b16 %v577, %v575
      %v744 = vpack.c.b16 %v578, %v576
      %v745 = vpack.c.b16 %v581, %v579
      %v746 = vpack.c.b16 %v582, %v580
      %v747 = vpack.c.b16 %v585, %v583
      %v748 = vpack.c.b16 %v586, %v584
      %v749 = vpack.c.b16 %v589, %v587
      %v750 = vpack.c.b16 %v590, %v588
      %v751 = vpack.c.b16 %v593, %v591
      %v752 = vpack.c.b16 %v594, %v592
      %v753 = vpack.c.b16 %v597, %v595
      %v754 = vpack.c.b16 %v598, %v596
      %v755 = vpack.c.b16 %v601, %v599
      %v756 = vpack.c.b16 %v602, %v600
      %v757 = vpack.c.b16 %v605, %v603
      %v758 = vpack.c.b16 %v606, %v604
      %v759 = vpack.c.b16 %v609, %v607
      %v760 = vpack.c.b16 %v610, %v608
      %v761 = vpack.c.b16 %v613, %v611
      %v762 = vpack.c.b16 %v614, %v612
      %v763 = vpack.c.b16 %v617, %v615
      %v764 = vpack.c.b16 %v618, %v616
      %v765 = vpack.c.b16 %v621, %v619
      %v766 = vpack.c.b16 %v622, %v620
      %v767 = vpack.c.b16 %v625, %v623
      %v768 = vpack.c.b16 %v626, %v624
      %v769 = vpack.c.b16 %v629, %v627
      %v770 = vpack.c.b16 %v630, %v628
      %v771 = vpack.c.b16 %v633, %v631
      %v772 = vpack.c.b16 %v634, %v632
      %v773 = vpack.c.b16 %v637, %v635
      %v774 = vpack.c.b16 %v638, %v636
      %v775 = vpack.c.b16 %v641, %v639
      %v776 = vpack.c.b16 %v642, %v640
      %v777 = vpack.c.b16 %v645, %v643
      %v778 = vpack.c.b16 %v646, %v644
      %v779 = vpack.c.b16 %v649, %v647
      %v780 = vpack.c.b16 %v650, %v648
      %v781 = vpack.c.b16 %v653, %v651
      %v782 = vpack.c.b16 %v654, %v652
      %v783 = vpack.c.b16 %v657, %v655
      %v784 = vpack.c.b16 %v658, %v656
      %v785 = vpack.c.b16 %v661, %v659
      %v786 = vpack.c.b16 %v662, %v660
      %v787 = vpack.c.b16 %v665, %v663
      %v788 = vpack.c.b16 %v666, %v664
      %v789 = vpack.c.b16 %v669, %v667
      %v790 = vpack.c.b16 %v670, %v668
      %v791 = vpack.c.b16 %v673, %v671
      %v792 = vpack.c.b16 %v674, %v672
      %v793 = vpack.c.b16 %v677, %v675
      %v794 = vpack.c.b16 %v678, %v676
      %v795 = vpack.c.b16 %v681, %v679
      %v796 = vpack.c.b16 %v682, %v680
      %v797 = vpack.c.b16 %v685, %v683
      %v798 = vpack.c.b16 %v686, %v684
      %v799 = vpack.c.b16 %v689, %v687
      %v800 = vpack.c.b16 %v690, %v688
      %v801 = vpack.c.b16 %v693, %v691
      %v802 = vpack.c.b16 %v694, %v692
      %vm911 = vcmask 785408
      %v913 = vsel %vm911, %v351, 0
      %v916 = vsel %vm911, %v358, 0
      %918 = vmatprep.subr.bf16.mxu0 %v696
      %919 = vmatpush1.bf16.msra.mxu0 %v695
      %920 = vmatprep.subr.bf16.mxu0 %v698
      %921 = vmatpush1.bf16.msra.mxu0 %v697
      %922 = vmatprep.subr.bf16.mxu0 %v700
      %923 = vmatpush1.bf16.msra.mxu0 %v699
      %924 = vmatprep.subr.bf16.mxu0 %v702
      %925 = vmatpush1.bf16.msra.mxu0 %v701
      %926 = vmatprep.subr.bf16.mxu0 %v704
      %927 = vmatpush1.bf16.msra.mxu0 %v703
      %928 = vmatprep.subr.bf16.mxu0 %v706
      %929 = vmatpush1.bf16.msra.mxu0 %v705
      %930 = vmatprep.subr.bf16.mxu0 %v708
      %931 = vmatpush1.bf16.msra.mxu0 %v707
      %932 = vmatprep.subr.bf16.mxu0 %v710
      %933 = vmatpush1.bf16.msra.mxu0 %v709
      %934 = vmatprep.subr.bf16.mxu0 %v712
      %935 = vmatpush1.bf16.msra.mxu0 %v711
      %936 = vmatprep.subr.bf16.mxu0 %v714
      %937 = vmatpush1.bf16.msra.mxu0 %v713
      %938 = vmatprep.subr.bf16.mxu0 %v716
      %939 = vmatpush1.bf16.msra.mxu0 %v715
      %940 = vmatprep.subr.bf16.mxu0 %v718
      %941 = vmatpush1.bf16.msra.mxu0 %v717
      %942 = vmatprep.subr.bf16.mxu0 %v720
      %943 = vmatpush1.bf16.msra.mxu0 %v719
      %944 = vmatprep.subr.bf16.mxu0 %v722
      %945 = vmatpush1.bf16.msra.mxu0 %v721
      %946 = vmatprep.subr.bf16.mxu0 %v724
      %947 = vmatpush1.bf16.msra.mxu0 %v723
      %948 = vmatprep.subr.bf16.mxu0 %v726
      %949 = vmatpush1.bf16.msra.mxu0 %v725
      %950 = vmatprep.mubr.bf16.mxu0 %v346
      %951 = vmatmul.mubr.bf16.gmra.mrb[0].mxu0 %v345
      %v952 = vpop.f32.mrb[0].mxu0
      %v953 = vadd.f32 %v305, %v952
      %v954 = vpop.f32.mrb[0].mxu0
      %v955 = vadd.f32 %v309, %v954
      %v956 = vpop.f32.mrb[0].mxu0
      %v957 = vadd.f32 %v305, %v956
      %v958 = vpop.f32.mrb[0].mxu0
      %v959 = vadd.f32 %v309, %v958
      %960 = vmatprep.mubr.bf16.mxu0 %v353
      %961 = vmatmul.mubr.bf16.gmra.mrb[0].mxu0 %v352
      %v962 = vpop.f32.mrb[0].mxu0
      %v963 = vadd.f32 %v305, %v962
      %v964 = vpop.f32.mrb[0].mxu0
      %v965 = vadd.f32 %v309, %v964
      %v966 = vpop.f32.mrb[0].mxu0
      %v967 = vpop.f32.mrb[0].mxu0
      %968 = vdwg.mxu0
      %969 = vmatprep.subr.bf16.mxu0 %v728
      %970 = vmatpush1.bf16.msra.mxu0 %v727
      %971 = vmatprep.subr.bf16.mxu0 %v730
      %972 = vmatpush1.bf16.msra.mxu0 %v729
      %973 = vmatprep.subr.bf16.mxu0 %v732
      %974 = vmatpush1.bf16.msra.mxu0 %v731
      %975 = vmatprep.subr.bf16.mxu0 %v734
      %976 = vmatpush1.bf16.msra.mxu0 %v733
      %977 = vmatprep.subr.bf16.mxu0 %v736
      %978 = vmatpush1.bf16.msra.mxu0 %v735
      %979 = vmatprep.subr.bf16.mxu0 %v738
      %980 = vmatpush1.bf16.msra.mxu0 %v737
      %981 = vmatprep.subr.bf16.mxu0 %v740
      %982 = vmatpush1.bf16.msra.mxu0 %v739
      %983 = vmatprep.subr.bf16.mxu0 %v742
      %984 = vmatpush1.bf16.msra.mxu0 %v741
      %985 = vmatprep.subr.bf16.mxu0 %v744
      %986 = vmatpush1.bf16.msra.mxu0 %v743
      %987 = vmatprep.subr.bf16.mxu0 %v746
      %988 = vmatpush1.bf16.msra.mxu0 %v745
      %989 = vmatprep.subr.bf16.mxu0 %v748
      %990 = vmatpush1.bf16.msra.mxu0 %v747
      %991 = vmatprep.subr.bf16.mxu0 %v750
      %992 = vmatpush1.bf16.msra.mxu0 %v749
      %993 = vmatprep.subr.bf16.mxu0 %v752
      %994 = vmatpush1.bf16.msra.mxu0 %v751
      %995 = vmatprep.subr.bf16.mxu0 %v754
      %996 = vmatpush1.bf16.msra.mxu0 %v753
      %997 = vmatprep.subr.bf16.mxu0 %v756
      %998 = vmatpush1.bf16.msra.mxu0 %v755
      %999 = vmatprep.subr.bf16.mxu0 %v758
      %1000 = vmatpush1.bf16.msra.mxu0 %v757
      %1001 = vmatprep.mubr.bf16.mxu0 %v348
      %1002 = vmatmul.mubr.bf16.gmra.mrb[0].mxu0 %v347
      %v1003 = vpop.f32.mrb[0].mxu0
      %v1004 = vadd.f32 %v953, %v1003
      %v1005 = vpop.f32.mrb[0].mxu0
      %v1006 = vadd.f32 %v955, %v1005
      %v1007 = vpop.f32.mrb[0].mxu0
      %v1008 = vadd.f32 %v957, %v1007
      %v1009 = vpop.f32.mrb[0].mxu0
      %v1010 = vadd.f32 %v959, %v1009
      %1011 = vmatprep.mubr.bf16.mxu0 %v355
      %1012 = vmatmul.mubr.bf16.gmra.mrb[0].mxu0 %v354
      %v1013 = vpop.f32.mrb[0].mxu0
      %v1014 = vadd.f32 %v963, %v1013
      %v1015 = vpop.f32.mrb[0].mxu0
      %v1016 = vadd.f32 %v965, %v1015
      %v1017 = vpop.f32.mrb[0].mxu0
      %v1018 = vpop.f32.mrb[0].mxu0
      %1019 = vdwg.mxu0
      %1020 = vmatprep.subr.bf16.mxu0 %v760
      %1021 = vmatpush1.bf16.msra.mxu0 %v759
      %1022 = vmatprep.subr.bf16.mxu0 %v762
      %1023 = vmatpush1.bf16.msra.mxu0 %v761
      %1024 = vmatprep.subr.bf16.mxu0 %v764
      %1025 = vmatpush1.bf16.msra.mxu0 %v763
      %1026 = vmatprep.subr.bf16.mxu0 %v766
      %1027 = vmatpush1.bf16.msra.mxu0 %v765
      %1028 = vmatprep.subr.bf16.mxu0 %v768
      %1029 = vmatpush1.bf16.msra.mxu0 %v767
      %1030 = vmatprep.subr.bf16.mxu0 %v770
      %1031 = vmatpush1.bf16.msra.mxu0 %v769
      %1032 = vmatprep.subr.bf16.mxu0 %v772
      %1033 = vmatpush1.bf16.msra.mxu0 %v771
      %1034 = vmatprep.subr.bf16.mxu0 %v774
      %1035 = vmatpush1.bf16.msra.mxu0 %v773
      %1036 = vmatprep.subr.bf16.mxu0 %v776
      %1037 = vmatpush1.bf16.msra.mxu0 %v775
      %1038 = vmatprep.subr.bf16.mxu0 %v778
      %1039 = vmatpush1.bf16.msra.mxu0 %v777
      %1040 = vmatprep.subr.bf16.mxu0 %v780
      %1041 = vmatpush1.bf16.msra.mxu0 %v779
      %1042 = vmatprep.subr.bf16.mxu0 %v782
      %1043 = vmatpush1.bf16.msra.mxu0 %v781
      %1044 = vmatprep.subr.bf16.mxu0 %v784
      %1045 = vmatpush1.bf16.msra.mxu0 %v783
      %1046 = vmatprep.subr.bf16.mxu0 %v786
      %1047 = vmatpush1.bf16.msra.mxu0 %v785
      %1048 = vmatprep.subr.bf16.mxu0 %v788
      %1049 = vmatpush1.bf16.msra.mxu0 %v787
      %1050 = vmatprep.subr.bf16.mxu0 %v790
      %1051 = vmatpush1.bf16.msra.mxu0 %v789
      %1052 = vmatprep.mubr.bf16.mxu0 %v350
      %1053 = vmatmul.mubr.bf16.gmra.mrb[0].mxu0 %v349
      %v1054 = vpop.f32.mrb[0].mxu0
      %v1055 = vadd.f32 %v1004, %v1054
      %v1056 = vpop.f32.mrb[0].mxu0
      %v1057 = vadd.f32 %v1006, %v1056
      %v1058 = vpop.f32.mrb[0].mxu0
      %v1059 = vadd.f32 %v1008, %v1058
      %v1060 = vpop.f32.mrb[0].mxu0
      %v1061 = vadd.f32 %v1010, %v1060
      %1062 = vmatprep.mubr.bf16.mxu0 %v357
      %1063 = vmatmul.mubr.bf16.gmra.mrb[0].mxu0 %v356
      %v1064 = vpop.f32.mrb[0].mxu0
      %v1065 = vadd.f32 %v1014, %v1064
      %v1066 = vpop.f32.mrb[0].mxu0
      %v1067 = vadd.f32 %v1016, %v1066
      %v1068 = vpop.f32.mrb[0].mxu0
      %v1069 = vpop.f32.mrb[0].mxu0
      %1070 = vdwg.mxu0
      %1071 = vmatprep.subr.bf16.mxu0 %v792
      %1072 = vmatpush1.bf16.msra.mxu0 %v791
      %1073 = vmatprep.subr.bf16.mxu0 %v794
      %1074 = vmatpush1.bf16.msra.mxu0 %v793
      %1075 = vmatprep.subr.bf16.mxu0 %v796
      %1076 = vmatpush1.bf16.msra.mxu0 %v795
      %1077 = vmatprep.subr.bf16.mxu0 %v798
      %1078 = vmatpush1.bf16.msra.mxu0 %v797
      %1079 = vmatprep.subr.bf16.mxu0 %v800
      %1080 = vmatpush1.bf16.msra.mxu0 %v799
      %1081 = vmatprep.subr.bf16.mxu0 %v802
      %1082 = vmatpush1.bf16.msra.mxu0 %v801
      %1083 = vmatprep.subr.bf16.mxu0 0
      %1084 = vmatpush1.bf16.msra.mxu0 0
      %1085 = vmatprep.subr.bf16.mxu0 0
      %1086 = vmatpush1.bf16.msra.mxu0 0
      %1087 = vmatprep.subr.bf16.mxu0 0
      %1088 = vmatpush1.bf16.msra.mxu0 0
      %1089 = vmatprep.subr.bf16.mxu0 0
      %1090 = vmatpush1.bf16.msra.mxu0 0
      %1091 = vmatprep.subr.bf16.mxu0 0
      %1092 = vmatpush1.bf16.msra.mxu0 0
      %1093 = vmatprep.subr.bf16.mxu0 0
      %1094 = vmatpush1.bf16.msra.mxu0 0
      %1095 = vmatprep.subr.bf16.mxu0 0
      %1096 = vmatpush1.bf16.msra.mxu0 0
      %1097 = vmatprep.subr.bf16.mxu0 0
      %1098 = vmatpush1.bf16.msra.mxu0 0
      %1099 = vmatprep.subr.bf16.mxu0 0
      %1100 = vmatpush1.bf16.msra.mxu0 0
      %1101 = vmatprep.subr.bf16.mxu0 0
      %1102 = vmatpush1.bf16.msra.mxu0 0
      %1103 = vmatprep.mubr.bf16.mxu0 0
      %1104 = vmatmul.mubr.bf16.gmra.mrb[0].mxu0 %v913
      %v1105 = vpop.f32.mrb[0].mxu0
      %v1106 = vadd.f32 %v1055, %v1105
      %v1107 = vpop.f32.mrb[0].mxu0
      %v1108 = vadd.f32 %v1057, %v1107
      %v1109 = vpop.f32.mrb[0].mxu0
      %v1110 = vadd.f32 %v1059, %v1109
      %v1111 = vpop.f32.mrb[0].mxu0
      %v1112 = vadd.f32 %v1061, %v1111
      %1113 = vmatprep.mubr.bf16.mxu0 0
      %1114 = vmatmul.mubr.bf16.gmra.mrb[0].mxu0 %v916
      %v1115 = vpop.f32.mrb[0].mxu0
      %v1116 = vadd.f32 %v1065, %v1115
      %v1117 = vpop.f32.mrb[0].mxu0
      %v1118 = vadd.f32 %v1067, %v1117
      %v1119 = vpop.f32.mrb[0].mxu0
      %v1120 = vpop.f32.mrb[0].mxu0
      %1121 = vdwg.mxu0
      %v1122 = vmax.f32 %v1106, 0.0
      %v1123 = vmax.f32 %v1108, 0.0
      %v1124 = vmax.f32 %v1110, 0.0
      %v1125 = vmax.f32 %v1112, 0.0
      %v1126 = vmax.f32 %v1116, 0.0
      %v1127 = vmax.f32 %v1118, 0.0
      %v1128 = vpack.c.bf16 %v1122, %v1122
      %v1129 = vpack.c.bf16 %v1123, %v1123
      %v1130 = vpack.c.bf16 %v1124, %v1124
      %v1131 = vpack.c.bf16 %v1125, %v1125
      %v1132 = vpack.c.bf16 %v1126, %v1126
      %v1133 = vpack.c.bf16 %v1127, %v1127
      %v1140 = vunpack.c.l.b16 %v1128
      %v1141 = vunpack.c.l.b16 %v1129
      %v1142 = vunpack.c.l.b16 %v1130
      %v1143 = vunpack.c.l.b16 %v1131
      %v1144 = vunpack.c.l.b16 %v1132
      %v1145 = vunpack.c.l.b16 %v1133
      %v1146 = vpack.c.b16 %v1141, %v1140
      %v1147 = vpack.c.b16 %v1143, %v1142
      %v1148 = vpack.c.b16 %v1145, %v1144
      %1152 = vst [vmem:[%s177] sm:$0xff] %v1146
      %1153 = vst [vmem:[%s177 + $0x8] sm:$0xff] %v1147
      %1154 = vst [vmem:[%s177 + $0x10] sm:$0xff] %v1148
      %s1155 = smul.u32 3, %s14
      %p1156 = scmp.lt.s32.totalorder %s1155, 5
      %s1157 = scalar_select %p1156, %s1155, 5
      %s1158 = smul.addr %s1157, 2
      %s1159 = smul.addr %s1158, 4
      %s1160 = scalar_lea.vmem %s3, %s1159
      // Predicated region
      $region33: #{forward.5} parent=31 // pred_check
        %p1161 = pneg %p100
      $region34: #{forward.5} parent=31 // pred_check_branch
        %1163 = sbr.rel (%p1161) target = $region36
      $region35: #{forward.5} parent=31 // pred_region
        %s1164 = smul.u32 3, %s14
      $region36: #{forward.5} parent=31 // pred_fallthru
        _
    $region32: #{forward.5} parent=5 // pred_fallthru
      _
    %p1165 = scmp.le.s32.totalorder 2, %s9
    // Predicated region
    $region37: #{forward.5} parent=5 // pred_check
      %p1166 = pneg %p1165
    $region38: #{forward.5} parent=5 // pred_check_branch
      %1168 = sbr.rel (%p1166) target = $region40
    $region39: #{forward.5} parent=5 // pred_region
      %s1169 = ssub.s32 %s9, 2
      // Predicated region
      $region41: #{forward.5} parent=39 // pred_check
        %p1170 = pneg %p106
      $region42: #{forward.5} parent=39 // pred_check_branch
        %1172 = sbr.rel (%p1170) target = $region44
      $region43: #{forward.5} parent=39 // pred_region
        %s1173 = smul.u32 3, %s15
        %p1174 = scmp.lt.s32.totalorder %s1173, 5
        %s1175 = scalar_select %p1174, %s1173, 5
        %s1176 = smul.addr %s1175, 2
        %s1177 = smul.addr %s1176, 4
        %s1178 = scalar_lea.vmem %s3, %s1177
      $region44: #{forward.5} parent=39 // pred_fallthru
        _
    $region40: #{forward.5} parent=5 // pred_fallthru
      _
  $region6: #{forward.5} parent=0 // loop_footer
    %s13 = sadd.s32 1, %s9
  $region7: #{forward.5} parent=0 // loop_footer_branch
    %8 = sbr.rel target = $region3
  $region8: #{forward.5} parent=0 // loop_exit
    _

// kernel: forward.6
$region0: #{forward.6}
  #allocation0 [shape = 'u32[]', space=smem, size = 0x4, offset = 0x4, fixed_abs, tag = 'smem constant byte address 0x4 - core index']
  #allocation1 [shape = 'u32[144,128]{1,0:T(1,128)}', space=vmem, size = 0x12000, scoped, tag = 'internal scratch']
  %s0 = inlined_call_operand.vmem [shape: f32[2,1,128], index: 0, kind: input, shape index: {}]
  %s1 = inlined_call_operand.vmem [shape: bf16[384,32], index: 1, kind: input, shape index: {}]
  %s2 = inlined_call_operand.vmem [shape: bf16[32,32], index: 2, kind: input, shape index: {}]
  %s3 = inlined_call_operand.vmem [shape: f32[1,32], index: 3, kind: input, shape index: {}]
  %s4 = inlined_call_operand.vmem [shape: f32[2,64], index: 4, kind: output, shape index: {}]
  %s5 = sld [smem:[#allocation0]]
  $region26: #{forward.6} parent=0
    _
  %s7 = ssub.s32 1, %s5
  %s8 = scalar_select 0, %s7, %s5
  // Predicated region
  $region2: #{forward.6} parent=0 // pred_check
    _
  $region3: #{forward.6} parent=0 // pred_check_branch
    %10 = sbr.rel (0) target = $region5
  $region4: #{forward.6} parent=0 // pred_region
    _
  $region5: #{forward.6} parent=0 // pred_fallthru
    _
  // Predicated region
  $region6: #{forward.6} parent=0 // pred_check
    _
  $region7: #{forward.6} parent=0 // pred_check_branch
    %12 = sbr.rel (0) target = $region9
  $region8: #{forward.6} parent=0 // pred_region
    _
  $region9: #{forward.6} parent=0 // pred_fallthru
    _
  // Predicated region
  $region10: #{forward.6} parent=0 // pred_check
    _
  $region11: #{forward.6} parent=0 // pred_check_branch
    %14 = sbr.rel (0) target = $region13
  $region12: #{forward.6} parent=0 // pred_region
    _
  $region13: #{forward.6} parent=0 // pred_fallthru
    _
  // Predicated region
  $region14: #{forward.6} parent=0 // pred_check
    _
  $region15: #{forward.6} parent=0 // pred_check_branch
    %16 = sbr.rel (0) target = $region17
  $region16: #{forward.6} parent=0 // pred_region
    _
  $region17: #{forward.6} parent=0 // pred_fallthru
    _
  %v18 = vld [vmem:[%s1] sm:$0xf]
  %v19 = vld [vmem:[%s1 + $0x4] sm:$0xf]
  %v20 = vld [vmem:[%s1 + $0x8] sm:$0xf]
  %v21 = vld [vmem:[%s1 + $0xc] sm:$0xf]
  %v22 = vld [vmem:[%s1 + $0x10] sm:$0xf]
  %v23 = vld [vmem:[%s1 + $0x14] sm:$0xf]
  %v24 = vld [vmem:[%s1 + $0x18] sm:$0xf]
  %v25 = vld [vmem:[%s1 + $0x1c] sm:$0xf]
  %v26 = vld [vmem:[%s1 + $0x20] sm:$0xf]
  %v27 = vld [vmem:[%s1 + $0x24] sm:$0xf]
  %v28 = vld [vmem:[%s1 + $0x28] sm:$0xf]
  %v29 = vld [vmem:[%s1 + $0x2c] sm:$0xf]
  %v30 = vld [vmem:[%s1 + $0x30] sm:$0xf]
  %v31 = vld [vmem:[%s1 + $0x34] sm:$0xf]
  %v32 = vld [vmem:[%s1 + $0x38] sm:$0xf]
  %v33 = vld [vmem:[%s1 + $0x3c] sm:$0xf]
  %v34 = vld [vmem:[%s1 + $0x40] sm:$0xf]
  %v35 = vld [vmem:[%s1 + $0x44] sm:$0xf]
  %v36 = vld [vmem:[%s1 + $0x48] sm:$0xf]
  %v37 = vld [vmem:[%s1 + $0x4c] sm:$0xf]
  %v38 = vld [vmem:[%s1 + $0x50] sm:$0xf]
  %v39 = vld [vmem:[%s1 + $0x54] sm:$0xf]
  %v40 = vld [vmem:[%s1 + $0x58] sm:$0xf]
  %v41 = vld [vmem:[%s1 + $0x5c] sm:$0xf]
  %v42 = vld [vmem:[%s1 + $0x60] sm:$0xf]
  %v43 = vld [vmem:[%s1 + $0x64] sm:$0xf]
  %v44 = vld [vmem:[%s1 + $0x68] sm:$0xf]
  %v45 = vld [vmem:[%s1 + $0x6c] sm:$0xf]
  %v46 = vld [vmem:[%s1 + $0x70] sm:$0xf]
  %v47 = vld [vmem:[%s1 + $0x74] sm:$0xf]
  %v48 = vld [vmem:[%s1 + $0x78] sm:$0xf]
  %v49 = vld [vmem:[%s1 + $0x7c] sm:$0xf]
  %v50 = vld [vmem:[%s1 + $0x80] sm:$0xf]
  %v51 = vld [vmem:[%s1 + $0x84] sm:$0xf]
  %v52 = vld [vmem:[%s1 + $0x88] sm:$0xf]
  %v53 = vld [vmem:[%s1 + $0x8c] sm:$0xf]
  %v54 = vld [vmem:[%s1 + $0x90] sm:$0xf]
  %v55 = vld [vmem:[%s1 + $0x94] sm:$0xf]
  %v56 = vld [vmem:[%s1 + $0x98] sm:$0xf]
  %v57 = vld [vmem:[%s1 + $0x9c] sm:$0xf]
  %v58 = vld [vmem:[%s1 + $0xa0] sm:$0xf]
  %v59 = vld [vmem:[%s1 + $0xa4] sm:$0xf]
  %v60 = vld [vmem:[%s1 + $0xa8] sm:$0xf]
  %v61 = vld [vmem:[%s1 + $0xac] sm:$0xf]
  %v62 = vld [vmem:[%s1 + $0xb0] sm:$0xf]
  %v63 = vld [vmem:[%s1 + $0xb4] sm:$0xf]
  %v64 = vld [vmem:[%s1 + $0xb8] sm:$0xf]
  %v65 = vld [vmem:[%s1 + $0xbc] sm:$0xf]
  %v66 = vld [vmem:[%s2] sm:$0xf]
  %v67 = vld [vmem:[%s2 + $0x4] sm:$0xf]
  %v68 = vld [vmem:[%s2 + $0x8] sm:$0xf]
  %v69 = vld [vmem:[%s2 + $0xc] sm:$0xf]
  %v70 = vld [vmem:[%s3] sm:$0x1]
  %v72 = vlaneseq
  %v73 = vshrl.u32 %v72, 7
  %v74 = vsub.s32 0, %v73
  %v75 = vrot.slane %v70, %v74
  %v125 = vunpack.c.l.b16 %v18
  %v126 = vunpack.c.l.b16 %v19
  %v127 = vunpack.c.l.b16 %v20
  %v128 = vunpack.c.l.b16 %v21
  %v129 = vunpack.c.l.b16 %v22
  %v130 = vunpack.c.l.b16 %v23
  %v131 = vunpack.c.l.b16 %v24
  %v132 = vunpack.c.l.b16 %v25
  %v133 = vunpack.c.l.b16 %v26
  %v134 = vunpack.c.l.b16 %v27
  %v135 = vunpack.c.l.b16 %v28
  %v136 = vunpack.c.l.b16 %v29
  %v137 = vunpack.c.l.b16 %v30
  %v138 = vunpack.c.l.b16 %v31
  %v139 = vunpack.c.l.b16 %v32
  %v140 = vunpack.c.l.b16 %v33
  %v141 = vunpack.c.l.b16 %v34
  %v142 = vunpack.c.l.b16 %v35
  %v143 = vunpack.c.l.b16 %v36
  %v144 = vunpack.c.l.b16 %v37
  %v145 = vunpack.c.l.b16 %v38
  %v146 = vunpack.c.l.b16 %v39
  %v147 = vunpack.c.l.b16 %v40
  %v148 = vunpack.c.l.b16 %v41
  %v149 = vunpack.c.l.b16 %v42
  %v150 = vunpack.c.l.b16 %v43
  %v151 = vunpack.c.l.b16 %v44
  %v152 = vunpack.c.l.b16 %v45
  %v153 = vunpack.c.l.b16 %v46
  %v154 = vunpack.c.l.b16 %v47
  %v155 = vunpack.c.l.b16 %v48
  %v156 = vunpack.c.l.b16 %v49
  %v157 = vunpack.c.l.b16 %v50
  %v158 = vunpack.c.l.b16 %v51
  %v159 = vunpack.c.l.b16 %v52
  %v160 = vunpack.c.l.b16 %v53
  %v161 = vunpack.c.l.b16 %v54
  %v162 = vunpack.c.l.b16 %v55
  %v163 = vunpack.c.l.b16 %v56
  %v164 = vunpack.c.l.b16 %v57
  %v165 = vunpack.c.l.b16 %v58
  %v166 = vunpack.c.l.b16 %v59
  %v167 = vunpack.c.l.b16 %v60
  %v168 = vunpack.c.l.b16 %v61
  %v169 = vunpack.c.l.b16 %v62
  %v170 = vunpack.c.l.b16 %v63
  %v171 = vunpack.c.l.b16 %v64
  %v172 = vunpack.c.l.b16 %v65
  %v173 = vpack.c.b16 %v126, %v125
  %v174 = vpack.c.b16 %v128, %v127
  %v175 = vpack.c.b16 %v130, %v129
  %v176 = vpack.c.b16 %v132, %v131
  %v177 = vpack.c.b16 %v134, %v133
  %v178 = vpack.c.b16 %v136, %v135
  %v179 = vpack.c.b16 %v138, %v137
  %v180 = vpack.c.b16 %v140, %v139
  %v181 = vpack.c.b16 %v142, %v141
  %v182 = vpack.c.b16 %v144, %v143
  %v183 = vpack.c.b16 %v146, %v145
  %v184 = vpack.c.b16 %v148, %v147
  %v185 = vpack.c.b16 %v150, %v149
  %v186 = vpack.c.b16 %v152, %v151
  %v187 = vpack.c.b16 %v154, %v153
  %v188 = vpack.c.b16 %v156, %v155
  %v189 = vpack.c.b16 %v158, %v157
  %v190 = vpack.c.b16 %v160, %v159
  %v191 = vpack.c.b16 %v162, %v161
  %v192 = vpack.c.b16 %v164, %v163
  %v193 = vpack.c.b16 %v166, %v165
  %v194 = vpack.c.b16 %v168, %v167
  %v195 = vpack.c.b16 %v170, %v169
  %v196 = vpack.c.b16 %v172, %v171
  %v201 = vunpack.c.l.b16 %v66
  %v202 = vunpack.c.l.b16 %v67
  %v203 = vunpack.c.l.b16 %v68
  %v204 = vunpack.c.l.b16 %v69
  %v205 = vpack.c.b16 %v202, %v201
  %v206 = vpack.c.b16 %v204, %v203
  %vm209 = vcmask 261120
  %v211 = vsel %vm209, %v173, 0
  %v214 = vsel %vm209, %v174, 0
  %v217 = vsel %vm209, %v175, 0
  %v220 = vsel %vm209, %v176, 0
  %v223 = vsel %vm209, %v177, 0
  %v226 = vsel %vm209, %v178, 0
  %v229 = vsel %vm209, %v179, 0
  %v232 = vsel %vm209, %v180, 0
  %v235 = vsel %vm209, %v181, 0
  %v238 = vsel %vm209, %v182, 0
  %v241 = vsel %vm209, %v183, 0
  %v244 = vsel %vm209, %v184, 0
  %v247 = vsel %vm209, %v185, 0
  %v250 = vsel %vm209, %v186, 0
  %v253 = vsel %vm209, %v187, 0
  %v256 = vsel %vm209, %v188, 0
  %v259 = vsel %vm209, %v189, 0
  %v262 = vsel %vm209, %v190, 0
  %v265 = vsel %vm209, %v191, 0
  %v268 = vsel %vm209, %v192, 0
  %v271 = vsel %vm209, %v193, 0
  %v274 = vsel %vm209, %v194, 0
  %v277 = vsel %vm209, %v195, 0
  %v280 = vsel %vm209, %v196, 0
  %282 = vmatprep.subr.bf16.mxu0 0
  %283 = vmatpush1.bf16.msra.mxu0 %v205
  %284 = vmatprep.subr.bf16.mxu0 0
  %285 = vmatpush1.bf16.msra.mxu0 %v206
  %286 = vmatprep.subr.bf16.mxu0 0
  %287 = vmatpush1.bf16.msra.mxu0 0
  %288 = vmatprep.subr.bf16.mxu0 0
  %289 = vmatpush1.bf16.msra.mxu0 0
  %290 = vmatprep.subr.bf16.mxu0 0
  %291 = vmatpush1.bf16.msra.mxu0 0
  %292 = vmatprep.subr.bf16.mxu0 0
  %293 = vmatpush1.bf16.msra.mxu0 0
  %294 = vmatprep.subr.bf16.mxu0 0
  %295 = vmatpush1.bf16.msra.mxu0 0
  %296 = vmatprep.subr.bf16.mxu0 0
  %297 = vmatpush1.bf16.msra.mxu0 0
  %298 = vmatprep.subr.bf16.mxu0 0
  %299 = vmatpush1.bf16.msra.mxu0 0
  %300 = vmatprep.subr.bf16.mxu0 0
  %301 = vmatpush1.bf16.msra.mxu0 0
  %302 = vmatprep.subr.bf16.mxu0 0
  %303 = vmatpush1.bf16.msra.mxu0 0
  %304 = vmatprep.subr.bf16.mxu0 0
  %305 = vmatpush1.bf16.msra.mxu0 0
  %306 = vmatprep.subr.bf16.mxu0 0
  %307 = vmatpush1.bf16.msra.mxu0 0
  %308 = vmatprep.subr.bf16.mxu0 0
  %309 = vmatpush1.bf16.msra.mxu0 0
  %310 = vmatprep.subr.bf16.mxu0 0
  %311 = vmatpush1.bf16.msra.mxu0 0
  %312 = vmatprep.subr.bf16.mxu0 0
  %313 = vmatpush1.bf16.msra.mxu0 0
  %314 = vmatprep.mubr.bf16.mxu0 0
  %315 = vmatmul.mubr.bf16.gmra.mrb[0].mxu0 %v211
  %v316 = vpop.f32.mrb[0].mxu0
  %v317 = vadd.f32 %v75, %v316
  %v318 = vpop.f32.mrb[0].mxu0
  %v319 = vpop.f32.mrb[0].mxu0
  %v320 = vadd.f32 %v75, %v319
  %v321 = vpop.f32.mrb[0].mxu0
  %322 = vmatprep.mubr.bf16.mxu0 0
  %323 = vmatmul.mubr.bf16.gmra.mrb[0].mxu0 %v214
  %v324 = vpop.f32.mrb[0].mxu0
  %v325 = vadd.f32 %v75, %v324
  %v326 = vpop.f32.mrb[0].mxu0
  %v327 = vpop.f32.mrb[0].mxu0
  %v328 = vadd.f32 %v75, %v327
  %v329 = vpop.f32.mrb[0].mxu0
  %330 = vmatprep.mubr.bf16.mxu0 0
  %331 = vmatmul.mubr.bf16.gmra.mrb[0].mxu0 %v217
  %v332 = vpop.f32.mrb[0].mxu0
  %v333 = vadd.f32 %v75, %v332
  %v334 = vpop.f32.mrb[0].mxu0
  %v335 = vpop.f32.mrb[0].mxu0
  %v336 = vadd.f32 %v75, %v335
  %v337 = vpop.f32.mrb[0].mxu0
  %338 = vmatprep.mubr.bf16.mxu0 0
  %339 = vmatmul.mubr.bf16.gmra.mrb[0].mxu0 %v220
  %v340 = vpop.f32.mrb[0].mxu0
  %v341 = vadd.f32 %v75, %v340
  %v342 = vpop.f32.mrb[0].mxu0
  %v343 = vpop.f32.mrb[0].mxu0
  %v344 = vadd.f32 %v75, %v343
  %v345 = vpop.f32.mrb[0].mxu0
  %346 = vmatprep.mubr.bf16.mxu0 0
  %347 = vmatmul.mubr.bf16.gmra.mrb[0].mxu0 %v223
  %v348 = vpop.f32.mrb[0].mxu0
  %v349 = vadd.f32 %v75, %v348
  %v350 = vpop.f32.mrb[0].mxu0
  %v351 = vpop.f32.mrb[0].mxu0
  %v352 = vadd.f32 %v75, %v351
  %v353 = vpop.f32.mrb[0].mxu0
  %354 = vmatprep.mubr.bf16.mxu0 0
  %355 = vmatmul.mubr.bf16.gmra.mrb[0].mxu0 %v226
  %v356 = vpop.f32.mrb[0].mxu0
  %v357 = vadd.f32 %v75, %v356
  %v358 = vpop.f32.mrb[0].mxu0
  %v359 = vpop.f32.mrb[0].mxu0
  %v360 = vadd.f32 %v75, %v359
  %v361 = vpop.f32.mrb[0].mxu0
  %362 = vmatprep.mubr.bf16.mxu0 0
  %363 = vmatmul.mubr.bf16.gmra.mrb[0].mxu0 %v229
  %v364 = vpop.f32.mrb[0].mxu0
  %v365 = vadd.f32 %v75, %v364
  %v366 = vpop.f32.mrb[0].mxu0
  %v367 = vpop.f32.mrb[0].mxu0
  %v368 = vadd.f32 %v75, %v367
  %v369 = vpop.f32.mrb[0].mxu0
  %370 = vmatprep.mubr.bf16.mxu0 0
  %371 = vmatmul.mubr.bf16.gmra.mrb[0].mxu0 %v232
  %v372 = vpop.f32.mrb[0].mxu0
  %v373 = vadd.f32 %v75, %v372
  %v374 = vpop.f32.mrb[0].mxu0
  %v375 = vpop.f32.mrb[0].mxu0
  %v376 = vadd.f32 %v75, %v375
  %v377 = vpop.f32.mrb[0].mxu0
  %378 = vmatprep.mubr.bf16.mxu0 0
  %379 = vmatmul.mubr.bf16.gmra.mrb[0].mxu0 %v235
  %v380 = vpop.f32.mrb[0].mxu0
  %v381 = vadd.f32 %v75, %v380
  %v382 = vpop.f32.mrb[0].mxu0
  %v383 = vpop.f32.mrb[0].mxu0
  %v384 = vadd.f32 %v75, %v383
  %v385 = vpop.f32.mrb[0].mxu0
  %386 = vmatprep.mubr.bf16.mxu0 0
  %387 = vmatmul.mubr.bf16.gmra.mrb[0].mxu0 %v238
  %v388 = vpop.f32.mrb[0].mxu0
  %v389 = vadd.f32 %v75, %v388
  %v390 = vpop.f32.mrb[0].mxu0
  %v391 = vpop.f32.mrb[0].mxu0
  %v392 = vadd.f32 %v75, %v391
  %v393 = vpop.f32.mrb[0].mxu0
  %394 = vmatprep.mubr.bf16.mxu0 0
  %395 = vmatmul.mubr.bf16.gmra.mrb[0].mxu0 %v241
  %v396 = vpop.f32.mrb[0].mxu0
  %v397 = vadd.f32 %v75, %v396
  %v398 = vpop.f32.mrb[0].mxu0
  %v399 = vpop.f32.mrb[0].mxu0
  %v400 = vadd.f32 %v75, %v399
  %v401 = vpop.f32.mrb[0].mxu0
  %402 = vmatprep.mubr.bf16.mxu0 0
  %403 = vmatmul.mubr.bf16.gmra.mrb[0].mxu0 %v244
  %v404 = vpop.f32.mrb[0].mxu0
  %v405 = vadd.f32 %v75, %v404
  %v406 = vpop.f32.mrb[0].mxu0
  %v407 = vpop.f32.mrb[0].mxu0
  %v408 = vadd.f32 %v75, %v407
  %v409 = vpop.f32.mrb[0].mxu0
  %410 = vmatprep.mubr.bf16.mxu0 0
  %411 = vmatmul.mubr.bf16.gmra.mrb[0].mxu0 %v247
  %v412 = vpop.f32.mrb[0].mxu0
  %v413 = vadd.f32 %v75, %v412
  %v414 = vpop.f32.mrb[0].mxu0
  %v415 = vpop.f32.mrb[0].mxu0
  %v416 = vadd.f32 %v75, %v415
  %v417 = vpop.f32.mrb[0].mxu0
  %418 = vmatprep.mubr.bf16.mxu0 0
  %419 = vmatmul.mubr.bf16.gmra.mrb[0].mxu0 %v250
  %v420 = vpop.f32.mrb[0].mxu0
  %v421 = vadd.f32 %v75, %v420
  %v422 = vpop.f32.mrb[0].mxu0
  %v423 = vpop.f32.mrb[0].mxu0
  %v424 = vadd.f32 %v75, %v423
  %v425 = vpop.f32.mrb[0].mxu0
  %426 = vmatprep.mubr.bf16.mxu0 0
  %427 = vmatmul.mubr.bf16.gmra.mrb[0].mxu0 %v253
  %v428 = vpop.f32.mrb[0].mxu0
  %v429 = vadd.f32 %v75, %v428
  %v430 = vpop.f32.mrb[0].mxu0
  %v431 = vpop.f32.mrb[0].mxu0
  %v432 = vadd.f32 %v75, %v431
  %v433 = vpop.f32.mrb[0].mxu0
  %434 = vmatprep.mubr.bf16.mxu0 0
  %435 = vmatmul.mubr.bf16.gmra.mrb[0].mxu0 %v256
  %v436 = vpop.f32.mrb[0].mxu0
  %v437 = vadd.f32 %v75, %v436
  %v438 = vpop.f32.mrb[0].mxu0
  %v439 = vpop.f32.mrb[0].mxu0
  %v440 = vadd.f32 %v75, %v439
  %v441 = vpop.f32.mrb[0].mxu0
  %442 = vmatprep.mubr.bf16.mxu0 0
  %443 = vmatmul.mubr.bf16.gmra.mrb[0].mxu0 %v259
  %v444 = vpop.f32.mrb[0].mxu0
  %v445 = vadd.f32 %v75, %v444
  %v446 = vpop.f32.mrb[0].mxu0
  %v447 = vpop.f32.mrb[0].mxu0
  %v448 = vadd.f32 %v75, %v447
  %v449 = vpop.f32.mrb[0].mxu0
  %450 = vmatprep.mubr.bf16.mxu0 0
  %451 = vmatmul.mubr.bf16.gmra.mrb[0].mxu0 %v262
  %v452 = vpop.f32.mrb[0].mxu0
  %v453 = vadd.f32 %v75, %v452
  %v454 = vpop.f32.mrb[0].mxu0
  %v455 = vpop.f32.mrb[0].mxu0
  %v456 = vadd.f32 %v75, %v455
  %v457 = vpop.f32.mrb[0].mxu0
  %458 = vmatprep.mubr.bf16.mxu0 0
  %459 = vmatmul.mubr.bf16.gmra.mrb[0].mxu0 %v265
  %v460 = vpop.f32.mrb[0].mxu0
  %v461 = vadd.f32 %v75, %v460
  %v462 = vpop.f32.mrb[0].mxu0
  %v463 = vpop.f32.mrb[0].mxu0
  %v464 = vadd.f32 %v75, %v463
  %v465 = vpop.f32.mrb[0].mxu0
  %466 = vmatprep.mubr.bf16.mxu0 0
  %467 = vmatmul.mubr.bf16.gmra.mrb[0].mxu0 %v268
  %v468 = vpop.f32.mrb[0].mxu0
  %v469 = vadd.f32 %v75, %v468
  %v470 = vpop.f32.mrb[0].mxu0
  %v471 = vpop.f32.mrb[0].mxu0
  %v472 = vadd.f32 %v75, %v471
  %v473 = vpop.f32.mrb[0].mxu0
  %474 = vmatprep.mubr.bf16.mxu0 0
  %475 = vmatmul.mubr.bf16.gmra.mrb[0].mxu0 %v271
  %v476 = vpop.f32.mrb[0].mxu0
  %v477 = vadd.f32 %v75, %v476
  %v478 = vpop.f32.mrb[0].mxu0
  %v479 = vpop.f32.mrb[0].mxu0
  %v480 = vadd.f32 %v75, %v479
  %v481 = vpop.f32.mrb[0].mxu0
  %482 = vmatprep.mubr.bf16.mxu0 0
  %483 = vmatmul.mubr.bf16.gmra.mrb[0].mxu0 %v274
  %v484 = vpop.f32.mrb[0].mxu0
  %v485 = vadd.f32 %v75, %v484
  %v486 = vpop.f32.mrb[0].mxu0
  %v487 = vpop.f32.mrb[0].mxu0
  %v488 = vadd.f32 %v75, %v487
  %v489 = vpop.f32.mrb[0].mxu0
  %490 = vmatprep.mubr.bf16.mxu0 0
  %491 = vmatmul.mubr.bf16.gmra.mrb[0].mxu0 %v277
  %v492 = vpop.f32.mrb[0].mxu0
  %v493 = vadd.f32 %v75, %v492
  %v494 = vpop.f32.mrb[0].mxu0
  %v495 = vpop.f32.mrb[0].mxu0
  %v496 = vadd.f32 %v75, %v495
  %v497 = vpop.f32.mrb[0].mxu0
  %498 = vmatprep.mubr.bf16.mxu0 0
  %499 = vmatmul.mubr.bf16.gmra.mrb[0].mxu0 %v280
  %v500 = vpop.f32.mrb[0].mxu0
  %v501 = vadd.f32 %v75, %v500
  %v502 = vpop.f32.mrb[0].mxu0
  %v503 = vpop.f32.mrb[0].mxu0
  %v504 = vadd.f32 %v75, %v503
  %v505 = vpop.f32.mrb[0].mxu0
  %506 = vdwg.mxu0
  %v507 = vmax.f32 %v317, 0.0
  %v508 = vmax.f32 %v320, 0.0
  %v509 = vmax.f32 %v325, 0.0
  %v510 = vmax.f32 %v328, 0.0
  %v511 = vmax.f32 %v333, 0.0
  %v512 = vmax.f32 %v336, 0.0
  %v513 = vmax.f32 %v341, 0.0
  %v514 = vmax.f32 %v344, 0.0
  %v515 = vmax.f32 %v349, 0.0
  %v516 = vmax.f32 %v352, 0.0
  %v517 = vmax.f32 %v357, 0.0
  %v518 = vmax.f32 %v360, 0.0
  %v519 = vmax.f32 %v365, 0.0
  %v520 = vmax.f32 %v368, 0.0
  %v521 = vmax.f32 %v373, 0.0
  %v522 = vmax.f32 %v376, 0.0
  %v523 = vmax.f32 %v381, 0.0
  %v524 = vmax.f32 %v384, 0.0
  %v525 = vmax.f32 %v389, 0.0
  %v526 = vmax.f32 %v392, 0.0
  %v527 = vmax.f32 %v397, 0.0
  %v528 = vmax.f32 %v400, 0.0
  %v529 = vmax.f32 %v405, 0.0
  %v530 = vmax.f32 %v408, 0.0
  %v531 = vmax.f32 %v413, 0.0
  %v532 = vmax.f32 %v416, 0.0
  %v533 = vmax.f32 %v421, 0.0
  %v534 = vmax.f32 %v424, 0.0
  %v535 = vmax.f32 %v429, 0.0
  %v536 = vmax.f32 %v432, 0.0
  %v537 = vmax.f32 %v437, 0.0
  %v538 = vmax.f32 %v440, 0.0
  %v539 = vmax.f32 %v445, 0.0
  %v540 = vmax.f32 %v448, 0.0
  %v541 = vmax.f32 %v453, 0.0
  %v542 = vmax.f32 %v456, 0.0
  %v543 = vmax.f32 %v461, 0.0
  %v544 = vmax.f32 %v464, 0.0
  %v545 = vmax.f32 %v469, 0.0
  %v546 = vmax.f32 %v472, 0.0
  %v547 = vmax.f32 %v477, 0.0
  %v548 = vmax.f32 %v480, 0.0
  %v549 = vmax.f32 %v485, 0.0
  %v550 = vmax.f32 %v488, 0.0
  %v551 = vmax.f32 %v493, 0.0
  %v552 = vmax.f32 %v496, 0.0
  %v553 = vmax.f32 %v501, 0.0
  %v554 = vmax.f32 %v504, 0.0
  %v555 = vld [vmem:[%s0] sm:$0x1]
  %v556 = vld [vmem:[%s0 + $0x1] sm:$0x1]
  %557 = vmatprep.subr.mxu0 0.0
  %558 = vmatpush1.msra.mxu0 %v507
  %559 = vmatprep.subr.mxu0 0.0
  %560 = vmatpush1.msra.mxu0 %v508
  %561 = vmatprep.subr.mxu0 0.0
  %562 = vmatpush1.msra.mxu0 %v509
  %563 = vmatprep.subr.mxu0 0.0
  %564 = vmatpush1.msra.mxu0 %v510
  %565 = vmatprep.subr.mxu0 0.0
  %566 = vmatpush1.msra.mxu0 %v511
  %567 = vmatprep.subr.mxu0 0.0
  %568 = vmatpush1.msra.mxu0 %v512
  %569 = vmatprep.subr.mxu0 0.0
  %570 = vmatpush1.msra.mxu0 %v513
  %571 = vmatprep.subr.mxu0 0.0
  %572 = vmatpush1.msra.mxu0 %v514
  %573 = vmatprep.subr.mxu0 0.0
  %574 = vmatpush1.msra.mxu0 %v515
  %575 = vmatprep.subr.mxu0 0.0
  %576 = vmatpush1.msra.mxu0 %v516
  %577 = vmatprep.subr.mxu0 0.0
  %578 = vmatpush1.msra.mxu0 %v517
  %579 = vmatprep.subr.mxu0 0.0
  %580 = vmatpush1.msra.mxu0 %v518
  %581 = vmatprep.subr.mxu0 0.0
  %582 = vmatpush1.msra.mxu0 %v519
  %583 = vmatprep.subr.mxu0 0.0
  %584 = vmatpush1.msra.mxu0 %v520
  %585 = vmatprep.subr.mxu0 0.0
  %586 = vmatpush1.msra.mxu0 %v521
  %587 = vmatprep.subr.mxu0 0.0
  %588 = vmatpush1.msra.mxu0 %v522
  %589 = vmatprep.subr.mxu0 0.0
  %590 = vmatpush1.msra.mxu0 0.0
  %591 = vmatprep.subr.mxu0 0.0
  %592 = vmatpush1.msra.mxu0 0.0
  %593 = vmatprep.subr.mxu0 0.0
  %594 = vmatpush1.msra.mxu0 0.0
  %595 = vmatprep.subr.mxu0 0.0
  %596 = vmatpush1.msra.mxu0 0.0
  %597 = vmatprep.subr.mxu0 0.0
  %598 = vmatpush1.msra.mxu0 0.0
  %599 = vmatprep.subr.mxu0 0.0
  %600 = vmatpush1.msra.mxu0 0.0
  %601 = vmatprep.subr.mxu0 0.0
  %602 = vmatpush1.msra.mxu0 0.0
  %603 = vmatprep.subr.mxu0 0.0
  %604 = vmatpush1.msra.mxu0 0.0
  %605 = vmatprep.subr.mxu0 0.0
  %606 = vmatpush1.msra.mxu0 0.0
  %607 = vmatprep.subr.mxu0 0.0
  %608 = vmatpush1.msra.mxu0 0.0
  %609 = vmatprep.subr.mxu0 0.0
  %610 = vmatpush1.msra.mxu0 0.0
  %611 = vmatprep.subr.mxu0 0.0
  %612 = vmatpush1.msra.mxu0 0.0
  %613 = vmatprep.subr.mxu0 0.0
  %614 = vmatpush1.msra.mxu0 0.0
  %615 = vmatprep.subr.mxu0 0.0
  %616 = vmatpush1.msra.mxu0 0.0
  %617 = vmatprep.subr.mxu0 0.0
  %618 = vmatpush1.msra.mxu0 0.0
  %619 = vmatprep.subr.mxu0 0.0
  %620 = vmatpush1.msra.mxu0 0.0
  %621 = vmatprep.mubr.f32.mxu0 0.0
  %622 = vmatmul.mubr.f32.gmra.mrb[0].mxu0 %v555
  %v623 = vpop.f32.mrb[0].mxu0
  %v624 = vadd.f32 0.0, %v623
  %v625 = vpop.f32.mrb[0].mxu0
  %626 = vdwg.mxu0
  %627 = vmatprep.subr.mxu0 0.0
  %628 = vmatpush1.msra.mxu0 %v523
  %629 = vmatprep.subr.mxu0 0.0
  %630 = vmatpush1.msra.mxu0 %v524
  %631 = vmatprep.subr.mxu0 0.0
  %632 = vmatpush1.msra.mxu0 %v525
  %633 = vmatprep.subr.mxu0 0.0
  %634 = vmatpush1.msra.mxu0 %v526
  %635 = vmatprep.subr.mxu0 0.0
  %636 = vmatpush1.msra.mxu0 %v527
  %637 = vmatprep.subr.mxu0 0.0
  %638 = vmatpush1.msra.mxu0 %v528
  %639 = vmatprep.subr.mxu0 0.0
  %640 = vmatpush1.msra.mxu0 %v529
  %641 = vmatprep.subr.mxu0 0.0
  %642 = vmatpush1.msra.mxu0 %v530
  %643 = vmatprep.subr.mxu0 0.0
  %644 = vmatpush1.msra.mxu0 %v531
  %645 = vmatprep.subr.mxu0 0.0
  %646 = vmatpush1.msra.mxu0 %v532
  %647 = vmatprep.subr.mxu0 0.0
  %648 = vmatpush1.msra.mxu0 %v533
  %649 = vmatprep.subr.mxu0 0.0
  %650 = vmatpush1.msra.mxu0 %v534
  %651 = vmatprep.subr.mxu0 0.0
  %652 = vmatpush1.msra.mxu0 %v535
  %653 = vmatprep.subr.mxu0 0.0
  %654 = vmatpush1.msra.mxu0 %v536
  %655 = vmatprep.subr.mxu0 0.0
  %656 = vmatpush1.msra.mxu0 %v537
  %657 = vmatprep.subr.mxu0 0.0
  %658 = vmatpush1.msra.mxu0 %v538
  %659 = vmatprep.subr.mxu0 0.0
  %660 = vmatpush1.msra.mxu0 0.0
  %661 = vmatprep.subr.mxu0 0.0
  %662 = vmatpush1.msra.mxu0 0.0
  %663 = vmatprep.subr.mxu0 0.0
  %664 = vmatpush1.msra.mxu0 0.0
  %665 = vmatprep.subr.mxu0 0.0
  %666 = vmatpush1.msra.mxu0 0.0
  %667 = vmatprep.subr.mxu0 0.0
  %668 = vmatpush1.msra.mxu0 0.0
  %669 = vmatprep.subr.mxu0 0.0
  %670 = vmatpush1.msra.mxu0 0.0
  %671 = vmatprep.subr.mxu0 0.0
  %672 = vmatpush1.msra.mxu0 0.0
  %673 = vmatprep.subr.mxu0 0.0
  %674 = vmatpush1.msra.mxu0 0.0
  %675 = vmatprep.subr.mxu0 0.0
  %676 = vmatpush1.msra.mxu0 0.0
  %677 = vmatprep.subr.mxu0 0.0
  %678 = vmatpush1.msra.mxu0 0.0
  %679 = vmatprep.subr.mxu0 0.0
  %680 = vmatpush1.msra.mxu0 0.0
  %681 = vmatprep.subr.mxu0 0.0
  %682 = vmatpush1.msra.mxu0 0.0
  %683 = vmatprep.subr.mxu0 0.0
  %684 = vmatpush1.msra.mxu0 0.0
  %685 = vmatprep.subr.mxu0 0.0
  %686 = vmatpush1.msra.mxu0 0.0
  %687 = vmatprep.subr.mxu0 0.0
  %688 = vmatpush1.msra.mxu0 0.0
  %689 = vmatprep.subr.mxu0 0.0
  %690 = vmatpush1.msra.mxu0 0.0
  %691 = vmatprep.mubr.f32.mxu0 0.0
  %692 = vmatmul.mubr.f32.gmra.mrb[0].mxu0 %v556
  %v693 = vpop.f32.mrb[0].mxu0
  %v694 = vadd.f32 0.0, %v693
  %v695 = vpop.f32.mrb[0].mxu0
  %696 = vdwg.mxu0
  %vm697 = vcmask 1040384
  %v698 = vsel %vm697, %v555, 0.0
  %699 = vadd.xlane.f32.xlu0 %v698
  %v700 = vpop.xlane.xlu0 %699
  %v701 = vsel %vm697, %v556, 0.0
  %702 = vadd.xlane.f32.xlu0 %v701
  %v703 = vpop.xlane.xlu0 %702
  %v704 = vadd.f32 %v700, 1e-06
  %v705 = vadd.f32 %v703, 1e-06
  %v706 = vrcp.pop %v704
  %v707 = vmul.f32 %v624, %v706
  %v708 = vrcp.pop %v705
  %v709 = vmul.f32 %v694, %v708
  %v711 = vsel %vm209, %v707, 0
  %v714 = vsel %vm209, %v539, 0
  %v717 = vsel %vm209, %v540, 0
  %v720 = vsel %vm209, %v541, 0
  %v723 = vsel %vm209, %v542, 0
  %v726 = vsel %vm209, %v543, 0
  %v729 = vsel %vm209, %v544, 0
  %v732 = vsel %vm209, %v545, 0
  %v735 = vsel %vm209, %v546, 0
  %737 = vmatprep.subr.mxu0 0.0
  %738 = vmatpush1.xpose.msra.mxu0 %v714
  %739 = vmatprep.subr.mxu0 0.0
  %740 = vmatpush1.xpose.msra.mxu0 %v717
  %741 = vmatprep.subr.mxu0 0.0
  %742 = vmatpush1.xpose.msra.mxu0 %v720
  %743 = vmatprep.subr.mxu0 0.0
  %744 = vmatpush1.xpose.msra.mxu0 %v723
  %745 = vmatprep.subr.mxu0 0.0
  %746 = vmatpush1.xpose.msra.mxu0 %v726
  %747 = vmatprep.subr.mxu0 0.0
  %748 = vmatpush1.xpose.msra.mxu0 %v729
  %749 = vmatprep.subr.mxu0 0.0
  %750 = vmatpush1.xpose.msra.mxu0 %v732
  %751 = vmatprep.subr.mxu0 0.0
  %752 = vmatpush1.xpose.msra.mxu0 %v735
  %753 = vmatprep.subr.mxu0 0.0
  %754 = vmatpush1.xpose.msra.mxu0 0.0
  %755 = vmatprep.subr.mxu0 0.0
  %756 = vmatpush1.xpose.msra.mxu0 0.0
  %757 = vmatprep.subr.mxu0 0.0
  %758 = vmatpush1.xpose.msra.mxu0 0.0
  %759 = vmatprep.subr.mxu0 0.0
  %760 = vmatpush1.xpose.msra.mxu0 0.0
  %761 = vmatprep.subr.mxu0 0.0
  %762 = vmatpush1.xpose.msra.mxu0 0.0
  %763 = vmatprep.subr.mxu0 0.0
  %764 = vmatpush1.xpose.msra.mxu0 0.0
  %765 = vmatprep.subr.mxu0 0.0
  %766 = vmatpush1.xpose.msra.mxu0 0.0
  %767 = vmatprep.subr.mxu0 0.0
  %768 = vmatpush1.xpose.msra.mxu0 0.0
  %769 = vmatprep.subr.mxu0 0.0
  %770 = vmatpush1.xpose.msra.mxu0 0.0
  %771 = vmatprep.subr.mxu0 0.0
  %772 = vmatpush1.xpose.msra.mxu0 0.0
  %773 = vmatprep.subr.mxu0 0.0
  %774 = vmatpush1.xpose.msra.mxu0 0.0
  %775 = vmatprep.subr.mxu0 0.0
  %776 = vmatpush1.xpose.msra.mxu0 0.0
  %777 = vmatprep.subr.mxu0 0.0
  %778 = vmatpush1.xpose.msra.mxu0 0.0
  %779 = vmatprep.subr.mxu0 0.0
  %780 = vmatpush1.xpose.msra.mxu0 0.0
  %781 = vmatprep.subr.mxu0 0.0
  %782 = vmatpush1.xpose.msra.mxu0 0.0
  %783 = vmatprep.subr.mxu0 0.0
  %784 = vmatpush1.xpose.msra.mxu0 0.0
  %785 = vmatprep.subr.mxu0 0.0
  %786 = vmatpush1.xpose.msra.mxu0 0.0
  %787 = vmatprep.subr.mxu0 0.0
  %788 = vmatpush1.xpose.msra.mxu0 0.0
  %789 = vmatprep.subr.mxu0 0.0
  %790 = vmatpush1.xpose.msra.mxu0 0.0
  %791 = vmatprep.subr.mxu0 0.0
  %792 = vmatpush1.xpose.msra.mxu0 0.0
  %793 = vmatprep.subr.mxu0 0.0
  %794 = vmatpush1.xpose.msra.mxu0 0.0
  %795 = vmatprep.subr.mxu0 0.0
  %796 = vmatpush1.xpose.msra.mxu0 0.0
  %797 = vmatprep.subr.mxu0 0.0
  %798 = vmatpush1.xpose.msra.mxu0 0.0
  %799 = vmatprep.subr.mxu0 0.0
  %800 = vmatpush1.xpose.msra.mxu0 0.0
  %801 = vmatprep.mubr.f32.mxu0 0.0
  %802 = vmatmul.mubr.f32.gmra.mrb[0].mxu0 %v711
  %v803 = vpop.f32.mrb[0].mxu0
  %v804 = vadd.f32 0.0, %v803
  %v805 = vpop.f32.mrb[0].mxu0
  %806 = vdwg.mxu0
  %v808 = vsel %vm209, %v709, 0
  %v811 = vsel %vm209, %v547, 0
  %v814 = vsel %vm209, %v548, 0
  %v817 = vsel %vm209, %v549, 0
  %v820 = vsel %vm209, %v550, 0
  %v823 = vsel %vm209, %v551, 0
  %v826 = vsel %vm209, %v552, 0
  %v829 = vsel %vm209, %v553, 0
  %v832 = vsel %vm209, %v554, 0
  %834 = vmatprep.subr.mxu0 0.0
  %835 = vmatpush1.xpose.msra.mxu0 %v811
  %836 = vmatprep.subr.mxu0 0.0
  %837 = vmatpush1.xpose.msra.mxu0 %v814
  %838 = vmatprep.subr.mxu0 0.0
  %839 = vmatpush1.xpose.msra.mxu0 %v817
  %840 = vmatprep.subr.mxu0 0.0
  %841 = vmatpush1.xpose.msra.mxu0 %v820
  %842 = vmatprep.subr.mxu0 0.0
  %843 = vmatpush1.xpose.msra.mxu0 %v823
  %844 = vmatprep.subr.mxu0 0.0
  %845 = vmatpush1.xpose.msra.mxu0 %v826
  %846 = vmatprep.subr.mxu0 0.0
  %847 = vmatpush1.xpose.msra.mxu0 %v829
  %848 = vmatprep.subr.mxu0 0.0
  %849 = vmatpush1.xpose.msra.mxu0 %v832
  %850 = vmatprep.subr.mxu0 0.0
  %851 = vmatpush1.xpose.msra.mxu0 0.0
  %852 = vmatprep.subr.mxu0 0.0
  %853 = vmatpush1.xpose.msra.mxu0 0.0
  %854 = vmatprep.subr.mxu0 0.0
  %855 = vmatpush1.xpose.msra.mxu0 0.0
  %856 = vmatprep.subr.mxu0 0.0
  %857 = vmatpush1.xpose.msra.mxu0 0.0
  %858 = vmatprep.subr.mxu0 0.0
  %859 = vmatpush1.xpose.msra.mxu0 0.0
  %860 = vmatprep.subr.mxu0 0.0
  %861 = vmatpush1.xpose.msra.mxu0 0.0
  %862 = vmatprep.subr.mxu0 0.0
  %863 = vmatpush1.xpose.msra.mxu0 0.0
  %864 = vmatprep.subr.mxu0 0.0
  %865 = vmatpush1.xpose.msra.mxu0 0.0
  %866 = vmatprep.subr.mxu0 0.0
  %867 = vmatpush1.xpose.msra.mxu0 0.0
  %868 = vmatprep.subr.mxu0 0.0
  %869 = vmatpush1.xpose.msra.mxu0 0.0
  %870 = vmatprep.subr.mxu0 0.0
  %871 = vmatpush1.xpose.msra.mxu0 0.0
  %872 = vmatprep.subr.mxu0 0.0
  %873 = vmatpush1.xpose.msra.mxu0 0.0
  %874 = vmatprep.subr.mxu0 0.0
  %875 = vmatpush1.xpose.msra.mxu0 0.0
  %876 = vmatprep.subr.mxu0 0.0
  %877 = vmatpush1.xpose.msra.mxu0 0.0
  %878 = vmatprep.subr.mxu0 0.0
  %879 = vmatpush1.xpose.msra.mxu0 0.0
  %880 = vmatprep.subr.mxu0 0.0
  %881 = vmatpush1.xpose.msra.mxu0 0.0
  %882 = vmatprep.subr.mxu0 0.0
  %883 = vmatpush1.xpose.msra.mxu0 0.0
  %884 = vmatprep.subr.mxu0 0.0
  %885 = vmatpush1.xpose.msra.mxu0 0.0
  %886 = vmatprep.subr.mxu0 0.0
  %887 = vmatpush1.xpose.msra.mxu0 0.0
  %888 = vmatprep.subr.mxu0 0.0
  %889 = vmatpush1.xpose.msra.mxu0 0.0
  %890 = vmatprep.subr.mxu0 0.0
  %891 = vmatpush1.xpose.msra.mxu0 0.0
  %892 = vmatprep.subr.mxu0 0.0
  %893 = vmatpush1.xpose.msra.mxu0 0.0
  %894 = vmatprep.subr.mxu0 0.0
  %895 = vmatpush1.xpose.msra.mxu0 0.0
  %896 = vmatprep.subr.mxu0 0.0
  %897 = vmatpush1.xpose.msra.mxu0 0.0
  %898 = vmatprep.mubr.f32.mxu0 0.0
  %899 = vmatmul.mubr.f32.gmra.mrb[0].mxu0 %v808
  %v900 = vpop.f32.mrb[0].mxu0
  %v901 = vadd.f32 0.0, %v900
  %v902 = vpop.f32.mrb[0].mxu0
  %903 = vdwg.mxu0
  %v906 = vrot.slane %v901, 7
  %vm907 = vcmask 1041409
  %v908 = vsel %vm907, %v906, %v804
  %vm910 = vcmask 517120
  %911 = vst.msk [vmem:[%s4] sm:$0x3] %vm910, %v908
  // Predicated region
  $region18: #{forward.6} parent=0 // pred_check
    _
  $region19: #{forward.6} parent=0 // pred_check_branch
    %913 = sbr.rel (0) target = $region21
  $region20: #{forward.6} parent=0 // pred_region
    _
  $region21: #{forward.6} parent=0 // pred_fallthru
    _
  // Predicated region
  $region22: #{forward.6} parent=0 // pred_check
    _
  $region23: #{forward.6} parent=0 // pred_check_branch
    %915 = sbr.rel (0) target = $region25
  $region24: #{forward.6} parent=0 // pred_region
    _
  $region25: #{forward.6} parent=0 // pred_fallthru
    _

// kernel: forward.7
$region0: #{forward.7}
  #allocation0 [shape = 'u32[]', space=smem, size = 0x4, offset = 0x4, fixed_abs, tag = 'smem constant byte address 0x4 - core index']
  #allocation1 [shape = 'u32[144,128]{1,0:T(1,128)}', space=vmem, size = 0x12000, scoped, tag = 'internal scratch']
  #allocation2 [shape = 'f32[1]{0:T(128)S(6)}', space=smem, size = 0x200, scoped, tag = 'scoped memory for forward.7']
  %s0 = inlined_call_operand.vmem [shape: f32[2,2,16], index: 0, kind: input, shape index: {}]
  %s1 = inlined_call_operand.vmem [shape: f32[2,2,32], index: 1, kind: input, shape index: {}]
  %s2 = inlined_call_operand.vmem [shape: f32[2,1,16], index: 2, kind: input, shape index: {}]
  %s3 = inlined_call_operand.vmem [shape: f32[2,1,32], index: 3, kind: input, shape index: {}]
  %s4 = inlined_call_operand.vmem [shape: f32[2,2,4], index: 4, kind: input, shape index: {}]
  %s5 = inlined_call_operand.vmem [shape: f32[2,1,8,4], index: 5, kind: input, shape index: {}]
  %s6 = inlined_call_operand.vmem [shape: f32[2,16,32], index: 6, kind: input, shape index: {}]
  %s7 = inlined_call_operand.vmem [shape: f32[2,32,32], index: 7, kind: input, shape index: {}]
  %s8 = inlined_call_operand.vmem [shape: f32[4,4,32], index: 8, kind: input, shape index: {}]
  %s9 = inlined_call_operand.vmem [shape: f32[8,32], index: 9, kind: input, shape index: {}]
  %s10 = inlined_call_operand.<no memory space> [shape: f32[1], index: 10, kind: input, shape index: {}]
  %s11 = inlined_call_operand.hbm [shape: f32[2,1,8], index: 11, kind: output, shape index: {}]
  %s12 = sld [smem:[#allocation0]]
  $region77: #{forward.7} parent=0
    _
  %s14 = ssub.s32 1, %s12
  %s15 = scalar_select 0, %s14, %s12
  %16 = sst [smem:[#allocation2]] %s10
  $region1: #{forward.7} parent=0
    #allocation3 [shape = 'u8[1024]{0}', space=vmem, size = 0x400, scoped, tag = 'output window, operand 0']
    #allocation4 [shape = 's32[2]{0}', space=sflag, size = 0x8, scoped, tag = 'scoped memory for forward.7']
    %17 = vsyncpa [#allocation4], 0
    %s18 = scalar_lea.sflag [#allocation4], 1
    %19 = vsyncpa %s18, 0
    loop: start=0, step=1, limit=4
    $region2: #{forward.7} parent=1 // loop_pre_header
      _
    $region3: #{forward.7} parent=1 // loop_header
      %s21 = sphi 0, %s25
      %p22 = scmp.ge.s32.totalorder %s21, 4
      %s31 = sphi 0, %s33
      %s34 = sphi 0, %s31
      %s35 = sphi 0, %s34
      %s51 = sphi 0, %s35
      %s57 = sphi 0, %s59
      %s60 = sphi 0, %s57
      %s61 = sphi 0, %s60
      %s77 = sphi 0, %s61
      %s83 = sphi 0, %s85
      %s86 = sphi 0, %s83
      %s87 = sphi 0, %s86
      %s103 = sphi 0, %s87
      %s109 = sphi 0, %s111
      %s112 = sphi 0, %s109
      %s113 = sphi 0, %s112
      %s129 = sphi 0, %s113
      %s135 = sphi 0, %s137
      %s138 = sphi 0, %s135
      %s139 = sphi 0, %s138
      %s155 = sphi 0, %s139
      %s161 = sphi 0, %s163
      %s164 = sphi 0, %s161
      %s165 = sphi 0, %s164
      %s181 = sphi 0, %s165
      %s185 = sphi 0, %s185
      %s187 = sphi 0, %s185
      %s188 = sphi 0, %s187
      %s202 = sphi 0, %s188
      %s206 = sphi 0, %s206
      %s208 = sphi 0, %s206
      %s209 = sphi 0, %s208
      %s223 = sphi 0, %s209
      %s227 = sphi 0, %s227
      %s229 = sphi 0, %s227
      %s230 = sphi 0, %s229
      %s244 = sphi 0, %s230
      %s248 = sphi 0, %s248
      %s250 = sphi 0, %s248
      %s251 = sphi 0, %s250
      %s265 = sphi 0, %s251
      %s269 = sphi 0, %s269
      %s271 = sphi 0, %s269
      %s272 = sphi 0, %s271
      %s286 = sphi 0, %s272
      %s292 = sphi 0, %s294
      %s295 = sphi 0, %s292
      %s296 = sphi 0, %s295
      %s312 = sphi 0, %s296
    $region4: #{forward.7} parent=1 // loop_header_branch
      %24 = sbr.rel (%p22) target = $region8
    $region5: #{forward.7} parent=1 // loop_body
      %s26 = ssub.s32 %s21, 1
      %s27 = ssub.s32 %s21, 2
      %s28 = sadd.s32 %s21, 1
      %s29 = ssub.s32 %s21, %s28
      %p30 = scmp.eq.s32.totalorder %s29, 0
      %s32 = sadd.s32 %s31, 1
      %s33 = scalar_select %p30, %s31, %s32
      %p36 = pneg %p30
      %p37 = scmp.eq.s32.totalorder %s21, 1
      %p38 = por %p36, %p37
      %p39 = scmp.ne.s32.totalorder %s31, %s34
      %p40 = scmp.eq.s32.totalorder %s21, 0
      %p41 = por %p39, %p40
      %p42 = scmp.ne.s32.totalorder %s31, %s34
      %p43 = scmp.eq.s32.totalorder %s26, 1
      %p44 = por %p42, %p43
      %p45 = scmp.ne.s32.totalorder %s34, %s35
      %p46 = scmp.eq.s32.totalorder %s26, 0
      %p47 = por %p45, %p46
      %p48 = scmp.ne.s32.totalorder %s34, %s35
      %p49 = scmp.eq.s32.totalorder %s27, 1
      %p50 = por %p48, %p49
      %p52 = scmp.ne.s32.totalorder %s35, %s51
      %p53 = scmp.eq.s32.totalorder %s27, 0
      %p54 = por %p52, %p53
      %s55 = ssub.s32 %s21, %s28
      %p56 = scmp.eq.s32.totalorder %s55, 0
      %s58 = sadd.s32 %s57, 1
      %s59 = scalar_select %p56, %s57, %s58
      %p62 = pneg %p56
      %p63 = scmp.eq.s32.totalorder %s21, 1
      %p64 = por %p62, %p63
      %p65 = scmp.ne.s32.totalorder %s57, %s60
      %p66 = scmp.eq.s32.totalorder %s21, 0
      %p67 = por %p65, %p66
      %p68 = scmp.ne.s32.totalorder %s57, %s60
      %p69 = scmp.eq.s32.totalorder %s26, 1
      %p70 = por %p68, %p69
      %p71 = scmp.ne.s32.totalorder %s60, %s61
      %p72 = scmp.eq.s32.totalorder %s26, 0
      %p73 = por %p71, %p72
      %p74 = scmp.ne.s32.totalorder %s60, %s61
      %p75 = scmp.eq.s32.totalorder %s27, 1
      %p76 = por %p74, %p75
      %p78 = scmp.ne.s32.totalorder %s61, %s77
      %p79 = scmp.eq.s32.totalorder %s27, 0
      %p80 = por %p78, %p79
      %s81 = ssub.s32 %s21, %s28
      %p82 = scmp.eq.s32.totalorder %s81, 0
      %s84 = sadd.s32 %s83, 1
      %s85 = scalar_select %p82, %s83, %s84
      %p88 = pneg %p82
      %p89 = scmp.eq.s32.totalorder %s21, 1
      %p90 = por %p88, %p89
      %p91 = scmp.ne.s32.totalorder %s83, %s86
      %p92 = scmp.eq.s32.totalorder %s21, 0
      %p93 = por %p91, %p92
      %p94 = scmp.ne.s32.totalorder %s83, %s86
      %p95 = scmp.eq.s32.totalorder %s26, 1
      %p96 = por %p94, %p95
      %p97 = scmp.ne.s32.totalorder %s86, %s87
      %p98 = scmp.eq.s32.totalorder %s26, 0
      %p99 = por %p97, %p98
      %p100 = scmp.ne.s32.totalorder %s86, %s87
      %p101 = scmp.eq.s32.totalorder %s27, 1
      %p102 = por %p100, %p101
      %p104 = scmp.ne.s32.totalorder %s87, %s103
      %p105 = scmp.eq.s32.totalorder %s27, 0
      %p106 = por %p104, %p105
      %s107 = ssub.s32 %s21, %s28
      %p108 = scmp.eq.s32.totalorder %s107, 0
      %s110 = sadd.s32 %s109, 1
      %s111 = scalar_select %p108, %s109, %s110
      %p114 = pneg %p108
      %p115 = scmp.eq.s32.totalorder %s21, 1
      %p116 = por %p114, %p115
      %p117 = scmp.ne.s32.totalorder %s109, %s112
      %p118 = scmp.eq.s32.totalorder %s21, 0
      %p119 = por %p117, %p118
      %p120 = scmp.ne.s32.totalorder %s109, %s112
      %p121 = scmp.eq.s32.totalorder %s26, 1
      %p122 = por %p120, %p121
      %p123 = scmp.ne.s32.totalorder %s112, %s113
      %p124 = scmp.eq.s32.totalorder %s26, 0
      %p125 = por %p123, %p124
      %p126 = scmp.ne.s32.totalorder %s112, %s113
      %p127 = scmp.eq.s32.totalorder %s27, 1
      %p128 = por %p126, %p127
      %p130 = scmp.ne.s32.totalorder %s113, %s129
      %p131 = scmp.eq.s32.totalorder %s27, 0
      %p132 = por %p130, %p131
      %s133 = ssub.s32 %s21, %s28
      %p134 = scmp.eq.s32.totalorder %s133, 0
      %s136 = sadd.s32 %s135, 1
      %s137 = scalar_select %p134, %s135, %s136
      %p140 = pneg %p134
      %p141 = scmp.eq.s32.totalorder %s21, 1
      %p142 = por %p140, %p141
      %p143 = scmp.ne.s32.totalorder %s135, %s138
      %p144 = scmp.eq.s32.totalorder %s21, 0
      %p145 = por %p143, %p144
      %p146 = scmp.ne.s32.totalorder %s135, %s138
      %p147 = scmp.eq.s32.totalorder %s26, 1
      %p148 = por %p146, %p147
      %p149 = scmp.ne.s32.totalorder %s138, %s139
      %p150 = scmp.eq.s32.totalorder %s26, 0
      %p151 = por %p149, %p150
      %p152 = scmp.ne.s32.totalorder %s138, %s139
      %p153 = scmp.eq.s32.totalorder %s27, 1
      %p154 = por %p152, %p153
      %p156 = scmp.ne.s32.totalorder %s139, %s155
      %p157 = scmp.eq.s32.totalorder %s27, 0
      %p158 = por %p156, %p157
      %s159 = ssub.s32 %s21, %s28
      %p160 = scmp.eq.s32.totalorder %s159, 0
      %s162 = sadd.s32 %s161, 1
      %s163 = scalar_select %p160, %s161, %s162
      %p166 = pneg %p160
      %p167 = scmp.eq.s32.totalorder %s21, 1
      %p168 = por %p166, %p167
      %p169 = scmp.ne.s32.totalorder %s161, %s164
      %p170 = scmp.eq.s32.totalorder %s21, 0
      %p171 = por %p169, %p170
      %p172 = scmp.ne.s32.totalorder %s161, %s164
      %p173 = scmp.eq.s32.totalorder %s26, 1
      %p174 = por %p172, %p173
      %p175 = scmp.ne.s32.totalorder %s164, %s165
      %p176 = scmp.eq.s32.totalorder %s26, 0
      %p177 = por %p175, %p176
      %p178 = scmp.ne.s32.totalorder %s164, %s165
      %p179 = scmp.eq.s32.totalorder %s27, 1
      %p180 = por %p178, %p179
      %p182 = scmp.ne.s32.totalorder %s165, %s181
      %p183 = scmp.eq.s32.totalorder %s27, 0
      %p184 = por %p182, %p183
      %s186 = sadd.s32 %s185, 1
      %p189 = scmp.eq.s32.totalorder %s21, 1
      %p190 = scmp.ne.s32.totalorder %s185, %s187
      %p191 = scmp.eq.s32.totalorder %s21, 0
      %p192 = por %p190, %p191
      %p193 = scmp.ne.s32.totalorder %s185, %s187
      %p194 = scmp.eq.s32.totalorder %s26, 1
      %p195 = por %p193, %p194
      %p196 = scmp.ne.s32.totalorder %s187, %s188
      %p197 = scmp.eq.s32.totalorder %s26, 0
      %p198 = por %p196, %p197
      %p199 = scmp.ne.s32.totalorder %s187, %s188
      %p200 = scmp.eq.s32.totalorder %s27, 1
      %p201 = por %p199, %p200
      %p203 = scmp.ne.s32.totalorder %s188, %s202
      %p204 = scmp.eq.s32.totalorder %s27, 0
      %p205 = por %p203, %p204
      %s207 = sadd.s32 %s206, 1
      %p210 = scmp.eq.s32.totalorder %s21, 1
      %p211 = scmp.ne.s32.totalorder %s206, %s208
      %p212 = scmp.eq.s32.totalorder %s21, 0
      %p213 = por %p211, %p212
      %p214 = scmp.ne.s32.totalorder %s206, %s208
      %p215 = scmp.eq.s32.totalorder %s26, 1
      %p216 = por %p214, %p215
      %p217 = scmp.ne.s32.totalorder %s208, %s209
      %p218 = scmp.eq.s32.totalorder %s26, 0
      %p219 = por %p217, %p218
      %p220 = scmp.ne.s32.totalorder %s208, %s209
      %p221 = scmp.eq.s32.totalorder %s27, 1
      %p222 = por %p220, %p221
      %p224 = scmp.ne.s32.totalorder %s209, %s223
      %p225 = scmp.eq.s32.totalorder %s27, 0
      %p226 = por %p224, %p225
      %s228 = sadd.s32 %s227, 1
      %p231 = scmp.eq.s32.totalorder %s21, 1
      %p232 = scmp.ne.s32.totalorder %s227, %s229
      %p233 = scmp.eq.s32.totalorder %s21, 0
      %p234 = por %p232, %p233
      %p235 = scmp.ne.s32.totalorder %s227, %s229
      %p236 = scmp.eq.s32.totalorder %s26, 1
      %p237 = por %p235, %p236
      %p238 = scmp.ne.s32.totalorder %s229, %s230
      %p239 = scmp.eq.s32.totalorder %s26, 0
      %p240 = por %p238, %p239
      %p241 = scmp.ne.s32.totalorder %s229, %s230
      %p242 = scmp.eq.s32.totalorder %s27, 1
      %p243 = por %p241, %p242
      %p245 = scmp.ne.s32.totalorder %s230, %s244
      %p246 = scmp.eq.s32.totalorder %s27, 0
      %p247 = por %p245, %p246
      %s249 = sadd.s32 %s248, 1
      %p252 = scmp.eq.s32.totalorder %s21, 1
      %p253 = scmp.ne.s32.totalorder %s248, %s250
      %p254 = scmp.eq.s32.totalorder %s21, 0
      %p255 = por %p253, %p254
      %p256 = scmp.ne.s32.totalorder %s248, %s250
      %p257 = scmp.eq.s32.totalorder %s26, 1
      %p258 = por %p256, %p257
      %p259 = scmp.ne.s32.totalorder %s250, %s251
      %p260 = scmp.eq.s32.totalorder %s26, 0
      %p261 = por %p259, %p260
      %p262 = scmp.ne.s32.totalorder %s250, %s251
      %p263 = scmp.eq.s32.totalorder %s27, 1
      %p264 = por %p262, %p263
      %p266 = scmp.ne.s32.totalorder %s251, %s265
      %p267 = scmp.eq.s32.totalorder %s27, 0
      %p268 = por %p266, %p267
      %s270 = sadd.s32 %s269, 1
      %p273 = scmp.eq.s32.totalorder %s21, 1
      %p274 = scmp.ne.s32.totalorder %s269, %s271
      %p275 = scmp.eq.s32.totalorder %s21, 0
      %p276 = por %p274, %p275
      %p277 = scmp.ne.s32.totalorder %s269, %s271
      %p278 = scmp.eq.s32.totalorder %s26, 1
      %p279 = por %p277, %p278
      %p280 = scmp.ne.s32.totalorder %s271, %s272
      %p281 = scmp.eq.s32.totalorder %s26, 0
      %p282 = por %p280, %p281
      %p283 = scmp.ne.s32.totalorder %s271, %s272
      %p284 = scmp.eq.s32.totalorder %s27, 1
      %p285 = por %p283, %p284
      %p287 = scmp.ne.s32.totalorder %s272, %s286
      %p288 = scmp.eq.s32.totalorder %s27, 0
      %p289 = por %p287, %p288
      %s290 = ssub.s32 %s21, %s28
      %p291 = scmp.eq.s32.totalorder %s290, 0
      %s293 = sadd.s32 %s292, 1
      %s294 = scalar_select %p291, %s292, %s293
      %p297 = pneg %p291
      %p298 = scmp.eq.s32.totalorder %s21, 1
      %p299 = por %p297, %p298
      %p300 = scmp.ne.s32.totalorder %s292, %s295
      %p301 = scmp.eq.s32.totalorder %s21, 0
      %p302 = por %p300, %p301
      %p303 = scmp.ne.s32.totalorder %s292, %s295
      %p304 = scmp.eq.s32.totalorder %s26, 1
      %p305 = por %p303, %p304
      %p306 = scmp.ne.s32.totalorder %s295, %s296
      %p307 = scmp.eq.s32.totalorder %s26, 0
      %p308 = por %p306, %p307
      %p309 = scmp.ne.s32.totalorder %s295, %s296
      %p310 = scmp.eq.s32.totalorder %s27, 1
      %p311 = por %p309, %p310
      %p313 = scmp.ne.s32.totalorder %s296, %s312
      %p314 = scmp.eq.s32.totalorder %s27, 0
      %p315 = por %p313, %p314
      %p316 = scmp.le.s32.totalorder 1, %s21
      %p317 = scmp.lt.s32.totalorder %s21, 3
      %p318 = pnand %p316, %p317
      %p319 = pneg %p318
      // Predicated region
      $region9: #{forward.7} parent=5 // pred_check
        _
      $region10: #{forward.7} parent=5 // pred_check_branch
        %321 = sbr.rel (%p318) target = $region12
      $region11: #{forward.7} parent=5 // pred_region
        %s322 = ssub.s32 %s21, 1
        // Predicated region
        $region13: #{forward.7} parent=11 // pred_check
          %p323 = pneg %p198
        $region14: #{forward.7} parent=11 // pred_check_branch
          %325 = sbr.rel (%p323) target = $region16
        $region15: #{forward.7} parent=11 // pred_region
          _
        $region16: #{forward.7} parent=11 // pred_fallthru
          _
        // Predicated region
        $region17: #{forward.7} parent=11 // pred_check
          %p326 = pneg %p219
        $region18: #{forward.7} parent=11 // pred_check_branch
          %328 = sbr.rel (%p326) target = $region20
        $region19: #{forward.7} parent=11 // pred_region
          _
        $region20: #{forward.7} parent=11 // pred_fallthru
          _
        // Predicated region
        $region21: #{forward.7} parent=11 // pred_check
          %p329 = pneg %p240
        $region22: #{forward.7} parent=11 // pred_check_branch
          %331 = sbr.rel (%p329) target = $region24
        $region23: #{forward.7} parent=11 // pred_region
          _
        $region24: #{forward.7} parent=11 // pred_fallthru
          _
        // Predicated region
        $region25: #{forward.7} parent=11 // pred_check
          %p332 = pneg %p261
        $region26: #{forward.7} parent=11 // pred_check_branch
          %334 = sbr.rel (%p332) target = $region28
        $region27: #{forward.7} parent=11 // pred_region
          _
        $region28: #{forward.7} parent=11 // pred_fallthru
          _
        // Predicated region
        $region29: #{forward.7} parent=11 // pred_check
          %p335 = pneg %p282
        $region30: #{forward.7} parent=11 // pred_check_branch
          %337 = sbr.rel (%p335) target = $region32
        $region31: #{forward.7} parent=11 // pred_region
          _
        $region32: #{forward.7} parent=11 // pred_fallthru
          _
      $region12: #{forward.7} parent=5 // pred_fallthru
        _
      %p338 = scmp.lt.s32.totalorder %s21, 2
      // Predicated region
      $region33: #{forward.7} parent=5 // pred_check
        %p339 = pneg %p338
      $region34: #{forward.7} parent=5 // pred_check_branch
        %341 = sbr.rel (%p339) target = $region36
      $region35: #{forward.7} parent=5 // pred_region
        // Predicated region
        $region37: #{forward.7} parent=35 // pred_check
          %p342 = pneg %p41
        $region38: #{forward.7} parent=35 // pred_check_branch
          %344 = sbr.rel (%p342) target = $region40
        $region39: #{forward.7} parent=35 // pred_region
          %p345 = scmp.lt.s32.totalorder %s21, 1
          %s346 = scalar_select %p345, %s21, 1
          %s347 = smul.addr %s346, 2
          %s348 = scalar_lea.vmem %s0, %s347
        $region40: #{forward.7} parent=35 // pred_fallthru
          _
        // Predicated region
        $region41: #{forward.7} parent=35 // pred_check
          %p349 = pneg %p67
        $region42: #{forward.7} parent=35 // pred_check_branch
          %351 = sbr.rel (%p349) target = $region44
        $region43: #{forward.7} parent=35 // pred_region
          %p352 = scmp.lt.s32.totalorder %s21, 1
          %s353 = scalar_select %p352, %s21, 1
          %s354 = smul.addr %s353, 2
          %s355 = scalar_lea.vmem %s1, %s354
        $region44: #{forward.7} parent=35 // pred_fallthru
          _
        // Predicated region
        $region45: #{forward.7} parent=35 // pred_check
          %p356 = pneg %p93
        $region46: #{forward.7} parent=35 // pred_check_branch
          %358 = sbr.rel (%p356) target = $region48
        $region47: #{forward.7} parent=35 // pred_region
          %p359 = scmp.lt.s32.totalorder %s21, 1
          %s360 = scalar_select %p359, %s21, 1
          %s361 = scalar_lea.vmem %s2, %s360
        $region48: #{forward.7} parent=35 // pred_fallthru
          _
        // Predicated region
        $region49: #{forward.7} parent=35 // pred_check
          %p362 = pneg %p119
        $region50: #{forward.7} parent=35 // pred_check_branch
          %364 = sbr.rel (%p362) target = $region52
        $region51: #{forward.7} parent=35 // pred_region
          %p365 = scmp.lt.s32.totalorder %s21, 1
          %s366 = scalar_select %p365, %s21, 1
          %s367 = scalar_lea.vmem %s3, %s366
        $region52: #{forward.7} parent=35 // pred_fallthru
          _
        // Predicated region
        $region53: #{forward.7} parent=35 // pred_check
          %p368 = pneg %p145
        $region54: #{forward.7} parent=35 // pred_check_branch
          %370 = sbr.rel (%p368) target = $region56
        $region55: #{forward.7} parent=35 // pred_region
          %p371 = scmp.lt.s32.totalorder %s21, 1
          %s372 = scalar_select %p371, %s21, 1
          %s373 = smul.addr %s372, 2
          %s374 = scalar_lea.vmem %s4, %s373
        $region56: #{forward.7} parent=35 // pred_fallthru
          _
        // Predicated region
        $region57: #{forward.7} parent=35 // pred_check
          %p375 = pneg %p171
        $region58: #{forward.7} parent=35 // pred_check_branch
          %377 = sbr.rel (%p375) target = $region60
        $region59: #{forward.7} parent=35 // pred_region
          %p378 = scmp.lt.s32.totalorder %s21, 1
          %s379 = scalar_select %p378, %s21, 1
          %s380 = smul.addr %s379, 8
          %s381 = scalar_lea.vmem %s5, %s380
        $region60: #{forward.7} parent=35 // pred_fallthru
          _
      $region36: #{forward.7} parent=5 // pred_fallthru
        _
      %p382 = scmp.le.s32.totalorder 1, %s21
      %p383 = scmp.lt.s32.totalorder %s21, 3
      %p384 = pnand %p382, %p383
      %p385 = pneg %p384
      // Predicated region
      $region61: #{forward.7} parent=5 // pred_check
        _
      $region62: #{forward.7} parent=5 // pred_check_branch
        %387 = sbr.rel (%p384) target = $region64
      $region63: #{forward.7} parent=5 // pred_region
        %s388 = ssub.s32 %s21, 1
        %p389 = scmp.lt.s32.totalorder %s26, 1
        %s390 = scalar_select %p389, %s26, 1
        %s391 = smul.addr %s390, 2
        %s392 = scalar_lea.vmem %s0, %s391
        %p393 = pneg %p47
        %p394 = pneg %p44
        %p395 = scmp.lt.s32.totalorder %s26, 1
        %s396 = scalar_select %p395, %s26, 1
        %s397 = smul.addr %s396, 2
        %s398 = scalar_lea.vmem %s1, %s397
        %p399 = pneg %p73
        %p400 = pneg %p70
        %p401 = scmp.lt.s32.totalorder %s26, 1
        %s402 = scalar_select %p401, %s26, 1
        %s403 = scalar_lea.vmem %s2, %s402
        %p404 = pneg %p99
        %p405 = pneg %p96
        %p406 = scmp.lt.s32.totalorder %s26, 1
        %s407 = scalar_select %p406, %s26, 1
        %s408 = scalar_lea.vmem %s3, %s407
        %p409 = pneg %p125
        %p410 = pneg %p122
        %p411 = scmp.lt.s32.totalorder %s26, 1
        %s412 = scalar_select %p411, %s26, 1
        %s413 = smul.addr %s412, 2
        %s414 = scalar_lea.vmem %s4, %s413
        %p415 = pneg %p151
        %p416 = pneg %p148
        %p417 = scmp.lt.s32.totalorder %s26, 1
        %s418 = scalar_select %p417, %s26, 1
        %s419 = smul.addr %s418, 8
        %s420 = scalar_lea.vmem %s5, %s419
        %p421 = pneg %p177
        %p422 = pneg %p174
        %p423 = pneg %p198
        %p424 = pneg %p195
        %p425 = pneg %p219
        %p426 = pneg %p216
        %p427 = pneg %p240
        %p428 = pneg %p237
        %p429 = pneg %p261
        %p430 = pneg %p258
        %p431 = pneg %p282
        %p432 = pneg %p279
        %p433 = pneg %p308
        %p434 = pneg %p305
        %s435 = sand.u32 %s295, 1
        %s436 = scalar_lea.sflag [#allocation4], %s435
        %s437 = sand.u32 %s295, 1
        %s438 = scalar_lea.vmem [#allocation3], %s437
        %p439 = scmp.lt.s32.totalorder %s26, 1
        %s440 = scalar_select %p439, %s26, 1
        %s441 = smul.addr %s440, 2
        %s442 = scalar_lea.vmem %s0, %s441
        %p443 = scmp.lt.s32.totalorder %s26, 1
        %s444 = scalar_select %p443, %s26, 1
        %s445 = smul.addr %s444, 2
        %s446 = scalar_lea.vmem %s1, %s445
        %p447 = scmp.lt.s32.totalorder %s26, 1
        %s448 = scalar_select %p447, %s26, 1
        %s449 = scalar_lea.vmem %s2, %s448
        %p450 = scmp.lt.s32.totalorder %s26, 1
        %s451 = scalar_select %p450, %s26, 1
        %s452 = scalar_lea.vmem %s3, %s451
        %p453 = scmp.lt.s32.totalorder %s26, 1
        %s454 = scalar_select %p453, %s26, 1
        %s455 = smul.addr %s454, 2
        %s456 = scalar_lea.vmem %s4, %s455
        %p457 = scmp.lt.s32.totalorder %s26, 1
        %s458 = scalar_select %p457, %s26, 1
        %s459 = smul.addr %s458, 8
        %s460 = scalar_lea.vmem %s5, %s459
        %v461 = vld [vmem:[%s456] sm:$0x3]
        %v462 = vld [vmem:[%s442] sm:$0x3]
        %v463 = vld [vmem:[%s6] sm:$0xff]
        %v464 = vld [vmem:[%s6 + $0x8] sm:$0xff]
        %v465 = vld [vmem:[%s8] sm:$0xf]
        %vm466 = vcmask 31744
        %v468 = vsel %vm466, %v461, 0
        %vm470 = vcmask 1043456
        %v472 = vsel %vm470, %v465, 0
        %474 = vmatprep.subr.mxu0 0.0
        %475 = vmatpush1.msra.mxu0 %v472
        %476 = vmatprep.subr.mxu0 0.0
        %477 = vmatpush1.msra.mxu0 0.0
        %478 = vmatprep.subr.mxu0 0.0
        %479 = vmatpush1.msra.mxu0 0.0
        %480 = vmatprep.subr.mxu0 0.0
        %481 = vmatpush1.msra.mxu0 0.0
        %482 = vmatprep.subr.mxu0 0.0
        %483 = vmatpush1.msra.mxu0 0.0
        %484 = vmatprep.subr.mxu0 0.0
        %485 = vmatpush1.msra.mxu0 0.0
        %486 = vmatprep.subr.mxu0 0.0
        %487 = vmatpush1.msra.mxu0 0.0
        %488 = vmatprep.subr.mxu0 0.0
        %489 = vmatpush1.msra.mxu0 0.0
        %490 = vmatprep.subr.mxu0 0.0
        %491 = vmatpush1.msra.mxu0 0.0
        %492 = vmatprep.subr.mxu0 0.0
        %493 = vmatpush1.msra.mxu0 0.0
        %494 = vmatprep.subr.mxu0 0.0
        %495 = vmatpush1.msra.mxu0 0.0
        %496 = vmatprep.subr.mxu0 0.0
        %497 = vmatpush1.msra.mxu0 0.0
        %498 = vmatprep.subr.mxu0 0.0
        %499 = vmatpush1.msra.mxu0 0.0
        %500 = vmatprep.subr.mxu0 0.0
        %501 = vmatpush1.msra.mxu0 0.0
        %502 = vmatprep.subr.mxu0 0.0
        %503 = vmatpush1.msra.mxu0 0.0
        %504 = vmatprep.subr.mxu0 0.0
        %505 = vmatpush1.msra.mxu0 0.0
        %506 = vmatprep.subr.mxu0 0.0
        %507 = vmatpush1.msra.mxu0 0.0
        %508 = vmatprep.subr.mxu0 0.0
        %509 = vmatpush1.msra.mxu0 0.0
        %510 = vmatprep.subr.mxu0 0.0
        %511 = vmatpush1.msra.mxu0 0.0
        %512 = vmatprep.subr.mxu0 0.0
        %513 = vmatpush1.msra.mxu0 0.0
        %514 = vmatprep.subr.mxu0 0.0
        %515 = vmatpush1.msra.mxu0 0.0
        %516 = vmatprep.subr.mxu0 0.0
        %517 = vmatpush1.msra.mxu0 0.0
        %518 = vmatprep.subr.mxu0 0.0
        %519 = vmatpush1.msra.mxu0 0.0
        %520 = vmatprep.subr.mxu0 0.0
        %521 = vmatpush1.msra.mxu0 0.0
        %522 = vmatprep.subr.mxu0 0.0
        %523 = vmatpush1.msra.mxu0 0.0
        %524 = vmatprep.subr.mxu0 0.0
        %525 = vmatpush1.msra.mxu0 0.0
        %526 = vmatprep.subr.mxu0 0.0
        %527 = vmatpush1.msra.mxu0 0.0
        %528 = vmatprep.subr.mxu0 0.0
        %529 = vmatpush1.msra.mxu0 0.0
        %530 = vmatprep.subr.mxu0 0.0
        %531 = vmatpush1.msra.mxu0 0.0
        %532 = vmatprep.subr.mxu0 0.0
        %533 = vmatpush1.msra.mxu0 0.0
        %534 = vmatprep.subr.mxu0 0.0
        %535 = vmatpush1.msra.mxu0 0.0
        %536 = vmatprep.subr.mxu0 0.0
        %537 = vmatpush1.msra.mxu0 0.0
        %538 = vmatprep.mubr.f32.mxu0 0.0
        %539 = vmatmul.mubr.f32.gmra.mrb[0].mxu0 %v468
        %v540 = vpop.f32.mrb[0].mxu0
        %v541 = vadd.f32 0.0, %v540
        %v542 = vpop.f32.mrb[0].mxu0
        %543 = vdwg.mxu0
        %vm544 = vcmask 130048
        %v546 = vsel %vm544, %v462, 0
        %548 = vmatprep.subr.mxu0 0.0
        %549 = vmatpush1.msra.mxu0 %v463
        %550 = vmatprep.subr.mxu0 0.0
        %551 = vmatpush1.msra.mxu0 %v464
        %552 = vmatprep.subr.mxu0 0.0
        %553 = vmatpush1.msra.mxu0 0.0
        %554 = vmatprep.subr.mxu0 0.0
        %555 = vmatpush1.msra.mxu0 0.0
        %556 = vmatprep.subr.mxu0 0.0
        %557 = vmatpush1.msra.mxu0 0.0
        %558 = vmatprep.subr.mxu0 0.0
        %559 = vmatpush1.msra.mxu0 0.0
        %560 = vmatprep.subr.mxu0 0.0
        %561 = vmatpush1.msra.mxu0 0.0
        %562 = vmatprep.subr.mxu0 0.0
        %563 = vmatpush1.msra.mxu0 0.0
        %564 = vmatprep.subr.mxu0 0.0
        %565 = vmatpush1.msra.mxu0 0.0
        %566 = vmatprep.subr.mxu0 0.0
        %567 = vmatpush1.msra.mxu0 0.0
        %568 = vmatprep.subr.mxu0 0.0
        %569 = vmatpush1.msra.mxu0 0.0
        %570 = vmatprep.subr.mxu0 0.0
        %571 = vmatpush1.msra.mxu0 0.0
        %572 = vmatprep.subr.mxu0 0.0
        %573 = vmatpush1.msra.mxu0 0.0
        %574 = vmatprep.subr.mxu0 0.0
        %575 = vmatpush1.msra.mxu0 0.0
        %576 = vmatprep.subr.mxu0 0.0
        %577 = vmatpush1.msra.mxu0 0.0
        %578 = vmatprep.subr.mxu0 0.0
        %579 = vmatpush1.msra.mxu0 0.0
        %580 = vmatprep.subr.mxu0 0.0
        %581 = vmatpush1.msra.mxu0 0.0
        %582 = vmatprep.subr.mxu0 0.0
        %583 = vmatpush1.msra.mxu0 0.0
        %584 = vmatprep.subr.mxu0 0.0
        %585 = vmatpush1.msra.mxu0 0.0
        %586 = vmatprep.subr.mxu0 0.0
        %587 = vmatpush1.msra.mxu0 0.0
        %588 = vmatprep.subr.mxu0 0.0
        %589 = vmatpush1.msra.mxu0 0.0
        %590 = vmatprep.subr.mxu0 0.0
        %591 = vmatpush1.msra.mxu0 0.0
        %592 = vmatprep.subr.mxu0 0.0
        %593 = vmatpush1.msra.mxu0 0.0
        %594 = vmatprep.subr.mxu0 0.0
        %595 = vmatpush1.msra.mxu0 0.0
        %596 = vmatprep.subr.mxu0 0.0
        %597 = vmatpush1.msra.mxu0 0.0
        %598 = vmatprep.subr.mxu0 0.0
        %599 = vmatpush1.msra.mxu0 0.0
        %600 = vmatprep.subr.mxu0 0.0
        %601 = vmatpush1.msra.mxu0 0.0
        %602 = vmatprep.subr.mxu0 0.0
        %603 = vmatpush1.msra.mxu0 0.0
        %604 = vmatprep.subr.mxu0 0.0
        %605 = vmatpush1.msra.mxu0 0.0
        %606 = vmatprep.subr.mxu0 0.0
        %607 = vmatpush1.msra.mxu0 0.0
        %608 = vmatprep.subr.mxu0 0.0
        %609 = vmatpush1.msra.mxu0 0.0
        %610 = vmatprep.subr.mxu0 0.0
        %611 = vmatpush1.msra.mxu0 0.0
        %612 = vmatprep.mubr.f32.mxu0 0.0
        %613 = vmatmul.mubr.f32.gmra.mrb[0].mxu0 %v546
        %v614 = vpop.f32.mrb[0].mxu0
        %v615 = vadd.f32 %v541, %v614
        %v616 = vpop.f32.mrb[0].mxu0
        %617 = vdwg.mxu0
        %v618 = vld [vmem:[%s9] sm:$0x1]
        %v619 = vlaneseq
        %v620 = vshrl.u32 %v619, 7
        %v621 = vsub.s32 0, %v620
        %v622 = vrot.slane %v618, %v621
        %v623 = vadd.f32 %v615, %v622
        %v624 = vld [vmem:[%s446] sm:$0x3]
        %v625 = vld [vmem:[%s7] sm:$0xff]
        %v626 = vld [vmem:[%s7 + $0x8] sm:$0xff]
        %v627 = vld [vmem:[%s7 + $0x10] sm:$0xff]
        %v628 = vld [vmem:[%s7 + $0x18] sm:$0xff]
        %s629 = scalar_lea.vmem %s8, 4
        %v630 = vld [vmem:[%s629] sm:$0xf]
        %v632 = vsel %vm470, %v630, 0
        %634 = vmatprep.subr.mxu0 0.0
        %635 = vmatpush1.msra.mxu0 %v632
        %636 = vmatprep.subr.mxu0 0.0
        %637 = vmatpush1.msra.mxu0 0.0
        %638 = vmatprep.subr.mxu0 0.0
        %639 = vmatpush1.msra.mxu0 0.0
        %640 = vmatprep.subr.mxu0 0.0
        %641 = vmatpush1.msra.mxu0 0.0
        %642 = vmatprep.subr.mxu0 0.0
        %643 = vmatpush1.msra.mxu0 0.0
        %644 = vmatprep.subr.mxu0 0.0
        %645 = vmatpush1.msra.mxu0 0.0
        %646 = vmatprep.subr.mxu0 0.0
        %647 = vmatpush1.msra.mxu0 0.0
        %648 = vmatprep.subr.mxu0 0.0
        %649 = vmatpush1.msra.mxu0 0.0
        %650 = vmatprep.subr.mxu0 0.0
        %651 = vmatpush1.msra.mxu0 0.0
        %652 = vmatprep.subr.mxu0 0.0
        %653 = vmatpush1.msra.mxu0 0.0
        %654 = vmatprep.subr.mxu0 0.0
        %655 = vmatpush1.msra.mxu0 0.0
        %656 = vmatprep.subr.mxu0 0.0
        %657 = vmatpush1.msra.mxu0 0.0
        %658 = vmatprep.subr.mxu0 0.0
        %659 = vmatpush1.msra.mxu0 0.0
        %660 = vmatprep.subr.mxu0 0.0
        %661 = vmatpush1.msra.mxu0 0.0
        %662 = vmatprep.subr.mxu0 0.0
        %663 = vmatpush1.msra.mxu0 0.0
        %664 = vmatprep.subr.mxu0 0.0
        %665 = vmatpush1.msra.mxu0 0.0
        %666 = vmatprep.subr.mxu0 0.0
        %667 = vmatpush1.msra.mxu0 0.0
        %668 = vmatprep.subr.mxu0 0.0
        %669 = vmatpush1.msra.mxu0 0.0
        %670 = vmatprep.subr.mxu0 0.0
        %671 = vmatpush1.msra.mxu0 0.0
        %672 = vmatprep.subr.mxu0 0.0
        %673 = vmatpush1.msra.mxu0 0.0
        %674 = vmatprep.subr.mxu0 0.0
        %675 = vmatpush1.msra.mxu0 0.0
        %676 = vmatprep.subr.mxu0 0.0
        %677 = vmatpush1.msra.mxu0 0.0
        %678 = vmatprep.subr.mxu0 0.0
        %679 = vmatpush1.msra.mxu0 0.0
        %680 = vmatprep.subr.mxu0 0.0
        %681 = vmatpush1.msra.mxu0 0.0
        %682 = vmatprep.subr.mxu0 0.0
        %683 = vmatpush1.msra.mxu0 0.0
        %684 = vmatprep.subr.mxu0 0.0
        %685 = vmatpush1.msra.mxu0 0.0
        %686 = vmatprep.subr.mxu0 0.0
        %687 = vmatpush1.msra.mxu0 0.0
        %688 = vmatprep.subr.mxu0 0.0
        %689 = vmatpush1.msra.mxu0 0.0
        %690 = vmatprep.subr.mxu0 0.0
        %691 = vmatpush1.msra.mxu0 0.0
        %692 = vmatprep.subr.mxu0 0.0
        %693 = vmatpush1.msra.mxu0 0.0
        %694 = vmatprep.subr.mxu0 0.0
        %695 = vmatpush1.msra.mxu0 0.0
        %696 = vmatprep.subr.mxu0 0.0
        %697 = vmatpush1.msra.mxu0 0.0
        %698 = vmatprep.mubr.f32.mxu0 0.0
        %699 = vmatmul.mubr.f32.gmra.mrb[0].mxu0 %v468
        %v700 = vpop.f32.mrb[0].mxu0
        %v701 = vadd.f32 0.0, %v700
        %v702 = vpop.f32.mrb[0].mxu0
        %703 = vdwg.mxu0
        %vm704 = vcmask 261120
        %v706 = vsel %vm704, %v624, 0
        %708 = vmatprep.subr.mxu0 0.0
        %709 = vmatpush1.msra.mxu0 %v625
        %710 = vmatprep.subr.mxu0 0.0
        %711 = vmatpush1.msra.mxu0 %v626
        %712 = vmatprep.subr.mxu0 0.0
        %713 = vmatpush1.msra.mxu0 %v627
        %714 = vmatprep.subr.mxu0 0.0
        %715 = vmatpush1.msra.mxu0 %v628
        %716 = vmatprep.subr.mxu0 0.0
        %717 = vmatpush1.msra.mxu0 0.0
        %718 = vmatprep.subr.mxu0 0.0
        %719 = vmatpush1.msra.mxu0 0.0
        %720 = vmatprep.subr.mxu0 0.0
        %721 = vmatpush1.msra.mxu0 0.0
        %722 = vmatprep.subr.mxu0 0.0
        %723 = vmatpush1.msra.mxu0 0.0
        %724 = vmatprep.subr.mxu0 0.0
        %725 = vmatpush1.msra.mxu0 0.0
        %726 = vmatprep.subr.mxu0 0.0
        %727 = vmatpush1.msra.mxu0 0.0
        %728 = vmatprep.subr.mxu0 0.0
        %729 = vmatpush1.msra.mxu0 0.0
        %730 = vmatprep.subr.mxu0 0.0
        %731 = vmatpush1.msra.mxu0 0.0
        %732 = vmatprep.subr.mxu0 0.0
        %733 = vmatpush1.msra.mxu0 0.0
        %734 = vmatprep.subr.mxu0 0.0
        %735 = vmatpush1.msra.mxu0 0.0
        %736 = vmatprep.subr.mxu0 0.0
        %737 = vmatpush1.msra.mxu0 0.0
        %738 = vmatprep.subr.mxu0 0.0
        %739 = vmatpush1.msra.mxu0 0.0
        %740 = vmatprep.subr.mxu0 0.0
        %741 = vmatpush1.msra.mxu0 0.0
        %742 = vmatprep.subr.mxu0 0.0
        %743 = vmatpush1.msra.mxu0 0.0
        %744 = vmatprep.subr.mxu0 0.0
        %745 = vmatpush1.msra.mxu0 0.0
        %746 = vmatprep.subr.mxu0 0.0
        %747 = vmatpush1.msra.mxu0 0.0
        %748 = vmatprep.subr.mxu0 0.0
        %749 = vmatpush1.msra.mxu0 0.0
        %750 = vmatprep.subr.mxu0 0.0
        %751 = vmatpush1.msra.mxu0 0.0
        %752 = vmatprep.subr.mxu0 0.0
        %753 = vmatpush1.msra.mxu0 0.0
        %754 = vmatprep.subr.mxu0 0.0
        %755 = vmatpush1.msra.mxu0 0.0
        %756 = vmatprep.subr.mxu0 0.0
        %757 = vmatpush1.msra.mxu0 0.0
        %758 = vmatprep.subr.mxu0 0.0
        %759 = vmatpush1.msra.mxu0 0.0
        %760 = vmatprep.subr.mxu0 0.0
        %761 = vmatpush1.msra.mxu0 0.0
        %762 = vmatprep.subr.mxu0 0.0
        %763 = vmatpush1.msra.mxu0 0.0
        %764 = vmatprep.subr.mxu0 0.0
        %765 = vmatpush1.msra.mxu0 0.0
        %766 = vmatprep.subr.mxu0 0.0
        %767 = vmatpush1.msra.mxu0 0.0
        %768 = vmatprep.subr.mxu0 0.0
        %769 = vmatpush1.msra.mxu0 0.0
        %770 = vmatprep.subr.mxu0 0.0
        %771 = vmatpush1.msra.mxu0 0.0
        %772 = vmatprep.mubr.f32.mxu0 0.0
        %773 = vmatmul.mubr.f32.gmra.mrb[0].mxu0 %v706
        %v774 = vpop.f32.mrb[0].mxu0
        %v775 = vadd.f32 %v701, %v774
        %v776 = vpop.f32.mrb[0].mxu0
        %777 = vdwg.mxu0
        %v778 = vld [vmem:[%s9 + $0x1] sm:$0x1]
        %v779 = vlaneseq
        %v780 = vshrl.u32 %v779, 7
        %v781 = vsub.s32 0, %v780
        %v782 = vrot.slane %v778, %v781
        %v783 = vadd.f32 %v775, %v782
        %v784 = vmax.f32 %v623, 0.0
        %vm785 = vcmask 254976
        %v786 = vsel %vm785, %v784, 0.0
        %v787 = vrot.slane %v786, 4
        %v788 = vadd.f32 %v786, %v787
        %v789 = vrot.slane %v788, 2
        %v790 = vadd.f32 %v788, %v789
        %v791 = vrot.slane %v790, 1
        %v792 = vadd.f32 %v790, %v791
        %v793 = vrcp.pop 2.0
        %v794 = vmul.f32 %v792, %v793
        %v795 = vmax.f32 %v783, 0.0
        %v796 = vsel %vm785, %v795, 0.0
        %v797 = vrot.slane %v796, 4
        %v798 = vadd.f32 %v796, %v797
        %v799 = vrot.slane %v798, 2
        %v800 = vadd.f32 %v798, %v799
        %v801 = vrot.slane %v800, 1
        %v802 = vadd.f32 %v800, %v801
        %v803 = vmul.f32 %v802, %v793
        %v804 = vld [vmem:[%s449] sm:$0x1]
        %s805 = scalar_lea.vmem %s6, 16
        %v806 = vld [vmem:[%s805] sm:$0xff]
        %v807 = vld [vmem:[%s805 + $0x8] sm:$0xff]
        %v808 = vld [vmem:[%s9 + $0x2] sm:$0x1]
        %v810 = vsel %vm544, %v804, 0
        %812 = vmatprep.subr.mxu0 0.0
        %813 = vmatpush1.msra.mxu0 %v806
        %814 = vmatprep.subr.mxu0 0.0
        %815 = vmatpush1.msra.mxu0 %v807
        %816 = vmatprep.subr.mxu0 0.0
        %817 = vmatpush1.msra.mxu0 0.0
        %818 = vmatprep.subr.mxu0 0.0
        %819 = vmatpush1.msra.mxu0 0.0
        %820 = vmatprep.subr.mxu0 0.0
        %821 = vmatpush1.msra.mxu0 0.0
        %822 = vmatprep.subr.mxu0 0.0
        %823 = vmatpush1.msra.mxu0 0.0
        %824 = vmatprep.subr.mxu0 0.0
        %825 = vmatpush1.msra.mxu0 0.0
        %826 = vmatprep.subr.mxu0 0.0
        %827 = vmatpush1.msra.mxu0 0.0
        %828 = vmatprep.subr.mxu0 0.0
        %829 = vmatpush1.msra.mxu0 0.0
        %830 = vmatprep.subr.mxu0 0.0
        %831 = vmatpush1.msra.mxu0 0.0
        %832 = vmatprep.subr.mxu0 0.0
        %833 = vmatpush1.msra.mxu0 0.0
        %834 = vmatprep.subr.mxu0 0.0
        %835 = vmatpush1.msra.mxu0 0.0
        %836 = vmatprep.subr.mxu0 0.0
        %837 = vmatpush1.msra.mxu0 0.0
        %838 = vmatprep.subr.mxu0 0.0
        %839 = vmatpush1.msra.mxu0 0.0
        %840 = vmatprep.subr.mxu0 0.0
        %841 = vmatpush1.msra.mxu0 0.0
        %842 = vmatprep.subr.mxu0 0.0
        %843 = vmatpush1.msra.mxu0 0.0
        %844 = vmatprep.subr.mxu0 0.0
        %845 = vmatpush1.msra.mxu0 0.0
        %846 = vmatprep.subr.mxu0 0.0
        %847 = vmatpush1.msra.mxu0 0.0
        %848 = vmatprep.subr.mxu0 0.0
        %849 = vmatpush1.msra.mxu0 0.0
        %850 = vmatprep.subr.mxu0 0.0
        %851 = vmatpush1.msra.mxu0 0.0
        %852 = vmatprep.subr.mxu0 0.0
        %853 = vmatpush1.msra.mxu0 0.0
        %854 = vmatprep.subr.mxu0 0.0
        %855 = vmatpush1.msra.mxu0 0.0
        %856 = vmatprep.subr.mxu0 0.0
        %857 = vmatpush1.msra.mxu0 0.0
        %858 = vmatprep.subr.mxu0 0.0
        %859 = vmatpush1.msra.mxu0 0.0
        %860 = vmatprep.subr.mxu0 0.0
        %861 = vmatpush1.msra.mxu0 0.0
        %862 = vmatprep.subr.mxu0 0.0
        %863 = vmatpush1.msra.mxu0 0.0
        %864 = vmatprep.subr.mxu0 0.0
        %865 = vmatpush1.msra.mxu0 0.0
        %866 = vmatprep.subr.mxu0 0.0
        %867 = vmatpush1.msra.mxu0 0.0
        %868 = vmatprep.subr.mxu0 0.0
        %869 = vmatpush1.msra.mxu0 0.0
        %870 = vmatprep.subr.mxu0 0.0
        %871 = vmatpush1.msra.mxu0 0.0
        %872 = vmatprep.subr.mxu0 0.0
        %873 = vmatpush1.msra.mxu0 0.0
        %874 = vmatprep.subr.mxu0 0.0
        %875 = vmatpush1.msra.mxu0 0.0
        %876 = vmatprep.mubr.f32.mxu0 0.0
        %877 = vmatmul.mubr.f32.gmra.mrb[0].mxu0 %v810
        %v878 = vpop.f32.mrb[0].mxu0
        %v879 = vadd.f32 %v808, %v878
        %v880 = vpop.f32.mrb[0].mxu0
        %881 = vdwg.mxu0
        %v882 = vmax.f32 %v879, 0.0
        %v883 = vld [vmem:[%s452] sm:$0x1]
        %s884 = scalar_lea.vmem %s7, 32
        %v885 = vld [vmem:[%s884] sm:$0xff]
        %v886 = vld [vmem:[%s884 + $0x8] sm:$0xff]
        %v887 = vld [vmem:[%s884 + $0x10] sm:$0xff]
        %v888 = vld [vmem:[%s884 + $0x18] sm:$0xff]
        %v889 = vld [vmem:[%s9 + $0x3] sm:$0x1]
        %v891 = vsel %vm704, %v883, 0
        %893 = vmatprep.subr.mxu0 0.0
        %894 = vmatpush1.msra.mxu0 %v885
        %895 = vmatprep.subr.mxu0 0.0
        %896 = vmatpush1.msra.mxu0 %v886
        %897 = vmatprep.subr.mxu0 0.0
        %898 = vmatpush1.msra.mxu0 %v887
        %899 = vmatprep.subr.mxu0 0.0
        %900 = vmatpush1.msra.mxu0 %v888
        %901 = vmatprep.subr.mxu0 0.0
        %902 = vmatpush1.msra.mxu0 0.0
        %903 = vmatprep.subr.mxu0 0.0
        %904 = vmatpush1.msra.mxu0 0.0
        %905 = vmatprep.subr.mxu0 0.0
        %906 = vmatpush1.msra.mxu0 0.0
        %907 = vmatprep.subr.mxu0 0.0
        %908 = vmatpush1.msra.mxu0 0.0
        %909 = vmatprep.subr.mxu0 0.0
        %910 = vmatpush1.msra.mxu0 0.0
        %911 = vmatprep.subr.mxu0 0.0
        %912 = vmatpush1.msra.mxu0 0.0
        %913 = vmatprep.subr.mxu0 0.0
        %914 = vmatpush1.msra.mxu0 0.0
        %915 = vmatprep.subr.mxu0 0.0
        %916 = vmatpush1.msra.mxu0 0.0
        %917 = vmatprep.subr.mxu0 0.0
        %918 = vmatpush1.msra.mxu0 0.0
        %919 = vmatprep.subr.mxu0 0.0
        %920 = vmatpush1.msra.mxu0 0.0
        %921 = vmatprep.subr.mxu0 0.0
        %922 = vmatpush1.msra.mxu0 0.0
        %923 = vmatprep.subr.mxu0 0.0
        %924 = vmatpush1.msra.mxu0 0.0
        %925 = vmatprep.subr.mxu0 0.0
        %926 = vmatpush1.msra.mxu0 0.0
        %927 = vmatprep.subr.mxu0 0.0
        %928 = vmatpush1.msra.mxu0 0.0
        %929 = vmatprep.subr.mxu0 0.0
        %930 = vmatpush1.msra.mxu0 0.0
        %931 = vmatprep.subr.mxu0 0.0
        %932 = vmatpush1.msra.mxu0 0.0
        %933 = vmatprep.subr.mxu0 0.0
        %934 = vmatpush1.msra.mxu0 0.0
        %935 = vmatprep.subr.mxu0 0.0
        %936 = vmatpush1.msra.mxu0 0.0
        %937 = vmatprep.subr.mxu0 0.0
        %938 = vmatpush1.msra.mxu0 0.0
        %939 = vmatprep.subr.mxu0 0.0
        %940 = vmatpush1.msra.mxu0 0.0
        %941 = vmatprep.subr.mxu0 0.0
        %942 = vmatpush1.msra.mxu0 0.0
        %943 = vmatprep.subr.mxu0 0.0
        %944 = vmatpush1.msra.mxu0 0.0
        %945 = vmatprep.subr.mxu0 0.0
        %946 = vmatpush1.msra.mxu0 0.0
        %947 = vmatprep.subr.mxu0 0.0
        %948 = vmatpush1.msra.mxu0 0.0
        %949 = vmatprep.subr.mxu0 0.0
        %950 = vmatpush1.msra.mxu0 0.0
        %951 = vmatprep.subr.mxu0 0.0
        %952 = vmatpush1.msra.mxu0 0.0
        %953 = vmatprep.subr.mxu0 0.0
        %954 = vmatpush1.msra.mxu0 0.0
        %955 = vmatprep.subr.mxu0 0.0
        %956 = vmatpush1.msra.mxu0 0.0
        %957 = vmatprep.mubr.f32.mxu0 0.0
        %958 = vmatmul.mubr.f32.gmra.mrb[0].mxu0 %v891
        %v959 = vpop.f32.mrb[0].mxu0
        %v960 = vadd.f32 %v889, %v959
        %v961 = vpop.f32.mrb[0].mxu0
        %962 = vdwg.mxu0
        %v963 = vmax.f32 %v960, 0.0
        %v964 = vmul.f32 %v794, %v882
        %v965 = vld [vmem:[%s9 + $0x6] sm:$0x1]
        %v966 = vmul.f32 %v964, %v965
        %v967 = vmul.f32 %v803, %v963
        %v968 = vld [vmem:[%s9 + $0x7] sm:$0x1]
        %v969 = vmul.f32 %v967, %v968
        %v970 = vld [vmem:[%s460] sm:$0xff]
        %s971 = scalar_lea.vmem %s8, 8
        %v972 = vld [vmem:[%s971] sm:$0xf]
        %v973 = vld [vmem:[%s9 + $0x4] sm:$0x1]
        %v974 = vlaneseq
        %v975 = vshrl.u32 %v974, 7
        %v976 = vsub.s32 0, %v975
        %v977 = vrot.slane %v973, %v976
        %v979 = vsel %vm466, %v970, 0
        %v982 = vsel %vm470, %v972, 0
        %984 = vmatprep.subr.mxu0 0.0
        %985 = vmatpush1.msra.mxu0 %v982
        %986 = vmatprep.subr.mxu0 0.0
        %987 = vmatpush1.msra.mxu0 0.0
        %988 = vmatprep.subr.mxu0 0.0
        %989 = vmatpush1.msra.mxu0 0.0
        %990 = vmatprep.subr.mxu0 0.0
        %991 = vmatpush1.msra.mxu0 0.0
        %992 = vmatprep.subr.mxu0 0.0
        %993 = vmatpush1.msra.mxu0 0.0
        %994 = vmatprep.subr.mxu0 0.0
        %995 = vmatpush1.msra.mxu0 0.0
        %996 = vmatprep.subr.mxu0 0.0
        %997 = vmatpush1.msra.mxu0 0.0
        %998 = vmatprep.subr.mxu0 0.0
        %999 = vmatpush1.msra.mxu0 0.0
        %1000 = vmatprep.subr.mxu0 0.0
        %1001 = vmatpush1.msra.mxu0 0.0
        %1002 = vmatprep.subr.mxu0 0.0
        %1003 = vmatpush1.msra.mxu0 0.0
        %1004 = vmatprep.subr.mxu0 0.0
        %1005 = vmatpush1.msra.mxu0 0.0
        %1006 = vmatprep.subr.mxu0 0.0
        %1007 = vmatpush1.msra.mxu0 0.0
        %1008 = vmatprep.subr.mxu0 0.0
        %1009 = vmatpush1.msra.mxu0 0.0
        %1010 = vmatprep.subr.mxu0 0.0
        %1011 = vmatpush1.msra.mxu0 0.0
        %1012 = vmatprep.subr.mxu0 0.0
        %1013 = vmatpush1.msra.mxu0 0.0
        %1014 = vmatprep.subr.mxu0 0.0
        %1015 = vmatpush1.msra.mxu0 0.0
        %1016 = vmatprep.subr.mxu0 0.0
        %1017 = vmatpush1.msra.mxu0 0.0
        %1018 = vmatprep.subr.mxu0 0.0
        %1019 = vmatpush1.msra.mxu0 0.0
        %1020 = vmatprep.subr.mxu0 0.0
        %1021 = vmatpush1.msra.mxu0 0.0
        %1022 = vmatprep.subr.mxu0 0.0
        %1023 = vmatpush1.msra.mxu0 0.0
        %1024 = vmatprep.subr.mxu0 0.0
        %1025 = vmatpush1.msra.mxu0 0.0
        %1026 = vmatprep.subr.mxu0 0.0
        %1027 = vmatpush1.msra.mxu0 0.0
        %1028 = vmatprep.subr.mxu0 0.0
        %1029 = vmatpush1.msra.mxu0 0.0
        %1030 = vmatprep.subr.mxu0 0.0
        %1031 = vmatpush1.msra.mxu0 0.0
        %1032 = vmatprep.subr.mxu0 0.0
        %1033 = vmatpush1.msra.mxu0 0.0
        %1034 = vmatprep.subr.mxu0 0.0
        %1035 = vmatpush1.msra.mxu0 0.0
        %1036 = vmatprep.subr.mxu0 0.0
        %1037 = vmatpush1.msra.mxu0 0.0
        %1038 = vmatprep.subr.mxu0 0.0
        %1039 = vmatpush1.msra.mxu0 0.0
        %1040 = vmatprep.subr.mxu0 0.0
        %1041 = vmatpush1.msra.mxu0 0.0
        %1042 = vmatprep.subr.mxu0 0.0
        %1043 = vmatpush1.msra.mxu0 0.0
        %1044 = vmatprep.subr.mxu0 0.0
        %1045 = vmatpush1.msra.mxu0 0.0
        %1046 = vmatprep.subr.mxu0 0.0
        %1047 = vmatpush1.msra.mxu0 0.0
        %1048 = vmatprep.mubr.f32.mxu0 0.0
        %1049 = vmatmul.mubr.f32.gmra.mrb[0].mxu0 %v979
        %v1050 = vpop.f32.mrb[0].mxu0
        %v1051 = vadd.f32 %v977, %v1050
        %v1052 = vpop.f32.mrb[0].mxu0
        %1053 = vdwg.mxu0
        %v1054 = vmax.f32 %v1051, 0.0
        %s1055 = scalar_lea.vmem %s8, 12
        %v1056 = vld [vmem:[%s1055] sm:$0xf]
        %v1057 = vld [vmem:[%s9 + $0x5] sm:$0x1]
        %v1058 = vlaneseq
        %v1059 = vshrl.u32 %v1058, 7
        %v1060 = vsub.s32 0, %v1059
        %v1061 = vrot.slane %v1057, %v1060
        %v1063 = vsel %vm470, %v1056, 0
        %1065 = vmatprep.subr.mxu0 0.0
        %1066 = vmatpush1.msra.mxu0 %v1063
        %1067 = vmatprep.subr.mxu0 0.0
        %1068 = vmatpush1.msra.mxu0 0.0
        %1069 = vmatprep.subr.mxu0 0.0
        %1070 = vmatpush1.msra.mxu0 0.0
        %1071 = vmatprep.subr.mxu0 0.0
        %1072 = vmatpush1.msra.mxu0 0.0
        %1073 = vmatprep.subr.mxu0 0.0
        %1074 = vmatpush1.msra.mxu0 0.0
        %1075 = vmatprep.subr.mxu0 0.0
        %1076 = vmatpush1.msra.mxu0 0.0
        %1077 = vmatprep.subr.mxu0 0.0
        %1078 = vmatpush1.msra.mxu0 0.0
        %1079 = vmatprep.subr.mxu0 0.0
        %1080 = vmatpush1.msra.mxu0 0.0
        %1081 = vmatprep.subr.mxu0 0.0
        %1082 = vmatpush1.msra.mxu0 0.0
        %1083 = vmatprep.subr.mxu0 0.0
        %1084 = vmatpush1.msra.mxu0 0.0
        %1085 = vmatprep.subr.mxu0 0.0
        %1086 = vmatpush1.msra.mxu0 0.0
        %1087 = vmatprep.subr.mxu0 0.0
        %1088 = vmatpush1.msra.mxu0 0.0
        %1089 = vmatprep.subr.mxu0 0.0
        %1090 = vmatpush1.msra.mxu0 0.0
        %1091 = vmatprep.subr.mxu0 0.0
        %1092 = vmatpush1.msra.mxu0 0.0
        %1093 = vmatprep.subr.mxu0 0.0
        %1094 = vmatpush1.msra.mxu0 0.0
        %1095 = vmatprep.subr.mxu0 0.0
        %1096 = vmatpush1.msra.mxu0 0.0
        %1097 = vmatprep.subr.mxu0 0.0
        %1098 = vmatpush1.msra.mxu0 0.0
        %1099 = vmatprep.subr.mxu0 0.0
        %1100 = vmatpush1.msra.mxu0 0.0
        %1101 = vmatprep.subr.mxu0 0.0
        %1102 = vmatpush1.msra.mxu0 0.0
        %1103 = vmatprep.subr.mxu0 0.0
        %1104 = vmatpush1.msra.mxu0 0.0
        %1105 = vmatprep.subr.mxu0 0.0
        %1106 = vmatpush1.msra.mxu0 0.0
        %1107 = vmatprep.subr.mxu0 0.0
        %1108 = vmatpush1.msra.mxu0 0.0
        %1109 = vmatprep.subr.mxu0 0.0
        %1110 = vmatpush1.msra.mxu0 0.0
        %1111 = vmatprep.subr.mxu0 0.0
        %1112 = vmatpush1.msra.mxu0 0.0
        %1113 = vmatprep.subr.mxu0 0.0
        %1114 = vmatpush1.msra.mxu0 0.0
        %1115 = vmatprep.subr.mxu0 0.0
        %1116 = vmatpush1.msra.mxu0 0.0
        %1117 = vmatprep.subr.mxu0 0.0
        %1118 = vmatpush1.msra.mxu0 0.0
        %1119 = vmatprep.subr.mxu0 0.0
        %1120 = vmatpush1.msra.mxu0 0.0
        %1121 = vmatprep.subr.mxu0 0.0
        %1122 = vmatpush1.msra.mxu0 0.0
        %1123 = vmatprep.subr.mxu0 0.0
        %1124 = vmatpush1.msra.mxu0 0.0
        %1125 = vmatprep.subr.mxu0 0.0
        %1126 = vmatpush1.msra.mxu0 0.0
        %1127 = vmatprep.subr.mxu0 0.0
        %1128 = vmatpush1.msra.mxu0 0.0
        %1129 = vmatprep.mubr.f32.mxu0 0.0
        %1130 = vmatmul.mubr.f32.gmra.mrb[0].mxu0 %v979
        %v1131 = vpop.f32.mrb[0].mxu0
        %v1132 = vadd.f32 %v1061, %v1131
        %v1133 = vpop.f32.mrb[0].mxu0
        %1134 = vdwg.mxu0
        %v1135 = vmax.f32 %v1132, 0.0
        %v1136 = vlaneseq
        %v1137 = vshrl.u32 %v1136, 7
        %v1138 = vsub.s32 0, %v1137
        %v1139 = vrot.slane %v966, %v1138
        %v1140 = vmul.f32 %v1054, %v1139
        %v1141 = vsel %vm704, %v1140, 0.0
        %1142 = vadd.xlane.f32.xlu0 %v1141
        %v1143 = vpop.xlane.xlu0 %1142
        %v1144 = vlaneseq
        %v1145 = vshrl.u32 %v1144, 7
        %v1146 = vsub.s32 0, %v1145
        %v1147 = vrot.slane %v969, %v1146
        %v1148 = vmul.f32 %v1135, %v1147
        %v1149 = vsel %vm704, %v1148, 0.0
        %1150 = vadd.xlane.f32.xlu0 %v1149
        %v1151 = vpop.xlane.xlu0 %1150
        %v1152 = vadd.f32 %v1143, %v1151
        %s1153 = sld [smem:[#allocation2]]
        %v1154 = vstv %s1153
        %v1155 = vadd.f32 %v1152, %v1154
        %v1157 = vlaneseq
        %v1158 = vand.u32 %v1157, 127
        %v1159 = vlaneseq
        %v1160 = vshrl.u32 %v1159, 7
        %v1161 = vsub.s32 %v1158, %v1160
        %v1162 = vrot.slane %v1155, %v1161
        %vm1164 = vcmask 57344
        %1165 = vst.msk [vmem:[%s438] sm:$0x1] %vm1164, %v1162
        %s1166 = sand.u32 %s295, 1
        %s1167 = scalar_lea.sflag [#allocation4], %s1166
        %s1168 = sand.u32 %s295, 1
        %s1169 = scalar_lea.vmem [#allocation3], %s1168
        // Predicated region
        $region65: #{forward.7} parent=63 // pred_check
          %p1170 = pneg %p305
        $region66: #{forward.7} parent=63 // pred_check_branch
          %1172 = sbr.rel (%p1170) target = $region68
        $region67: #{forward.7} parent=63 // pred_region
          %s1174 = ssub.s32 16, 16
          %1175 = vsyncadd %s1167, %s1174
          %s1176 = smul.addr %s26, 16
          %s1177 = scalar_lea.hbm %s11, %s1176
          %s1179 = sshll.u32 %s1169, 4
          %s1180 = int_to_ptr.vmem [resolvable:$true] %s1179
          %1182 = dma.vmem_to_hbm [thread:$0]  %s1180, 16, %s1177, %s1167
        $region68: #{forward.7} parent=63 // pred_fallthru
          _
      $region64: #{forward.7} parent=5 // pred_fallthru
        _
      %p1183 = scmp.le.s32.totalorder 2, %s21
      // Predicated region
      $region69: #{forward.7} parent=5 // pred_check
        %p1184 = pneg %p1183
      $region70: #{forward.7} parent=5 // pred_check_branch
        %1186 = sbr.rel (%p1184) target = $region72
      $region71: #{forward.7} parent=5 // pred_region
        %s1187 = ssub.s32 %s21, 2
        // Predicated region
        $region73: #{forward.7} parent=71 // pred_check
          %p1188 = pneg %p311
        $region74: #{forward.7} parent=71 // pred_check_branch
          %1190 = sbr.rel (%p1188) target = $region76
        $region75: #{forward.7} parent=71 // pred_region
          %s1191 = sand.u32 %s296, 1
          %s1192 = scalar_lea.sflag [#allocation4], %s1191
          %s1193 = sand.u32 %s296, 1
          %s1194 = scalar_lea.vmem [#allocation3], %s1193
          %1195 = dma.done %s1192, 16
        $region76: #{forward.7} parent=71 // pred_fallthru
          _
      $region72: #{forward.7} parent=5 // pred_fallthru
        _
    $region6: #{forward.7} parent=1 // loop_footer
      %s25 = sadd.s32 1, %s21
    $region7: #{forward.7} parent=1 // loop_footer_branch
      %20 = sbr.rel target = $region3
    $region8: #{forward.7} parent=1 // loop_exit
      _
    %1196 = vsyncpa [#allocation4], 1
    %s1197 = scalar_lea.sflag [#allocation4], 1
    %1198 = vsyncpa %s1197, 1

</llo_original>
